<compile_context>
chip_gen: v5e
topology: v5e:2x2
jax: 0.10.0
libtpu: 0.0.40
codegen_flags: <defaults>
</compile_context>

<pallas_src>
import jax
import jax.numpy as jnp
from jax.experimental import pallas as pl
from jax.experimental.pallas import tpu as pltpu

IN_DIM = 32 * 32 * 3   # 3072
H1 = 200
H2 = 200
OUT_DIM = 100

# MXU / lane-friendly padded dims.
H1_P = 256
H2_P = 256
OUT_P = 128

_NEG = -1e30  # bias value for padded logit lanes -> exp() underflows to 0


def _round_up(n, m):
    return ((n + m - 1) // m) * m


def _mlp_kernel(x_ref, w1_ref, b1_ref, w2_ref, b2_ref, w3_ref, b3_ref, o_ref):
    # x arrives in its native dtype (f32); cast to bf16 here instead of in a
    # separate wrapper pass (saves a full extra HBM round-trip over x).
    x = x_ref[...].astype(jnp.bfloat16)
    # fc1 + ReLU  (bf16 MXU inputs, f32 accumulation, f32 elementwise)
    h1 = jnp.dot(x, w1_ref[...], preferred_element_type=jnp.float32)
    h1 = jnp.maximum(h1 + b1_ref[...], 0.0)
    # fc2 + ReLU
    h2 = jnp.dot(h1.astype(jnp.bfloat16), w2_ref[...],
                 preferred_element_type=jnp.float32)
    h2 = jnp.maximum(h2 + b2_ref[...], 0.0)
    # fc3 logits. Padded lanes get bias -1e30 (weights there are zero), so the
    # stable log_softmax below ignores them: exp(-1e30 - m) == 0.
    logits = jnp.dot(h2.astype(jnp.bfloat16), w3_ref[...],
                     preferred_element_type=jnp.float32)
    logits = logits + b3_ref[...]
    m = jnp.max(logits, axis=-1, keepdims=True)
    z = logits - m
    lse = jnp.log(jnp.sum(jnp.exp(z), axis=-1, keepdims=True))
    o_ref[...] = z - lse


def prepare_params(params):
    """One-time conversion of PyTorch-convention params (W: (out,in), b: (out,))
    into kernel layout: padded (in_p, out_p) bf16 weights, (1, out_p) f32 biases."""
    def w_prep(w, in_p, out_p):
        w_t = jnp.asarray(w, jnp.float32).T                      # (in, out)
        w_t = jnp.pad(w_t, ((0, in_p - w_t.shape[0]), (0, out_p - w_t.shape[1])))
        return w_t.astype(jnp.bfloat16)

    def b_prep(b, out_p, pad_value=0.0):
        b = jnp.asarray(b, jnp.float32)
        b = jnp.pad(b, (0, out_p - b.shape[0]), constant_values=pad_value)
        return b.reshape(1, out_p)

    return dict(
        w1=w_prep(params["w1"], IN_DIM, H1_P), b1=b_prep(params["b1"], H1_P),
        w2=w_prep(params["w2"], H1_P, H2_P),   b2=b_prep(params["b2"], H2_P),
        w3=w_prep(params["w3"], H2_P, OUT_P),
        b3=b_prep(params["b3"], OUT_P, pad_value=_NEG),
    )


def _pick_tile(B, batch_tile):
    """Batch tile: multiple of 8 sublanes, >= 2 grid steps when the batch
    allows (so both v7x TensorCores get work), and re-derived from the tile
    count so batch padding is minimal."""
    tb = min(batch_tile, max(_round_up(pl.cdiv(B, 2), 8), 8))
    n_tiles = pl.cdiv(B, tb)
    tb = _round_up(pl.cdiv(B, n_tiles), 8)
    return tb, n_tiles


def net_forward(x, prepared, *, batch_tile=1024):
    """x: (B, 3072) float (f32 or bf16). prepared: output of prepare_params().
    Returns (B, 100) f32 log-probabilities."""
    B = x.shape[0]
    tb, n_tiles = _pick_tile(B, batch_tile)
    b_pad = tb * n_tiles
    # Only pad the batch when strictly required; no dtype cast in the wrapper.
    x_p = x if b_pad == B else jnp.pad(x, ((0, b_pad - B), (0, 0)))

    itemsize = jnp.dtype(x_p.dtype).itemsize
    n_w = IN_DIM * H1_P + H1_P * H2_P + H2_P * OUT_P
    flops = 2 * b_pad * n_w
    bytes_accessed = (
        b_pad * IN_DIM * itemsize          # x read once, native dtype
        + n_w * 2                          # bf16 weights
        + (H1_P + H2_P + OUT_P) * 4        # f32 biases
        + b_pad * OUT_P * 4                # f32 output
    )
    cost = pl.CostEstimate(flops=flops, transcendentals=b_pad * OUT_P,
                           bytes_accessed=bytes_accessed)

    # VMEM budget: double-buffered x tile (the big item now that x is f32),
    # weights (counted double-buffered as the worst case), double-buffered
    # output, elementwise scratch, plus margin.  Floor 32 MiB, cap 64 MiB so it
    # is valid on every generation (v7x physical VMEM is 64 MiB).
    vmem_est = (2 * tb * IN_DIM * itemsize + 2 * n_w * 2
                + 2 * tb * OUT_P * 4 + 6 * tb * H1_P * 4 + (4 << 20))
    vmem_limit = int(min(max(vmem_est, 32 << 20), 64 << 20))

    def run(single_buffer_weights):
        if single_buffer_weights:
            # Constant index_map -> the block never changes across grid steps;
            # double buffers would be pure VMEM waste.
            resident = lambda shape: pl.BlockSpec(shape, lambda i: (0, 0),
                                                  pipeline_mode=pl.Buffered(1))
        else:
            resident = lambda shape: pl.BlockSpec(shape, lambda i: (0, 0))
        return pl.pallas_call(
            _mlp_kernel,
            out_shape=jax.ShapeDtypeStruct((b_pad, OUT_P), jnp.float32),
            grid=(n_tiles,),
            in_specs=[
                pl.BlockSpec((tb, IN_DIM), lambda i: (i, 0)),    # x: tiled over batch
                resident((IN_DIM, H1_P)), resident((1, H1_P)),
                resident((H1_P, H2_P)),   resident((1, H2_P)),
                resident((H2_P, OUT_P)),  resident((1, OUT_P)),
            ],
            out_specs=pl.BlockSpec((tb, OUT_P), lambda i: (i, 0)),
            compiler_params=pltpu.CompilerParams(
                dimension_semantics=("parallel",),
                vmem_limit_bytes=vmem_limit,
            ),
            cost_estimate=cost,
        )(x_p, prepared["w1"], prepared["b1"], prepared["w2"], prepared["b2"],
          prepared["w3"], prepared["b3"])

    try:
        out = run(True)
    except Exception:
        # pl.Buffered(1) not supported by this jax/Mosaic version -> use the
        # default (double-buffered) resident specs.
        out = run(False)

    # TODO(synk): for large pipelines, return the (B, 128) padded slab and let
    # the consumer slice, to avoid this small extra copy kernel.
    return out[:B, :OUT_DIM]


def init_params(key):
    """nn.Linear default init: U(-1/sqrt(fan_in), 1/sqrt(fan_in)), PyTorch layout."""
    ks = jax.random.split(key, 6)

    def linear(kw, kb, out_dim, in_dim):
        bound = 1.0 / jnp.sqrt(jnp.float32(in_dim))
        w = jax.random.uniform(kw, (out_dim, in_dim), jnp.float32, -bound, bound)
        b = jax.random.uniform(kb, (out_dim,), jnp.float32, -bound, bound)
        return w, b

    w1, b1 = linear(ks[0], ks[1], H1, IN_DIM)
    w2, b2 = linear(ks[2], ks[3], H2, H1)
    w3, b3 = linear(ks[4], ks[5], OUT_DIM, H2)
    return {"w1": w1, "b1": b1, "w2": w2, "b2": b2, "w3": w3, "b3": b3}


def _ref_forward(x, params):
    """Pure-JAX f32 reference of the PyTorch forward."""
    h = jnp.maximum(x @ params["w1"].T + params["b1"], 0.0)
    h = jnp.maximum(h @ params["w2"].T + params["b2"], 0.0)
    logits = h @ params["w3"].T + params["b3"]
    return jax.nn.log_softmax(logits, axis=-1)


if __name__ == "__main__":
    key = jax.random.PRNGKey(0)
    k_x, k_p = jax.random.split(key)

    params = init_params(k_p)
    prepared = prepare_params(params)                     # one-time layout conversion

    # Small single-tile batch (matches the "small shapes" requirement).
    B = 2
    x = jax.random.normal(k_x, (B, IN_DIM), jnp.float32)  # flattened CIFAR batch
    out = jax.block_until_ready(net_forward(x, prepared))

    assert out.shape == (B, OUT_DIM), out.shape
    # log_softmax rows must exp-sum to 1 over the 100 real classes
    assert jnp.allclose(jnp.sum(jnp.exp(out), axis=-1), 1.0, atol=1e-4)
    # loose check vs f32 reference (kernel uses bf16 matmul inputs)
    ref = _ref_forward(x, params)
    assert jnp.max(jnp.abs(out - ref)) < 0.15, float(jnp.max(jnp.abs(out - ref)))

    # Also exercise the multi-tile path (grid >= 2 steps, minimal batch padding).
    B2 = 24
    x2 = jax.random.normal(k_x, (B2, IN_DIM), jnp.float32)
    out2 = jax.block_until_ready(net_forward(x2, prepared))
    assert out2.shape == (B2, OUT_DIM), out2.shape
    ref2 = _ref_forward(x2, params)
    assert jnp.max(jnp.abs(out2 - ref2)) < 0.15, float(jnp.max(jnp.abs(out2 - ref2)))

    print("KERNEL_OK")
</pallas_src>

<mosaic_0001>
module attributes {stable_mosaic.version = 11 : i64} {
  func.func @_mlp_kernel(%arg0: i32, %arg1: memref<8x3072xf32, #tpu.memory_space<vmem>>, %arg2: memref<3072x256xbf16, #tpu.memory_space<vmem>>, %arg3: memref<1x256xf32, #tpu.memory_space<vmem>>, %arg4: memref<256x256xbf16, #tpu.memory_space<vmem>>, %arg5: memref<1x256xf32, #tpu.memory_space<vmem>>, %arg6: memref<256x128xbf16, #tpu.memory_space<vmem>>, %arg7: memref<1x128xf32, #tpu.memory_space<vmem>>, %arg8: memref<8x128xf32, #tpu.memory_space<vmem>>) attributes {dimension_semantics = [#tpu.dimension_semantics<parallel>], iteration_bounds = array<i64: 1>, scalar_prefetch = 0 : i64, scratch_operands = 0 : i64, tpu.core_type = #tpu.core_type<tc>, window_params = [{transform_indices = @transform_0, window_bounds = array<i64: 8, 3072>}, {pipeline_mode = #tpu.pipeline_mode<synchronous>, transform_indices = @transform_1, window_bounds = array<i64: 3072, 256>}, {pipeline_mode = #tpu.pipeline_mode<synchronous>, transform_indices = @transform_2, window_bounds = array<i64: 1, 256>}, {pipeline_mode = #tpu.pipeline_mode<synchronous>, transform_indices = @transform_3, window_bounds = array<i64: 256, 256>}, {pipeline_mode = #tpu.pipeline_mode<synchronous>, transform_indices = @transform_4, window_bounds = array<i64: 1, 256>}, {pipeline_mode = #tpu.pipeline_mode<synchronous>, transform_indices = @transform_5, window_bounds = array<i64: 256, 128>}, {pipeline_mode = #tpu.pipeline_mode<synchronous>, transform_indices = @transform_6, window_bounds = array<i64: 1, 128>}, {transform_indices = @transform_7, window_bounds = array<i64: 8, 128>}]} {
    %c0 = arith.constant 0 : index
    %c0_0 = arith.constant 0 : index
    %0 = vector.load %arg1[%c0, %c0_0] : memref<8x3072xf32, #tpu.memory_space<vmem>>, vector<8x3072xf32>
    %1 = arith.truncf %0 : vector<8x3072xf32> to vector<8x3072xbf16>
    %c0_1 = arith.constant 0 : index
    %c0_2 = arith.constant 0 : index
    %2 = vector.load %arg2[%c0_1, %c0_2] : memref<3072x256xbf16, #tpu.memory_space<vmem>>, vector<3072x256xbf16>
    %cst = arith.constant dense<0.000000e+00> : vector<8x256xf32>
    %3 = tpu.matmul %1, %2, %cst {dimension_numbers = #tpu.dot_dimension_numbers<[1], [0], [0], [1], [0, 0, 1, 1], [], []>} : vector<8x3072xbf16>, vector<3072x256xbf16>, vector<8x256xf32> -> vector<8x256xf32>
    %c0_3 = arith.constant 0 : index
    %c0_4 = arith.constant 0 : index
    %4 = vector.load %arg3[%c0_3, %c0_4] : memref<1x256xf32, #tpu.memory_space<vmem>>, vector<1x256xf32>
    %5 = vector.broadcast %4 : vector<1x256xf32> to vector<8x256xf32>
    %6 = arith.addf %3, %5 : vector<8x256xf32>
    %cst_5 = arith.constant 0.000000e+00 : f32
    %7 = vector.broadcast %cst_5 : f32 to vector<8x256xf32>
    %8 = arith.maximumf %6, %7 : vector<8x256xf32>
    %9 = arith.truncf %8 : vector<8x256xf32> to vector<8x256xbf16>
    %c0_6 = arith.constant 0 : index
    %c0_7 = arith.constant 0 : index
    %10 = vector.load %arg4[%c0_6, %c0_7] : memref<256x256xbf16, #tpu.memory_space<vmem>>, vector<256x256xbf16>
    %cst_8 = arith.constant dense<0.000000e+00> : vector<8x256xf32>
    %11 = tpu.matmul %9, %10, %cst_8 {dimension_numbers = #tpu.dot_dimension_numbers<[1], [0], [0], [1], [0, 0, 1, 1], [], []>} : vector<8x256xbf16>, vector<256x256xbf16>, vector<8x256xf32> -> vector<8x256xf32>
    %c0_9 = arith.constant 0 : index
    %c0_10 = arith.constant 0 : index
    %12 = vector.load %arg5[%c0_9, %c0_10] : memref<1x256xf32, #tpu.memory_space<vmem>>, vector<1x256xf32>
    %13 = vector.broadcast %12 : vector<1x256xf32> to vector<8x256xf32>
    %14 = arith.addf %11, %13 : vector<8x256xf32>
    %cst_11 = arith.constant 0.000000e+00 : f32
    %15 = vector.broadcast %cst_11 : f32 to vector<8x256xf32>
    %16 = arith.maximumf %14, %15 : vector<8x256xf32>
    %17 = arith.truncf %16 : vector<8x256xf32> to vector<8x256xbf16>
    %c0_12 = arith.constant 0 : index
    %c0_13 = arith.constant 0 : index
    %18 = vector.load %arg6[%c0_12, %c0_13] : memref<256x128xbf16, #tpu.memory_space<vmem>>, vector<256x128xbf16>
    %cst_14 = arith.constant dense<0.000000e+00> : vector<8x128xf32>
    %19 = tpu.matmul %17, %18, %cst_14 {dimension_numbers = #tpu.dot_dimension_numbers<[1], [0], [0], [1], [0, 0, 1, 1], [], []>} : vector<8x256xbf16>, vector<256x128xbf16>, vector<8x128xf32> -> vector<8x128xf32>
    %c0_15 = arith.constant 0 : index
    %c0_16 = arith.constant 0 : index
    %20 = vector.load %arg7[%c0_15, %c0_16] : memref<1x128xf32, #tpu.memory_space<vmem>>, vector<1x128xf32>
    %21 = vector.broadcast %20 : vector<1x128xf32> to vector<8x128xf32>
    %22 = arith.addf %19, %21 : vector<8x128xf32>
    %cst_17 = arith.constant dense<0xFF800000> : vector<8xf32>
    %23 = vector.multi_reduction <maximumf>, %22, %cst_17 [1] : vector<8x128xf32> to vector<8xf32>
    %24 = vector.shape_cast %23 : vector<8xf32> to vector<8x1xf32>
    %25 = vector.broadcast %24 : vector<8x1xf32> to vector<8x128xf32>
    %26 = arith.subf %22, %25 : vector<8x128xf32>
    %27 = math.exp %26 : vector<8x128xf32>
    %cst_18 = arith.constant dense<0.000000e+00> : vector<8xf32>
    %28 = vector.multi_reduction <add>, %27, %cst_18 [1] : vector<8x128xf32> to vector<8xf32>
    %29 = vector.shape_cast %28 : vector<8xf32> to vector<8x1xf32>
    %30 = math.log %29 : vector<8x1xf32>
    %31 = vector.broadcast %30 : vector<8x1xf32> to vector<8x128xf32>
    %32 = arith.subf %26, %31 : vector<8x128xf32>
    %c0_19 = arith.constant 0 : index
    %c0_20 = arith.constant 0 : index
    %33 = vector.load %arg8[%c0_19, %c0_20] : memref<8x128xf32, #tpu.memory_space<vmem>>, vector<8x128xf32>
    tpu.vector_store %arg8[%c0_19, %c0_20], %32 {strides = array<i32>} : memref<8x128xf32, #tpu.memory_space<vmem>>, vector<8x128xf32>,
    return
  }
  func.func @transform_0(%arg0: i32) -> (i32, i32) {
    %c0_i32 = arith.constant 0 : i32
    %c0_i32_0 = arith.constant 0 : i32
    return %arg0, %c0_i32 : i32, i32
  }
  func.func @transform_1(%arg0: i32) -> (i32, i32) {
    %c0_i32 = arith.constant 0 : i32
    %c0_i32_0 = arith.constant 0 : i32
    %c0_i32_1 = arith.constant 0 : i32
    return %c0_i32, %c0_i32_0 : i32, i32
  }
  func.func @transform_2(%arg0: i32) -> (i32, i32) {
    %c0_i32 = arith.constant 0 : i32
    %c0_i32_0 = arith.constant 0 : i32
    %c0_i32_1 = arith.constant 0 : i32
    return %c0_i32, %c0_i32_0 : i32, i32
  }
  func.func @transform_3(%arg0: i32) -> (i32, i32) {
    %c0_i32 = arith.constant 0 : i32
    %c0_i32_0 = arith.constant 0 : i32
    %c0_i32_1 = arith.constant 0 : i32
    return %c0_i32, %c0_i32_0 : i32, i32
  }
  func.func @transform_4(%arg0: i32) -> (i32, i32) {
    %c0_i32 = arith.constant 0 : i32
    %c0_i32_0 = arith.constant 0 : i32
    %c0_i32_1 = arith.constant 0 : i32
    return %c0_i32, %c0_i32_0 : i32, i32
  }
  func.func @transform_5(%arg0: i32) -> (i32, i32) {
    %c0_i32 = arith.constant 0 : i32
    %c0_i32_0 = arith.constant 0 : i32
    %c0_i32_1 = arith.constant 0 : i32
    return %c0_i32, %c0_i32_0 : i32, i32
  }
  func.func @transform_6(%arg0: i32) -> (i32, i32) {
    %c0_i32 = arith.constant 0 : i32
    %c0_i32_0 = arith.constant 0 : i32
    %c0_i32_1 = arith.constant 0 : i32
    return %c0_i32, %c0_i32_0 : i32, i32
  }
  func.func @transform_7(%arg0: i32) -> (i32, i32) {
    %c0_i32 = arith.constant 0 : i32
    %c0_i32_0 = arith.constant 0 : i32
    return %arg0, %c0_i32 : i32, i32
  }
}

module attributes {stable_mosaic.version = 11 : i64} {
  func.func @_mlp_kernel(%arg0: i32, %arg1: memref<8x3072xf32, #tpu.memory_space<vmem>>, %arg2: memref<3072x256xbf16, #tpu.memory_space<vmem>>, %arg3: memref<1x256xf32, #tpu.memory_space<vmem>>, %arg4: memref<256x256xbf16, #tpu.memory_space<vmem>>, %arg5: memref<1x256xf32, #tpu.memory_space<vmem>>, %arg6: memref<256x128xbf16, #tpu.memory_space<vmem>>, %arg7: memref<1x128xf32, #tpu.memory_space<vmem>>, %arg8: memref<8x128xf32, #tpu.memory_space<vmem>>) attributes {dimension_semantics = [#tpu.dimension_semantics<parallel>], iteration_bounds = array<i64: 1>, scalar_prefetch = 0 : i64, scratch_operands = 0 : i64, tpu.core_type = #tpu.core_type<tc>, window_params = [{transform_indices = @transform_0, window_bounds = array<i64: 8, 3072>}, {pipeline_mode = #tpu.pipeline_mode<synchronous>, transform_indices = @transform_1, window_bounds = array<i64: 3072, 256>}, {pipeline_mode = #tpu.pipeline_mode<synchronous>, transform_indices = @transform_2, window_bounds = array<i64: 1, 256>}, {pipeline_mode = #tpu.pipeline_mode<synchronous>, transform_indices = @transform_3, window_bounds = array<i64: 256, 256>}, {pipeline_mode = #tpu.pipeline_mode<synchronous>, transform_indices = @transform_4, window_bounds = array<i64: 1, 256>}, {pipeline_mode = #tpu.pipeline_mode<synchronous>, transform_indices = @transform_5, window_bounds = array<i64: 256, 128>}, {pipeline_mode = #tpu.pipeline_mode<synchronous>, transform_indices = @transform_6, window_bounds = array<i64: 1, 128>}, {transform_indices = @transform_7, window_bounds = array<i64: 8, 128>}]} {
    %c0 = arith.constant 0 : index
    %c0_0 = arith.constant 0 : index
    %0 = vector.load %arg1[%c0, %c0_0] : memref<8x3072xf32, #tpu.memory_space<vmem>>, vector<8x3072xf32>
    %1 = arith.truncf %0 : vector<8x3072xf32> to vector<8x3072xbf16>
    %c0_1 = arith.constant 0 : index
    %c0_2 = arith.constant 0 : index
    %2 = vector.load %arg2[%c0_1, %c0_2] : memref<3072x256xbf16, #tpu.memory_space<vmem>>, vector<3072x256xbf16>
    %cst = arith.constant dense<0.000000e+00> : vector<8x256xf32>
    %3 = tpu.matmul %1, %2, %cst {dimension_numbers = #tpu.dot_dimension_numbers<[1], [0], [0], [1], [0, 0, 1, 1], [], []>} : vector<8x3072xbf16>, vector<3072x256xbf16>, vector<8x256xf32> -> vector<8x256xf32>
    %c0_3 = arith.constant 0 : index
    %c0_4 = arith.constant 0 : index
    %4 = vector.load %arg3[%c0_3, %c0_4] : memref<1x256xf32, #tpu.memory_space<vmem>>, vector<1x256xf32>
    %5 = vector.broadcast %4 : vector<1x256xf32> to vector<8x256xf32>
    %6 = arith.addf %3, %5 : vector<8x256xf32>
    %cst_5 = arith.constant 0.000000e+00 : f32
    %7 = vector.broadcast %cst_5 : f32 to vector<8x256xf32>
    %8 = arith.maximumf %6, %7 : vector<8x256xf32>
    %9 = arith.truncf %8 : vector<8x256xf32> to vector<8x256xbf16>
    %c0_6 = arith.constant 0 : index
    %c0_7 = arith.constant 0 : index
    %10 = vector.load %arg4[%c0_6, %c0_7] : memref<256x256xbf16, #tpu.memory_space<vmem>>, vector<256x256xbf16>
    %cst_8 = arith.constant dense<0.000000e+00> : vector<8x256xf32>
    %11 = tpu.matmul %9, %10, %cst_8 {dimension_numbers = #tpu.dot_dimension_numbers<[1], [0], [0], [1], [0, 0, 1, 1], [], []>} : vector<8x256xbf16>, vector<256x256xbf16>, vector<8x256xf32> -> vector<8x256xf32>
    %c0_9 = arith.constant 0 : index
    %c0_10 = arith.constant 0 : index
    %12 = vector.load %arg5[%c0_9, %c0_10] : memref<1x256xf32, #tpu.memory_space<vmem>>, vector<1x256xf32>
    %13 = vector.broadcast %12 : vector<1x256xf32> to vector<8x256xf32>
    %14 = arith.addf %11, %13 : vector<8x256xf32>
    %cst_11 = arith.constant 0.000000e+00 : f32
    %15 = vector.broadcast %cst_11 : f32 to vector<8x256xf32>
    %16 = arith.maximumf %14, %15 : vector<8x256xf32>
    %17 = arith.truncf %16 : vector<8x256xf32> to vector<8x256xbf16>
    %c0_12 = arith.constant 0 : index
    %c0_13 = arith.constant 0 : index
    %18 = vector.load %arg6[%c0_12, %c0_13] : memref<256x128xbf16, #tpu.memory_space<vmem>>, vector<256x128xbf16>
    %cst_14 = arith.constant dense<0.000000e+00> : vector<8x128xf32>
    %19 = tpu.matmul %17, %18, %cst_14 {dimension_numbers = #tpu.dot_dimension_numbers<[1], [0], [0], [1], [0, 0, 1, 1], [], []>} : vector<8x256xbf16>, vector<256x128xbf16>, vector<8x128xf32> -> vector<8x128xf32>
    %c0_15 = arith.constant 0 : index
    %c0_16 = arith.constant 0 : index
    %20 = vector.load %arg7[%c0_15, %c0_16] : memref<1x128xf32, #tpu.memory_space<vmem>>, vector<1x128xf32>
    %21 = vector.broadcast %20 : vector<1x128xf32> to vector<8x128xf32>
    %22 = arith.addf %19, %21 : vector<8x128xf32>
    %cst_17 = arith.constant dense<0xFF800000> : vector<8xf32>
    %23 = vector.multi_reduction <maximumf>, %22, %cst_17 [1] : vector<8x128xf32> to vector<8xf32>
    %24 = vector.shape_cast %23 : vector<8xf32> to vector<8x1xf32>
    %25 = vector.broadcast %24 : vector<8x1xf32> to vector<8x128xf32>
    %26 = arith.subf %22, %25 : vector<8x128xf32>
    %27 = math.exp %26 : vector<8x128xf32>
    %cst_18 = arith.constant dense<0.000000e+00> : vector<8xf32>
    %28 = vector.multi_reduction <add>, %27, %cst_18 [1] : vector<8x128xf32> to vector<8xf32>
    %29 = vector.shape_cast %28 : vector<8xf32> to vector<8x1xf32>
    %30 = math.log %29 : vector<8x1xf32>
    %31 = vector.broadcast %30 : vector<8x1xf32> to vector<8x128xf32>
    %32 = arith.subf %26, %31 : vector<8x128xf32>
    %c0_19 = arith.constant 0 : index
    %c0_20 = arith.constant 0 : index
    %33 = vector.load %arg8[%c0_19, %c0_20] : memref<8x128xf32, #tpu.memory_space<vmem>>, vector<8x128xf32>
    tpu.vector_store %arg8[%c0_19, %c0_20], %32 {strides = array<i32>} : memref<8x128xf32, #tpu.memory_space<vmem>>, vector<8x128xf32>,
    return
  }
  func.func @transform_0(%arg0: i32) -> (i32, i32) {
    %c0_i32 = arith.constant 0 : i32
    %c0_i32_0 = arith.constant 0 : i32
    return %arg0, %c0_i32 : i32, i32
  }
  func.func @transform_1(%arg0: i32) -> (i32, i32) {
    %c0_i32 = arith.constant 0 : i32
    %c0_i32_0 = arith.constant 0 : i32
    %c0_i32_1 = arith.constant 0 : i32
    return %c0_i32, %c0_i32_0 : i32, i32
  }
  func.func @transform_2(%arg0: i32) -> (i32, i32) {
    %c0_i32 = arith.constant 0 : i32
    %c0_i32_0 = arith.constant 0 : i32
    %c0_i32_1 = arith.constant 0 : i32
    return %c0_i32, %c0_i32_0 : i32, i32
  }
  func.func @transform_3(%arg0: i32) -> (i32, i32) {
    %c0_i32 = arith.constant 0 : i32
    %c0_i32_0 = arith.constant 0 : i32
    %c0_i32_1 = arith.constant 0 : i32
    return %c0_i32, %c0_i32_0 : i32, i32
  }
  func.func @transform_4(%arg0: i32) -> (i32, i32) {
    %c0_i32 = arith.constant 0 : i32
    %c0_i32_0 = arith.constant 0 : i32
    %c0_i32_1 = arith.constant 0 : i32
    return %c0_i32, %c0_i32_0 : i32, i32
  }
  func.func @transform_5(%arg0: i32) -> (i32, i32) {
    %c0_i32 = arith.constant 0 : i32
    %c0_i32_0 = arith.constant 0 : i32
    %c0_i32_1 = arith.constant 0 : i32
    return %c0_i32, %c0_i32_0 : i32, i32
  }
  func.func @transform_6(%arg0: i32) -> (i32, i32) {
    %c0_i32 = arith.constant 0 : i32
    %c0_i32_0 = arith.constant 0 : i32
    %c0_i32_1 = arith.constant 0 : i32
    return %c0_i32, %c0_i32_0 : i32, i32
  }
  func.func @transform_7(%arg0: i32) -> (i32, i32) {
    %c0_i32 = arith.constant 0 : i32
    %c0_i32_0 = arith.constant 0 : i32
    return %arg0, %c0_i32 : i32, i32
  }
}

</mosaic_0001>

<llo_original>
// kernel: tpu_custom_call.1
$region0: #{tpu_custom_call.1}
  #allocation0 [shape = 'u32[]', space=smem, size = 0x4, offset = 0x4, fixed_abs, tag = 'smem constant byte address 0x4 - core index']
  #allocation1 [shape = 'u32[72,128]{1,0:T(1,128)}', space=vmem, size = 0x9000, scoped, tag = 'internal scratch']
  %s0 = inlined_call_operand.hbm [shape: f32[8,3072], index: 0, kind: input, shape index: {}]
  %s1 = inlined_call_operand.hbm [shape: bf16[3072,256], index: 1, kind: input, shape index: {}]
  %s2 = inlined_call_operand.hbm [shape: f32[1,256], index: 2, kind: input, shape index: {}]
  %s3 = inlined_call_operand.hbm [shape: bf16[256,256], index: 3, kind: input, shape index: {}]
  %s4 = inlined_call_operand.hbm [shape: f32[1,256], index: 4, kind: input, shape index: {}]
  %s5 = inlined_call_operand.hbm [shape: bf16[256,128], index: 5, kind: input, shape index: {}]
  %s6 = inlined_call_operand.hbm [shape: f32[1,128], index: 6, kind: input, shape index: {}]
  %s7 = inlined_call_operand.hbm [shape: f32[8,128], index: 7, kind: output, shape index: {}]
  %s8 = sld [smem:[#allocation0]]
  $region66: #{tpu_custom_call.1} parent=0
    _
  %s10 = ssub.s32 1, %s8
  %s11 = scalar_select 0, %s10, %s8
  $region1: #{tpu_custom_call.1} parent=0
    #allocation2 [shape = 'u8[98304]{0}', space=vmem, size = 0x18000, scoped, tag = 'input window, operand 0, single buffered']
    #allocation3 [shape = 's32[1]{0}', space=sflag, size = 0x4, scoped, tag = 'scoped memory for tpu_custom_call.1']
    #allocation4 [shape = 's32[1]{0}', space=sflag, size = 0x4, scoped, tag = 'scoped memory for tpu_custom_call.1']
    #allocation5 [shape = 'u8[1572864]{0}', space=vmem, size = 0x180000, scoped, tag = 'input window, operand 1, single buffered']
    #allocation6 [shape = 's32[1]{0}', space=sflag, size = 0x4, scoped, tag = 'scoped memory for tpu_custom_call.1']
    #allocation7 [shape = 'u8[1024]{0}', space=vmem, size = 0x400, scoped, tag = 'input window, operand 2, single buffered']
    #allocation8 [shape = 'u8[131072]{0}', space=vmem, size = 0x20000, scoped, tag = 'input window, operand 3, single buffered']
    #allocation9 [shape = 's32[1]{0}', space=sflag, size = 0x4, scoped, tag = 'scoped memory for tpu_custom_call.1']
    #allocation10 [shape = 'u8[1024]{0}', space=vmem, size = 0x400, scoped, tag = 'input window, operand 4, single buffered']
    #allocation11 [shape = 'u8[65536]{0}', space=vmem, size = 0x10000, scoped, tag = 'input window, operand 5, single buffered']
    #allocation12 [shape = 's32[1]{0}', space=sflag, size = 0x4, scoped, tag = 'scoped memory for tpu_custom_call.1']
    #allocation13 [shape = 'u8[512]{0}', space=vmem, size = 0x400, scoped, tag = 'input window, operand 6, single buffered']
    #allocation14 [shape = 'u8[4096]{0}', space=vmem, size = 0x1000, scoped, tag = 'output window, operand 0, single buffered']
    %12 = vsyncpa [#allocation3], 0
    %13 = vsyncpa [#allocation6], 0
    %14 = vsyncpa [#allocation9], 0
    %15 = vsyncpa [#allocation12], 0
    %16 = vsyncpa [#allocation4], 0
    // Predicated region
    $region2: #{tpu_custom_call.1} parent=1 // pred_check
      _
    $region3: #{tpu_custom_call.1} parent=1 // pred_check_branch
      %18 = sbr.rel (0) target = $region5
    $region4: #{tpu_custom_call.1} parent=1 // pred_region
      %20 = vsyncadd [#allocation3], 0
      %s22 = sshll.u32 %s0, 4
      %s23 = int_to_ptr.hbm [resolvable:$true] %s22
      %s24 = sshll.u32 [#allocation2], 4
      %s25 = int_to_ptr.vmem [resolvable:$true] %s24
      %27 = dma.hbm_to_vmem [thread:$0]  %s23, 3072, %s25, [#allocation3]
    $region5: #{tpu_custom_call.1} parent=1 // pred_fallthru
      _
    // Predicated region
    $region6: #{tpu_custom_call.1} parent=1 // pred_check
      _
    $region7: #{tpu_custom_call.1} parent=1 // pred_check_branch
      %29 = sbr.rel (0) target = $region9
    $region8: #{tpu_custom_call.1} parent=1 // pred_region
      %31 = vsyncadd [#allocation6], 0
      %s32 = sshll.u32 %s1, 4
      %s33 = int_to_ptr.hbm [resolvable:$true] %s32
      %s34 = sshll.u32 [#allocation5], 4
      %s35 = int_to_ptr.vmem [resolvable:$true] %s34
      %40 = dma.hbm_to_vmem [thread:$0]  %s33, 49152, %s35, [#allocation6], 128, 128, 8
    $region9: #{tpu_custom_call.1} parent=1 // pred_fallthru
      _
    // Predicated region
    $region10: #{tpu_custom_call.1} parent=1 // pred_check
      _
    $region11: #{tpu_custom_call.1} parent=1 // pred_check_branch
      %42 = sbr.rel (0) target = $region13
    $region12: #{tpu_custom_call.1} parent=1 // pred_region
      %44 = vsyncadd [#allocation6], 0
      %s46 = sshll.u32 %s2, 4
      %s47 = int_to_ptr.hbm [resolvable:$true] %s46
      %s48 = sshll.u32 [#allocation7], 4
      %s49 = int_to_ptr.vmem [resolvable:$true] %s48
      %51 = dma.hbm_to_vmem [thread:$0]  %s47, 32, %s49, [#allocation6]
    $region13: #{tpu_custom_call.1} parent=1 // pred_fallthru
      _
    // Predicated region
    $region14: #{tpu_custom_call.1} parent=1 // pred_check
      _
    $region15: #{tpu_custom_call.1} parent=1 // pred_check_branch
      %53 = sbr.rel (0) target = $region17
    $region16: #{tpu_custom_call.1} parent=1 // pred_region
      %55 = vsyncadd [#allocation9], 0
      %s56 = sshll.u32 %s3, 4
      %s57 = int_to_ptr.hbm [resolvable:$true] %s56
      %s58 = sshll.u32 [#allocation8], 4
      %s59 = int_to_ptr.vmem [resolvable:$true] %s58
      %64 = dma.hbm_to_vmem [thread:$0]  %s57, 4096, %s59, [#allocation9], 128, 128, 8
    $region17: #{tpu_custom_call.1} parent=1 // pred_fallthru
      _
    // Predicated region
    $region18: #{tpu_custom_call.1} parent=1 // pred_check
      _
    $region19: #{tpu_custom_call.1} parent=1 // pred_check_branch
      %66 = sbr.rel (0) target = $region21
    $region20: #{tpu_custom_call.1} parent=1 // pred_region
      %68 = vsyncadd [#allocation9], 0
      %s70 = sshll.u32 %s4, 4
      %s71 = int_to_ptr.hbm [resolvable:$true] %s70
      %s72 = sshll.u32 [#allocation10], 4
      %s73 = int_to_ptr.vmem [resolvable:$true] %s72
      %75 = dma.hbm_to_vmem [thread:$0]  %s71, 32, %s73, [#allocation9]
    $region21: #{tpu_custom_call.1} parent=1 // pred_fallthru
      _
    // Predicated region
    $region22: #{tpu_custom_call.1} parent=1 // pred_check
      _
    $region23: #{tpu_custom_call.1} parent=1 // pred_check_branch
      %77 = sbr.rel (0) target = $region25
    $region24: #{tpu_custom_call.1} parent=1 // pred_region
      %79 = vsyncadd [#allocation12], 0
      %s80 = sshll.u32 %s5, 4
      %s81 = int_to_ptr.hbm [resolvable:$true] %s80
      %s82 = sshll.u32 [#allocation11], 4
      %s83 = int_to_ptr.vmem [resolvable:$true] %s82
      %88 = dma.hbm_to_vmem [thread:$0]  %s81, 2048, %s83, [#allocation12], 64, 64, 4
    $region25: #{tpu_custom_call.1} parent=1 // pred_fallthru
      _
    // Predicated region
    $region26: #{tpu_custom_call.1} parent=1 // pred_check
      _
    $region27: #{tpu_custom_call.1} parent=1 // pred_check_branch
      %90 = sbr.rel (0) target = $region29
    $region28: #{tpu_custom_call.1} parent=1 // pred_region
      %92 = vsyncadd [#allocation12], 0
      %s94 = sshll.u32 %s6, 4
      %s95 = int_to_ptr.hbm [resolvable:$true] %s94
      %s96 = sshll.u32 [#allocation13], 4
      %s97 = int_to_ptr.vmem [resolvable:$true] %s96
      %99 = dma.hbm_to_vmem [thread:$0]  %s95, 16, %s97, [#allocation12]
    $region29: #{tpu_custom_call.1} parent=1 // pred_fallthru
      _
    // Predicated region
    $region30: #{tpu_custom_call.1} parent=1 // pred_check
      _
    $region31: #{tpu_custom_call.1} parent=1 // pred_check_branch
      %101 = sbr.rel (0) target = $region33
    $region32: #{tpu_custom_call.1} parent=1 // pred_region
      %103 = dma.done [#allocation3], 3072
    $region33: #{tpu_custom_call.1} parent=1 // pred_fallthru
      _
    // Predicated region
    $region34: #{tpu_custom_call.1} parent=1 // pred_check
      _
    $region35: #{tpu_custom_call.1} parent=1 // pred_check_branch
      %105 = sbr.rel (0) target = $region37
    $region36: #{tpu_custom_call.1} parent=1 // pred_region
      %107 = dma.done [#allocation6], 49152
    $region37: #{tpu_custom_call.1} parent=1 // pred_fallthru
      _
    // Predicated region
    $region38: #{tpu_custom_call.1} parent=1 // pred_check
      _
    $region39: #{tpu_custom_call.1} parent=1 // pred_check_branch
      %109 = sbr.rel (0) target = $region41
    $region40: #{tpu_custom_call.1} parent=1 // pred_region
      %111 = dma.done [#allocation6], 32
    $region41: #{tpu_custom_call.1} parent=1 // pred_fallthru
      _
    // Predicated region
    $region42: #{tpu_custom_call.1} parent=1 // pred_check
      _
    $region43: #{tpu_custom_call.1} parent=1 // pred_check_branch
      %113 = sbr.rel (0) target = $region45
    $region44: #{tpu_custom_call.1} parent=1 // pred_region
      %115 = dma.done [#allocation9], 4096
    $region45: #{tpu_custom_call.1} parent=1 // pred_fallthru
      _
    // Predicated region
    $region46: #{tpu_custom_call.1} parent=1 // pred_check
      _
    $region47: #{tpu_custom_call.1} parent=1 // pred_check_branch
      %117 = sbr.rel (0) target = $region49
    $region48: #{tpu_custom_call.1} parent=1 // pred_region
      %119 = dma.done [#allocation9], 32
    $region49: #{tpu_custom_call.1} parent=1 // pred_fallthru
      _
    // Predicated region
    $region50: #{tpu_custom_call.1} parent=1 // pred_check
      _
    $region51: #{tpu_custom_call.1} parent=1 // pred_check_branch
      %121 = sbr.rel (0) target = $region53
    $region52: #{tpu_custom_call.1} parent=1 // pred_region
      %123 = dma.done [#allocation12], 2048
    $region53: #{tpu_custom_call.1} parent=1 // pred_fallthru
      _
    // Predicated region
    $region54: #{tpu_custom_call.1} parent=1 // pred_check
      _
    $region55: #{tpu_custom_call.1} parent=1 // pred_check_branch
      %125 = sbr.rel (0) target = $region57
    $region56: #{tpu_custom_call.1} parent=1 // pred_region
      %127 = dma.done [#allocation12], 16
    $region57: #{tpu_custom_call.1} parent=1 // pred_fallthru
      _
    %v128 = vld [vmem:[#allocation2] sm:$0xff]
    %v129 = vld [vmem:[#allocation2 + $0x8] sm:$0xff]
    %v130 = vld [vmem:[#allocation2 + $0x10] sm:$0xff]
    %v131 = vld [vmem:[#allocation2 + $0x18] sm:$0xff]
    %v132 = vld [vmem:[#allocation2 + $0x20] sm:$0xff]
    %v133 = vld [vmem:[#allocation2 + $0x28] sm:$0xff]
    %v134 = vld [vmem:[#allocation2 + $0x30] sm:$0xff]
    %v135 = vld [vmem:[#allocation2 + $0x38] sm:$0xff]
    %v136 = vld [vmem:[#allocation2 + $0x40] sm:$0xff]
    %v137 = vld [vmem:[#allocation2 + $0x48] sm:$0xff]
    %v138 = vld [vmem:[#allocation2 + $0x50] sm:$0xff]
    %v139 = vld [vmem:[#allocation2 + $0x58] sm:$0xff]
    %v140 = vld [vmem:[#allocation2 + $0x60] sm:$0xff]
    %v141 = vld [vmem:[#allocation2 + $0x68] sm:$0xff]
    %v142 = vld [vmem:[#allocation2 + $0x70] sm:$0xff]
    %v143 = vld [vmem:[#allocation2 + $0x78] sm:$0xff]
    %v144 = vld [vmem:[#allocation2 + $0x80] sm:$0xff]
    %v145 = vld [vmem:[#allocation2 + $0x88] sm:$0xff]
    %v146 = vld [vmem:[#allocation2 + $0x90] sm:$0xff]
    %v147 = vld [vmem:[#allocation2 + $0x98] sm:$0xff]
    %v148 = vld [vmem:[#allocation2 + $0xa0] sm:$0xff]
    %v149 = vld [vmem:[#allocation2 + $0xa8] sm:$0xff]
    %v150 = vld [vmem:[#allocation2 + $0xb0] sm:$0xff]
    %v151 = vld [vmem:[#allocation2 + $0xb8] sm:$0xff]
    %v152 = vpack.c.bf16 %v128, %v128
    %v153 = vpack.c.bf16 %v129, %v129
    %v154 = vpack.c.bf16 %v130, %v130
    %v155 = vpack.c.bf16 %v131, %v131
    %v156 = vpack.c.bf16 %v132, %v132
    %v157 = vpack.c.bf16 %v133, %v133
    %v158 = vpack.c.bf16 %v134, %v134
    %v159 = vpack.c.bf16 %v135, %v135
    %v160 = vpack.c.bf16 %v136, %v136
    %v161 = vpack.c.bf16 %v137, %v137
    %v162 = vpack.c.bf16 %v138, %v138
    %v163 = vpack.c.bf16 %v139, %v139
    %v164 = vpack.c.bf16 %v140, %v140
    %v165 = vpack.c.bf16 %v141, %v141
    %v166 = vpack.c.bf16 %v142, %v142
    %v167 = vpack.c.bf16 %v143, %v143
    %v168 = vpack.c.bf16 %v144, %v144
    %v169 = vpack.c.bf16 %v145, %v145
    %v170 = vpack.c.bf16 %v146, %v146
    %v171 = vpack.c.bf16 %v147, %v147
    %v172 = vpack.c.bf16 %v148, %v148
    %v173 = vpack.c.bf16 %v149, %v149
    %v174 = vpack.c.bf16 %v150, %v150
    %v175 = vpack.c.bf16 %v151, %v151
    %v176 = vld [vmem:[#allocation5] sm:$0xff]
    %v177 = vld [vmem:[#allocation5 + $0x8] sm:$0xff]
    %v178 = vld [vmem:[#allocation5 + $0x10] sm:$0xff]
    %v179 = vld [vmem:[#allocation5 + $0x18] sm:$0xff]
    %v180 = vld [vmem:[#allocation5 + $0x20] sm:$0xff]
    %v181 = vld [vmem:[#allocation5 + $0x28] sm:$0xff]
    %v182 = vld [vmem:[#allocation5 + $0x30] sm:$0xff]
    %v183 = vld [vmem:[#allocation5 + $0x38] sm:$0xff]
    %v184 = vld [vmem:[#allocation5 + $0x40] sm:$0xff]
    %v185 = vld [vmem:[#allocation5 + $0x48] sm:$0xff]
    %v186 = vld [vmem:[#allocation5 + $0x50] sm:$0xff]
    %v187 = vld [vmem:[#allocation5 + $0x58] sm:$0xff]
    %v188 = vld [vmem:[#allocation5 + $0x60] sm:$0xff]
    %v189 = vld [vmem:[#allocation5 + $0x68] sm:$0xff]
    %v190 = vld [vmem:[#allocation5 + $0x70] sm:$0xff]
    %v191 = vld [vmem:[#allocation5 + $0x78] sm:$0xff]
    %v192 = vld [vmem:[#allocation5 + $0x80] sm:$0xff]
    %v193 = vld [vmem:[#allocation5 + $0x88] sm:$0xff]
    %v194 = vld [vmem:[#allocation5 + $0x90] sm:$0xff]
    %v195 = vld [vmem:[#allocation5 + $0x98] sm:$0xff]
    %v196 = vld [vmem:[#allocation5 + $0xa0] sm:$0xff]
    %v197 = vld [vmem:[#allocation5 + $0xa8] sm:$0xff]
    %v198 = vld [vmem:[#allocation5 + $0xb0] sm:$0xff]
    %v199 = vld [vmem:[#allocation5 + $0xb8] sm:$0xff]
    %v200 = vld [vmem:[#allocation5 + $0xc0] sm:$0xff]
    %v201 = vld [vmem:[#allocation5 + $0xc8] sm:$0xff]
    %v202 = vld [vmem:[#allocation5 + $0xd0] sm:$0xff]
    %v203 = vld [vmem:[#allocation5 + $0xd8] sm:$0xff]
    %v204 = vld [vmem:[#allocation5 + $0xe0] sm:$0xff]
    %v205 = vld [vmem:[#allocation5 + $0xe8] sm:$0xff]
    %v206 = vld [vmem:[#allocation5 + $0xf0] sm:$0xff]
    %v207 = vld [vmem:[#allocation5 + $0xf8] sm:$0xff]
    %v208 = vld [vmem:[#allocation5 + $0x100] sm:$0xff]
    %v209 = vld [vmem:[#allocation5 + $0x108] sm:$0xff]
    %v210 = vld [vmem:[#allocation5 + $0x110] sm:$0xff]
    %v211 = vld [vmem:[#allocation5 + $0x118] sm:$0xff]
    %v212 = vld [vmem:[#allocation5 + $0x120] sm:$0xff]
    %v213 = vld [vmem:[#allocation5 + $0x128] sm:$0xff]
    %v214 = vld [vmem:[#allocation5 + $0x130] sm:$0xff]
    %v215 = vld [vmem:[#allocation5 + $0x138] sm:$0xff]
    %v216 = vld [vmem:[#allocation5 + $0x140] sm:$0xff]
    %v217 = vld [vmem:[#allocation5 + $0x148] sm:$0xff]
    %v218 = vld [vmem:[#allocation5 + $0x150] sm:$0xff]
    %v219 = vld [vmem:[#allocation5 + $0x158] sm:$0xff]
    %v220 = vld [vmem:[#allocation5 + $0x160] sm:$0xff]
    %v221 = vld [vmem:[#allocation5 + $0x168] sm:$0xff]
    %v222 = vld [vmem:[#allocation5 + $0x170] sm:$0xff]
    %v223 = vld [vmem:[#allocation5 + $0x178] sm:$0xff]
    %v224 = vld [vmem:[#allocation5 + $0x180] sm:$0xff]
    %v225 = vld [vmem:[#allocation5 + $0x188] sm:$0xff]
    %v226 = vld [vmem:[#allocation5 + $0x190] sm:$0xff]
    %v227 = vld [vmem:[#allocation5 + $0x198] sm:$0xff]
    %v228 = vld [vmem:[#allocation5 + $0x1a0] sm:$0xff]
    %v229 = vld [vmem:[#allocation5 + $0x1a8] sm:$0xff]
    %v230 = vld [vmem:[#allocation5 + $0x1b0] sm:$0xff]
    %v231 = vld [vmem:[#allocation5 + $0x1b8] sm:$0xff]
    %v232 = vld [vmem:[#allocation5 + $0x1c0] sm:$0xff]
    %v233 = vld [vmem:[#allocation5 + $0x1c8] sm:$0xff]
    %v234 = vld [vmem:[#allocation5 + $0x1d0] sm:$0xff]
    %v235 = vld [vmem:[#allocation5 + $0x1d8] sm:$0xff]
    %v236 = vld [vmem:[#allocation5 + $0x1e0] sm:$0xff]
    %v237 = vld [vmem:[#allocation5 + $0x1e8] sm:$0xff]
    %v238 = vld [vmem:[#allocation5 + $0x1f0] sm:$0xff]
    %v239 = vld [vmem:[#allocation5 + $0x1f8] sm:$0xff]
    %v240 = vld [vmem:[#allocation5 + $0x200] sm:$0xff]
    %v241 = vld [vmem:[#allocation5 + $0x208] sm:$0xff]
    %v242 = vld [vmem:[#allocation5 + $0x210] sm:$0xff]
    %v243 = vld [vmem:[#allocation5 + $0x218] sm:$0xff]
    %v244 = vld [vmem:[#allocation5 + $0x220] sm:$0xff]
    %v245 = vld [vmem:[#allocation5 + $0x228] sm:$0xff]
    %v246 = vld [vmem:[#allocation5 + $0x230] sm:$0xff]
    %v247 = vld [vmem:[#allocation5 + $0x238] sm:$0xff]
    %v248 = vld [vmem:[#allocation5 + $0x240] sm:$0xff]
    %v249 = vld [vmem:[#allocation5 + $0x248] sm:$0xff]
    %v250 = vld [vmem:[#allocation5 + $0x250] sm:$0xff]
    %v251 = vld [vmem:[#allocation5 + $0x258] sm:$0xff]
    %v252 = vld [vmem:[#allocation5 + $0x260] sm:$0xff]
    %v253 = vld [vmem:[#allocation5 + $0x268] sm:$0xff]
    %v254 = vld [vmem:[#allocation5 + $0x270] sm:$0xff]
    %v255 = vld [vmem:[#allocation5 + $0x278] sm:$0xff]
    %v256 = vld [vmem:[#allocation5 + $0x280] sm:$0xff]
    %v257 = vld [vmem:[#allocation5 + $0x288] sm:$0xff]
    %v258 = vld [vmem:[#allocation5 + $0x290] sm:$0xff]
    %v259 = vld [vmem:[#allocation5 + $0x298] sm:$0xff]
    %v260 = vld [vmem:[#allocation5 + $0x2a0] sm:$0xff]
    %v261 = vld [vmem:[#allocation5 + $0x2a8] sm:$0xff]
    %v262 = vld [vmem:[#allocation5 + $0x2b0] sm:$0xff]
    %v263 = vld [vmem:[#allocation5 + $0x2b8] sm:$0xff]
    %v264 = vld [vmem:[#allocation5 + $0x2c0] sm:$0xff]
    %v265 = vld [vmem:[#allocation5 + $0x2c8] sm:$0xff]
    %v266 = vld [vmem:[#allocation5 + $0x2d0] sm:$0xff]
    %v267 = vld [vmem:[#allocation5 + $0x2d8] sm:$0xff]
    %v268 = vld [vmem:[#allocation5 + $0x2e0] sm:$0xff]
    %v269 = vld [vmem:[#allocation5 + $0x2e8] sm:$0xff]
    %v270 = vld [vmem:[#allocation5 + $0x2f0] sm:$0xff]
    %v271 = vld [vmem:[#allocation5 + $0x2f8] sm:$0xff]
    %v272 = vld [vmem:[#allocation5 + $0x300] sm:$0xff]
    %v273 = vld [vmem:[#allocation5 + $0x308] sm:$0xff]
    %v274 = vld [vmem:[#allocation5 + $0x310] sm:$0xff]
    %v275 = vld [vmem:[#allocation5 + $0x318] sm:$0xff]
    %v276 = vld [vmem:[#allocation5 + $0x320] sm:$0xff]
    %v277 = vld [vmem:[#allocation5 + $0x328] sm:$0xff]
    %v278 = vld [vmem:[#allocation5 + $0x330] sm:$0xff]
    %v279 = vld [vmem:[#allocation5 + $0x338] sm:$0xff]
    %v280 = vld [vmem:[#allocation5 + $0x340] sm:$0xff]
    %v281 = vld [vmem:[#allocation5 + $0x348] sm:$0xff]
    %v282 = vld [vmem:[#allocation5 + $0x350] sm:$0xff]
    %v283 = vld [vmem:[#allocation5 + $0x358] sm:$0xff]
    %v284 = vld [vmem:[#allocation5 + $0x360] sm:$0xff]
    %v285 = vld [vmem:[#allocation5 + $0x368] sm:$0xff]
    %v286 = vld [vmem:[#allocation5 + $0x370] sm:$0xff]
    %v287 = vld [vmem:[#allocation5 + $0x378] sm:$0xff]
    %v288 = vld [vmem:[#allocation5 + $0x380] sm:$0xff]
    %v289 = vld [vmem:[#allocation5 + $0x388] sm:$0xff]
    %v290 = vld [vmem:[#allocation5 + $0x390] sm:$0xff]
    %v291 = vld [vmem:[#allocation5 + $0x398] sm:$0xff]
    %v292 = vld [vmem:[#allocation5 + $0x3a0] sm:$0xff]
    %v293 = vld [vmem:[#allocation5 + $0x3a8] sm:$0xff]
    %v294 = vld [vmem:[#allocation5 + $0x3b0] sm:$0xff]
    %v295 = vld [vmem:[#allocation5 + $0x3b8] sm:$0xff]
    %v296 = vld [vmem:[#allocation5 + $0x3c0] sm:$0xff]
    %v297 = vld [vmem:[#allocation5 + $0x3c8] sm:$0xff]
    %v298 = vld [vmem:[#allocation5 + $0x3d0] sm:$0xff]
    %v299 = vld [vmem:[#allocation5 + $0x3d8] sm:$0xff]
    %v300 = vld [vmem:[#allocation5 + $0x3e0] sm:$0xff]
    %v301 = vld [vmem:[#allocation5 + $0x3e8] sm:$0xff]
    %v302 = vld [vmem:[#allocation5 + $0x3f0] sm:$0xff]
    %v303 = vld [vmem:[#allocation5 + $0x3f8] sm:$0xff]
    %v304 = vld [vmem:[#allocation5 + $0x400] sm:$0xff]
    %v305 = vld [vmem:[#allocation5 + $0x408] sm:$0xff]
    %v306 = vld [vmem:[#allocation5 + $0x410] sm:$0xff]
    %v307 = vld [vmem:[#allocation5 + $0x418] sm:$0xff]
    %v308 = vld [vmem:[#allocation5 + $0x420] sm:$0xff]
    %v309 = vld [vmem:[#allocation5 + $0x428] sm:$0xff]
    %v310 = vld [vmem:[#allocation5 + $0x430] sm:$0xff]
    %v311 = vld [vmem:[#allocation5 + $0x438] sm:$0xff]
    %v312 = vld [vmem:[#allocation5 + $0x440] sm:$0xff]
    %v313 = vld [vmem:[#allocation5 + $0x448] sm:$0xff]
    %v314 = vld [vmem:[#allocation5 + $0x450] sm:$0xff]
    %v315 = vld [vmem:[#allocation5 + $0x458] sm:$0xff]
    %v316 = vld [vmem:[#allocation5 + $0x460] sm:$0xff]
    %v317 = vld [vmem:[#allocation5 + $0x468] sm:$0xff]
    %v318 = vld [vmem:[#allocation5 + $0x470] sm:$0xff]
    %v319 = vld [vmem:[#allocation5 + $0x478] sm:$0xff]
    %v320 = vld [vmem:[#allocation5 + $0x480] sm:$0xff]
    %v321 = vld [vmem:[#allocation5 + $0x488] sm:$0xff]
    %v322 = vld [vmem:[#allocation5 + $0x490] sm:$0xff]
    %v323 = vld [vmem:[#allocation5 + $0x498] sm:$0xff]
    %v324 = vld [vmem:[#allocation5 + $0x4a0] sm:$0xff]
    %v325 = vld [vmem:[#allocation5 + $0x4a8] sm:$0xff]
    %v326 = vld [vmem:[#allocation5 + $0x4b0] sm:$0xff]
    %v327 = vld [vmem:[#allocation5 + $0x4b8] sm:$0xff]
    %v328 = vld [vmem:[#allocation5 + $0x4c0] sm:$0xff]
    %v329 = vld [vmem:[#allocation5 + $0x4c8] sm:$0xff]
    %v330 = vld [vmem:[#allocation5 + $0x4d0] sm:$0xff]
    %v331 = vld [vmem:[#allocation5 + $0x4d8] sm:$0xff]
    %v332 = vld [vmem:[#allocation5 + $0x4e0] sm:$0xff]
    %v333 = vld [vmem:[#allocation5 + $0x4e8] sm:$0xff]
    %v334 = vld [vmem:[#allocation5 + $0x4f0] sm:$0xff]
    %v335 = vld [vmem:[#allocation5 + $0x4f8] sm:$0xff]
    %v336 = vld [vmem:[#allocation5 + $0x500] sm:$0xff]
    %v337 = vld [vmem:[#allocation5 + $0x508] sm:$0xff]
    %v338 = vld [vmem:[#allocation5 + $0x510] sm:$0xff]
    %v339 = vld [vmem:[#allocation5 + $0x518] sm:$0xff]
    %v340 = vld [vmem:[#allocation5 + $0x520] sm:$0xff]
    %v341 = vld [vmem:[#allocation5 + $0x528] sm:$0xff]
    %v342 = vld [vmem:[#allocation5 + $0x530] sm:$0xff]
    %v343 = vld [vmem:[#allocation5 + $0x538] sm:$0xff]
    %v344 = vld [vmem:[#allocation5 + $0x540] sm:$0xff]
    %v345 = vld [vmem:[#allocation5 + $0x548] sm:$0xff]
    %v346 = vld [vmem:[#allocation5 + $0x550] sm:$0xff]
    %v347 = vld [vmem:[#allocation5 + $0x558] sm:$0xff]
    %v348 = vld [vmem:[#allocation5 + $0x560] sm:$0xff]
    %v349 = vld [vmem:[#allocation5 + $0x568] sm:$0xff]
    %v350 = vld [vmem:[#allocation5 + $0x570] sm:$0xff]
    %v351 = vld [vmem:[#allocation5 + $0x578] sm:$0xff]
    %v352 = vld [vmem:[#allocation5 + $0x580] sm:$0xff]
    %v353 = vld [vmem:[#allocation5 + $0x588] sm:$0xff]
    %v354 = vld [vmem:[#allocation5 + $0x590] sm:$0xff]
    %v355 = vld [vmem:[#allocation5 + $0x598] sm:$0xff]
    %v356 = vld [vmem:[#allocation5 + $0x5a0] sm:$0xff]
    %v357 = vld [vmem:[#allocation5 + $0x5a8] sm:$0xff]
    %v358 = vld [vmem:[#allocation5 + $0x5b0] sm:$0xff]
    %v359 = vld [vmem:[#allocation5 + $0x5b8] sm:$0xff]
    %v360 = vld [vmem:[#allocation5 + $0x5c0] sm:$0xff]
    %v361 = vld [vmem:[#allocation5 + $0x5c8] sm:$0xff]
    %v362 = vld [vmem:[#allocation5 + $0x5d0] sm:$0xff]
    %v363 = vld [vmem:[#allocation5 + $0x5d8] sm:$0xff]
    %v364 = vld [vmem:[#allocation5 + $0x5e0] sm:$0xff]
    %v365 = vld [vmem:[#allocation5 + $0x5e8] sm:$0xff]
    %v366 = vld [vmem:[#allocation5 + $0x5f0] sm:$0xff]
    %v367 = vld [vmem:[#allocation5 + $0x5f8] sm:$0xff]
    %v368 = vld [vmem:[#allocation5 + $0x600] sm:$0xff]
    %v369 = vld [vmem:[#allocation5 + $0x608] sm:$0xff]
    %v370 = vld [vmem:[#allocation5 + $0x610] sm:$0xff]
    %v371 = vld [vmem:[#allocation5 + $0x618] sm:$0xff]
    %v372 = vld [vmem:[#allocation5 + $0x620] sm:$0xff]
    %v373 = vld [vmem:[#allocation5 + $0x628] sm:$0xff]
    %v374 = vld [vmem:[#allocation5 + $0x630] sm:$0xff]
    %v375 = vld [vmem:[#allocation5 + $0x638] sm:$0xff]
    %v376 = vld [vmem:[#allocation5 + $0x640] sm:$0xff]
    %v377 = vld [vmem:[#allocation5 + $0x648] sm:$0xff]
    %v378 = vld [vmem:[#allocation5 + $0x650] sm:$0xff]
    %v379 = vld [vmem:[#allocation5 + $0x658] sm:$0xff]
    %v380 = vld [vmem:[#allocation5 + $0x660] sm:$0xff]
    %v381 = vld [vmem:[#allocation5 + $0x668] sm:$0xff]
    %v382 = vld [vmem:[#allocation5 + $0x670] sm:$0xff]
    %v383 = vld [vmem:[#allocation5 + $0x678] sm:$0xff]
    %v384 = vld [vmem:[#allocation5 + $0x680] sm:$0xff]
    %v385 = vld [vmem:[#allocation5 + $0x688] sm:$0xff]
    %v386 = vld [vmem:[#allocation5 + $0x690] sm:$0xff]
    %v387 = vld [vmem:[#allocation5 + $0x698] sm:$0xff]
    %v388 = vld [vmem:[#allocation5 + $0x6a0] sm:$0xff]
    %v389 = vld [vmem:[#allocation5 + $0x6a8] sm:$0xff]
    %v390 = vld [vmem:[#allocation5 + $0x6b0] sm:$0xff]
    %v391 = vld [vmem:[#allocation5 + $0x6b8] sm:$0xff]
    %v392 = vld [vmem:[#allocation5 + $0x6c0] sm:$0xff]
    %v393 = vld [vmem:[#allocation5 + $0x6c8] sm:$0xff]
    %v394 = vld [vmem:[#allocation5 + $0x6d0] sm:$0xff]
    %v395 = vld [vmem:[#allocation5 + $0x6d8] sm:$0xff]
    %v396 = vld [vmem:[#allocation5 + $0x6e0] sm:$0xff]
    %v397 = vld [vmem:[#allocation5 + $0x6e8] sm:$0xff]
    %v398 = vld [vmem:[#allocation5 + $0x6f0] sm:$0xff]
    %v399 = vld [vmem:[#allocation5 + $0x6f8] sm:$0xff]
    %v400 = vld [vmem:[#allocation5 + $0x700] sm:$0xff]
    %v401 = vld [vmem:[#allocation5 + $0x708] sm:$0xff]
    %v402 = vld [vmem:[#allocation5 + $0x710] sm:$0xff]
    %v403 = vld [vmem:[#allocation5 + $0x718] sm:$0xff]
    %v404 = vld [vmem:[#allocation5 + $0x720] sm:$0xff]
    %v405 = vld [vmem:[#allocation5 + $0x728] sm:$0xff]
    %v406 = vld [vmem:[#allocation5 + $0x730] sm:$0xff]
    %v407 = vld [vmem:[#allocation5 + $0x738] sm:$0xff]
    %v408 = vld [vmem:[#allocation5 + $0x740] sm:$0xff]
    %v409 = vld [vmem:[#allocation5 + $0x748] sm:$0xff]
    %v410 = vld [vmem:[#allocation5 + $0x750] sm:$0xff]
    %v411 = vld [vmem:[#allocation5 + $0x758] sm:$0xff]
    %v412 = vld [vmem:[#allocation5 + $0x760] sm:$0xff]
    %v413 = vld [vmem:[#allocation5 + $0x768] sm:$0xff]
    %v414 = vld [vmem:[#allocation5 + $0x770] sm:$0xff]
    %v415 = vld [vmem:[#allocation5 + $0x778] sm:$0xff]
    %v416 = vld [vmem:[#allocation5 + $0x780] sm:$0xff]
    %v417 = vld [vmem:[#allocation5 + $0x788] sm:$0xff]
    %v418 = vld [vmem:[#allocation5 + $0x790] sm:$0xff]
    %v419 = vld [vmem:[#allocation5 + $0x798] sm:$0xff]
    %v420 = vld [vmem:[#allocation5 + $0x7a0] sm:$0xff]
    %v421 = vld [vmem:[#allocation5 + $0x7a8] sm:$0xff]
    %v422 = vld [vmem:[#allocation5 + $0x7b0] sm:$0xff]
    %v423 = vld [vmem:[#allocation5 + $0x7b8] sm:$0xff]
    %v424 = vld [vmem:[#allocation5 + $0x7c0] sm:$0xff]
    %v425 = vld [vmem:[#allocation5 + $0x7c8] sm:$0xff]
    %v426 = vld [vmem:[#allocation5 + $0x7d0] sm:$0xff]
    %v427 = vld [vmem:[#allocation5 + $0x7d8] sm:$0xff]
    %v428 = vld [vmem:[#allocation5 + $0x7e0] sm:$0xff]
    %v429 = vld [vmem:[#allocation5 + $0x7e8] sm:$0xff]
    %v430 = vld [vmem:[#allocation5 + $0x7f0] sm:$0xff]
    %v431 = vld [vmem:[#allocation5 + $0x7f8] sm:$0xff]
    %v432 = vld [vmem:[#allocation5 + $0x800] sm:$0xff]
    %v433 = vld [vmem:[#allocation5 + $0x808] sm:$0xff]
    %v434 = vld [vmem:[#allocation5 + $0x810] sm:$0xff]
    %v435 = vld [vmem:[#allocation5 + $0x818] sm:$0xff]
    %v436 = vld [vmem:[#allocation5 + $0x820] sm:$0xff]
    %v437 = vld [vmem:[#allocation5 + $0x828] sm:$0xff]
    %v438 = vld [vmem:[#allocation5 + $0x830] sm:$0xff]
    %v439 = vld [vmem:[#allocation5 + $0x838] sm:$0xff]
    %v440 = vld [vmem:[#allocation5 + $0x840] sm:$0xff]
    %v441 = vld [vmem:[#allocation5 + $0x848] sm:$0xff]
    %v442 = vld [vmem:[#allocation5 + $0x850] sm:$0xff]
    %v443 = vld [vmem:[#allocation5 + $0x858] sm:$0xff]
    %v444 = vld [vmem:[#allocation5 + $0x860] sm:$0xff]
    %v445 = vld [vmem:[#allocation5 + $0x868] sm:$0xff]
    %v446 = vld [vmem:[#allocation5 + $0x870] sm:$0xff]
    %v447 = vld [vmem:[#allocation5 + $0x878] sm:$0xff]
    %v448 = vld [vmem:[#allocation5 + $0x880] sm:$0xff]
    %v449 = vld [vmem:[#allocation5 + $0x888] sm:$0xff]
    %v450 = vld [vmem:[#allocation5 + $0x890] sm:$0xff]
    %v451 = vld [vmem:[#allocation5 + $0x898] sm:$0xff]
    %v452 = vld [vmem:[#allocation5 + $0x8a0] sm:$0xff]
    %v453 = vld [vmem:[#allocation5 + $0x8a8] sm:$0xff]
    %v454 = vld [vmem:[#allocation5 + $0x8b0] sm:$0xff]
    %v455 = vld [vmem:[#allocation5 + $0x8b8] sm:$0xff]
    %v456 = vld [vmem:[#allocation5 + $0x8c0] sm:$0xff]
    %v457 = vld [vmem:[#allocation5 + $0x8c8] sm:$0xff]
    %v458 = vld [vmem:[#allocation5 + $0x8d0] sm:$0xff]
    %v459 = vld [vmem:[#allocation5 + $0x8d8] sm:$0xff]
    %v460 = vld [vmem:[#allocation5 + $0x8e0] sm:$0xff]
    %v461 = vld [vmem:[#allocation5 + $0x8e8] sm:$0xff]
    %v462 = vld [vmem:[#allocation5 + $0x8f0] sm:$0xff]
    %v463 = vld [vmem:[#allocation5 + $0x8f8] sm:$0xff]
    %v464 = vld [vmem:[#allocation5 + $0x900] sm:$0xff]
    %v465 = vld [vmem:[#allocation5 + $0x908] sm:$0xff]
    %v466 = vld [vmem:[#allocation5 + $0x910] sm:$0xff]
    %v467 = vld [vmem:[#allocation5 + $0x918] sm:$0xff]
    %v468 = vld [vmem:[#allocation5 + $0x920] sm:$0xff]
    %v469 = vld [vmem:[#allocation5 + $0x928] sm:$0xff]
    %v470 = vld [vmem:[#allocation5 + $0x930] sm:$0xff]
    %v471 = vld [vmem:[#allocation5 + $0x938] sm:$0xff]
    %v472 = vld [vmem:[#allocation5 + $0x940] sm:$0xff]
    %v473 = vld [vmem:[#allocation5 + $0x948] sm:$0xff]
    %v474 = vld [vmem:[#allocation5 + $0x950] sm:$0xff]
    %v475 = vld [vmem:[#allocation5 + $0x958] sm:$0xff]
    %v476 = vld [vmem:[#allocation5 + $0x960] sm:$0xff]
    %v477 = vld [vmem:[#allocation5 + $0x968] sm:$0xff]
    %v478 = vld [vmem:[#allocation5 + $0x970] sm:$0xff]
    %v479 = vld [vmem:[#allocation5 + $0x978] sm:$0xff]
    %v480 = vld [vmem:[#allocation5 + $0x980] sm:$0xff]
    %v481 = vld [vmem:[#allocation5 + $0x988] sm:$0xff]
    %v482 = vld [vmem:[#allocation5 + $0x990] sm:$0xff]
    %v483 = vld [vmem:[#allocation5 + $0x998] sm:$0xff]
    %v484 = vld [vmem:[#allocation5 + $0x9a0] sm:$0xff]
    %v485 = vld [vmem:[#allocation5 + $0x9a8] sm:$0xff]
    %v486 = vld [vmem:[#allocation5 + $0x9b0] sm:$0xff]
    %v487 = vld [vmem:[#allocation5 + $0x9b8] sm:$0xff]
    %v488 = vld [vmem:[#allocation5 + $0x9c0] sm:$0xff]
    %v489 = vld [vmem:[#allocation5 + $0x9c8] sm:$0xff]
    %v490 = vld [vmem:[#allocation5 + $0x9d0] sm:$0xff]
    %v491 = vld [vmem:[#allocation5 + $0x9d8] sm:$0xff]
    %v492 = vld [vmem:[#allocation5 + $0x9e0] sm:$0xff]
    %v493 = vld [vmem:[#allocation5 + $0x9e8] sm:$0xff]
    %v494 = vld [vmem:[#allocation5 + $0x9f0] sm:$0xff]
    %v495 = vld [vmem:[#allocation5 + $0x9f8] sm:$0xff]
    %v496 = vld [vmem:[#allocation5 + $0xa00] sm:$0xff]
    %v497 = vld [vmem:[#allocation5 + $0xa08] sm:$0xff]
    %v498 = vld [vmem:[#allocation5 + $0xa10] sm:$0xff]
    %v499 = vld [vmem:[#allocation5 + $0xa18] sm:$0xff]
    %v500 = vld [vmem:[#allocation5 + $0xa20] sm:$0xff]
    %v501 = vld [vmem:[#allocation5 + $0xa28] sm:$0xff]
    %v502 = vld [vmem:[#allocation5 + $0xa30] sm:$0xff]
    %v503 = vld [vmem:[#allocation5 + $0xa38] sm:$0xff]
    %v504 = vld [vmem:[#allocation5 + $0xa40] sm:$0xff]
    %v505 = vld [vmem:[#allocation5 + $0xa48] sm:$0xff]
    %v506 = vld [vmem:[#allocation5 + $0xa50] sm:$0xff]
    %v507 = vld [vmem:[#allocation5 + $0xa58] sm:$0xff]
    %v508 = vld [vmem:[#allocation5 + $0xa60] sm:$0xff]
    %v509 = vld [vmem:[#allocation5 + $0xa68] sm:$0xff]
    %v510 = vld [vmem:[#allocation5 + $0xa70] sm:$0xff]
    %v511 = vld [vmem:[#allocation5 + $0xa78] sm:$0xff]
    %v512 = vld [vmem:[#allocation5 + $0xa80] sm:$0xff]
    %v513 = vld [vmem:[#allocation5 + $0xa88] sm:$0xff]
    %v514 = vld [vmem:[#allocation5 + $0xa90] sm:$0xff]
    %v515 = vld [vmem:[#allocation5 + $0xa98] sm:$0xff]
    %v516 = vld [vmem:[#allocation5 + $0xaa0] sm:$0xff]
    %v517 = vld [vmem:[#allocation5 + $0xaa8] sm:$0xff]
    %v518 = vld [vmem:[#allocation5 + $0xab0] sm:$0xff]
    %v519 = vld [vmem:[#allocation5 + $0xab8] sm:$0xff]
    %v520 = vld [vmem:[#allocation5 + $0xac0] sm:$0xff]
    %v521 = vld [vmem:[#allocation5 + $0xac8] sm:$0xff]
    %v522 = vld [vmem:[#allocation5 + $0xad0] sm:$0xff]
    %v523 = vld [vmem:[#allocation5 + $0xad8] sm:$0xff]
    %v524 = vld [vmem:[#allocation5 + $0xae0] sm:$0xff]
    %v525 = vld [vmem:[#allocation5 + $0xae8] sm:$0xff]
    %v526 = vld [vmem:[#allocation5 + $0xaf0] sm:$0xff]
    %v527 = vld [vmem:[#allocation5 + $0xaf8] sm:$0xff]
    %v528 = vld [vmem:[#allocation5 + $0xb00] sm:$0xff]
    %v529 = vld [vmem:[#allocation5 + $0xb08] sm:$0xff]
    %v530 = vld [vmem:[#allocation5 + $0xb10] sm:$0xff]
    %v531 = vld [vmem:[#allocation5 + $0xb18] sm:$0xff]
    %v532 = vld [vmem:[#allocation5 + $0xb20] sm:$0xff]
    %v533 = vld [vmem:[#allocation5 + $0xb28] sm:$0xff]
    %v534 = vld [vmem:[#allocation5 + $0xb30] sm:$0xff]
    %v535 = vld [vmem:[#allocation5 + $0xb38] sm:$0xff]
    %v536 = vld [vmem:[#allocation5 + $0xb40] sm:$0xff]
    %v537 = vld [vmem:[#allocation5 + $0xb48] sm:$0xff]
    %v538 = vld [vmem:[#allocation5 + $0xb50] sm:$0xff]
    %v539 = vld [vmem:[#allocation5 + $0xb58] sm:$0xff]
    %v540 = vld [vmem:[#allocation5 + $0xb60] sm:$0xff]
    %v541 = vld [vmem:[#allocation5 + $0xb68] sm:$0xff]
    %v542 = vld [vmem:[#allocation5 + $0xb70] sm:$0xff]
    %v543 = vld [vmem:[#allocation5 + $0xb78] sm:$0xff]
    %v544 = vld [vmem:[#allocation5 + $0xb80] sm:$0xff]
    %v545 = vld [vmem:[#allocation5 + $0xb88] sm:$0xff]
    %v546 = vld [vmem:[#allocation5 + $0xb90] sm:$0xff]
    %v547 = vld [vmem:[#allocation5 + $0xb98] sm:$0xff]
    %v548 = vld [vmem:[#allocation5 + $0xba0] sm:$0xff]
    %v549 = vld [vmem:[#allocation5 + $0xba8] sm:$0xff]
    %v550 = vld [vmem:[#allocation5 + $0xbb0] sm:$0xff]
    %v551 = vld [vmem:[#allocation5 + $0xbb8] sm:$0xff]
    %v552 = vld [vmem:[#allocation5 + $0xbc0] sm:$0xff]
    %v553 = vld [vmem:[#allocation5 + $0xbc8] sm:$0xff]
    %v554 = vld [vmem:[#allocation5 + $0xbd0] sm:$0xff]
    %v555 = vld [vmem:[#allocation5 + $0xbd8] sm:$0xff]
    %v556 = vld [vmem:[#allocation5 + $0xbe0] sm:$0xff]
    %v557 = vld [vmem:[#allocation5 + $0xbe8] sm:$0xff]
    %v558 = vld [vmem:[#allocation5 + $0xbf0] sm:$0xff]
    %v559 = vld [vmem:[#allocation5 + $0xbf8] sm:$0xff]
    %v560 = vld [vmem:[#allocation7] sm:$0x3]
    %v562 = vperm.slane %v560, 0
    %v563 = vperm.slane %v560, 1
    %v950 = vunpack.c.l.b16 %v176
    %v951 = vunpack.c.h.b16 %v176
    %v952 = vunpack.c.l.b16 %v177
    %v953 = vunpack.c.h.b16 %v177
    %v954 = vunpack.c.l.b16 %v178
    %v955 = vunpack.c.h.b16 %v178
    %v956 = vunpack.c.l.b16 %v179
    %v957 = vunpack.c.h.b16 %v179
    %v958 = vunpack.c.l.b16 %v180
    %v959 = vunpack.c.h.b16 %v180
    %v960 = vunpack.c.l.b16 %v181
    %v961 = vunpack.c.h.b16 %v181
    %v962 = vunpack.c.l.b16 %v182
    %v963 = vunpack.c.h.b16 %v182
    %v964 = vunpack.c.l.b16 %v183
    %v965 = vunpack.c.h.b16 %v183
    %v966 = vunpack.c.l.b16 %v184
    %v967 = vunpack.c.h.b16 %v184
    %v968 = vunpack.c.l.b16 %v185
    %v969 = vunpack.c.h.b16 %v185
    %v970 = vunpack.c.l.b16 %v186
    %v971 = vunpack.c.h.b16 %v186
    %v972 = vunpack.c.l.b16 %v187
    %v973 = vunpack.c.h.b16 %v187
    %v974 = vunpack.c.l.b16 %v188
    %v975 = vunpack.c.h.b16 %v188
    %v976 = vunpack.c.l.b16 %v189
    %v977 = vunpack.c.h.b16 %v189
    %v978 = vunpack.c.l.b16 %v190
    %v979 = vunpack.c.h.b16 %v190
    %v980 = vunpack.c.l.b16 %v191
    %v981 = vunpack.c.h.b16 %v191
    %v982 = vunpack.c.l.b16 %v192
    %v983 = vunpack.c.h.b16 %v192
    %v984 = vunpack.c.l.b16 %v193
    %v985 = vunpack.c.h.b16 %v193
    %v986 = vunpack.c.l.b16 %v194
    %v987 = vunpack.c.h.b16 %v194
    %v988 = vunpack.c.l.b16 %v195
    %v989 = vunpack.c.h.b16 %v195
    %v990 = vunpack.c.l.b16 %v196
    %v991 = vunpack.c.h.b16 %v196
    %v992 = vunpack.c.l.b16 %v197
    %v993 = vunpack.c.h.b16 %v197
    %v994 = vunpack.c.l.b16 %v198
    %v995 = vunpack.c.h.b16 %v198
    %v996 = vunpack.c.l.b16 %v199
    %v997 = vunpack.c.h.b16 %v199
    %v998 = vunpack.c.l.b16 %v200
    %v999 = vunpack.c.h.b16 %v200
    %v1000 = vunpack.c.l.b16 %v201
    %v1001 = vunpack.c.h.b16 %v201
    %v1002 = vunpack.c.l.b16 %v202
    %v1003 = vunpack.c.h.b16 %v202
    %v1004 = vunpack.c.l.b16 %v203
    %v1005 = vunpack.c.h.b16 %v203
    %v1006 = vunpack.c.l.b16 %v204
    %v1007 = vunpack.c.h.b16 %v204
    %v1008 = vunpack.c.l.b16 %v205
    %v1009 = vunpack.c.h.b16 %v205
    %v1010 = vunpack.c.l.b16 %v206
    %v1011 = vunpack.c.h.b16 %v206
    %v1012 = vunpack.c.l.b16 %v207
    %v1013 = vunpack.c.h.b16 %v207
    %v1014 = vunpack.c.l.b16 %v208
    %v1015 = vunpack.c.h.b16 %v208
    %v1016 = vunpack.c.l.b16 %v209
    %v1017 = vunpack.c.h.b16 %v209
    %v1018 = vunpack.c.l.b16 %v210
    %v1019 = vunpack.c.h.b16 %v210
    %v1020 = vunpack.c.l.b16 %v211
    %v1021 = vunpack.c.h.b16 %v211
    %v1022 = vunpack.c.l.b16 %v212
    %v1023 = vunpack.c.h.b16 %v212
    %v1024 = vunpack.c.l.b16 %v213
    %v1025 = vunpack.c.h.b16 %v213
    %v1026 = vunpack.c.l.b16 %v214
    %v1027 = vunpack.c.h.b16 %v214
    %v1028 = vunpack.c.l.b16 %v215
    %v1029 = vunpack.c.h.b16 %v215
    %v1030 = vunpack.c.l.b16 %v216
    %v1031 = vunpack.c.h.b16 %v216
    %v1032 = vunpack.c.l.b16 %v217
    %v1033 = vunpack.c.h.b16 %v217
    %v1034 = vunpack.c.l.b16 %v218
    %v1035 = vunpack.c.h.b16 %v218
    %v1036 = vunpack.c.l.b16 %v219
    %v1037 = vunpack.c.h.b16 %v219
    %v1038 = vunpack.c.l.b16 %v220
    %v1039 = vunpack.c.h.b16 %v220
    %v1040 = vunpack.c.l.b16 %v221
    %v1041 = vunpack.c.h.b16 %v221
    %v1042 = vunpack.c.l.b16 %v222
    %v1043 = vunpack.c.h.b16 %v222
    %v1044 = vunpack.c.l.b16 %v223
    %v1045 = vunpack.c.h.b16 %v223
    %v1046 = vunpack.c.l.b16 %v224
    %v1047 = vunpack.c.h.b16 %v224
    %v1048 = vunpack.c.l.b16 %v225
    %v1049 = vunpack.c.h.b16 %v225
    %v1050 = vunpack.c.l.b16 %v226
    %v1051 = vunpack.c.h.b16 %v226
    %v1052 = vunpack.c.l.b16 %v227
    %v1053 = vunpack.c.h.b16 %v227
    %v1054 = vunpack.c.l.b16 %v228
    %v1055 = vunpack.c.h.b16 %v228
    %v1056 = vunpack.c.l.b16 %v229
    %v1057 = vunpack.c.h.b16 %v229
    %v1058 = vunpack.c.l.b16 %v230
    %v1059 = vunpack.c.h.b16 %v230
    %v1060 = vunpack.c.l.b16 %v231
    %v1061 = vunpack.c.h.b16 %v231
    %v1062 = vunpack.c.l.b16 %v232
    %v1063 = vunpack.c.h.b16 %v232
    %v1064 = vunpack.c.l.b16 %v233
    %v1065 = vunpack.c.h.b16 %v233
    %v1066 = vunpack.c.l.b16 %v234
    %v1067 = vunpack.c.h.b16 %v234
    %v1068 = vunpack.c.l.b16 %v235
    %v1069 = vunpack.c.h.b16 %v235
    %v1070 = vunpack.c.l.b16 %v236
    %v1071 = vunpack.c.h.b16 %v236
    %v1072 = vunpack.c.l.b16 %v237
    %v1073 = vunpack.c.h.b16 %v237
    %v1074 = vunpack.c.l.b16 %v238
    %v1075 = vunpack.c.h.b16 %v238
    %v1076 = vunpack.c.l.b16 %v239
    %v1077 = vunpack.c.h.b16 %v239
    %v1078 = vunpack.c.l.b16 %v240
    %v1079 = vunpack.c.h.b16 %v240
    %v1080 = vunpack.c.l.b16 %v241
    %v1081 = vunpack.c.h.b16 %v241
    %v1082 = vunpack.c.l.b16 %v242
    %v1083 = vunpack.c.h.b16 %v242
    %v1084 = vunpack.c.l.b16 %v243
    %v1085 = vunpack.c.h.b16 %v243
    %v1086 = vunpack.c.l.b16 %v244
    %v1087 = vunpack.c.h.b16 %v244
    %v1088 = vunpack.c.l.b16 %v245
    %v1089 = vunpack.c.h.b16 %v245
    %v1090 = vunpack.c.l.b16 %v246
    %v1091 = vunpack.c.h.b16 %v246
    %v1092 = vunpack.c.l.b16 %v247
    %v1093 = vunpack.c.h.b16 %v247
    %v1094 = vunpack.c.l.b16 %v248
    %v1095 = vunpack.c.h.b16 %v248
    %v1096 = vunpack.c.l.b16 %v249
    %v1097 = vunpack.c.h.b16 %v249
    %v1098 = vunpack.c.l.b16 %v250
    %v1099 = vunpack.c.h.b16 %v250
    %v1100 = vunpack.c.l.b16 %v251
    %v1101 = vunpack.c.h.b16 %v251
    %v1102 = vunpack.c.l.b16 %v252
    %v1103 = vunpack.c.h.b16 %v252
    %v1104 = vunpack.c.l.b16 %v253
    %v1105 = vunpack.c.h.b16 %v253
    %v1106 = vunpack.c.l.b16 %v254
    %v1107 = vunpack.c.h.b16 %v254
    %v1108 = vunpack.c.l.b16 %v255
    %v1109 = vunpack.c.h.b16 %v255
    %v1110 = vunpack.c.l.b16 %v256
    %v1111 = vunpack.c.h.b16 %v256
    %v1112 = vunpack.c.l.b16 %v257
    %v1113 = vunpack.c.h.b16 %v257
    %v1114 = vunpack.c.l.b16 %v258
    %v1115 = vunpack.c.h.b16 %v258
    %v1116 = vunpack.c.l.b16 %v259
    %v1117 = vunpack.c.h.b16 %v259
    %v1118 = vunpack.c.l.b16 %v260
    %v1119 = vunpack.c.h.b16 %v260
    %v1120 = vunpack.c.l.b16 %v261
    %v1121 = vunpack.c.h.b16 %v261
    %v1122 = vunpack.c.l.b16 %v262
    %v1123 = vunpack.c.h.b16 %v262
    %v1124 = vunpack.c.l.b16 %v263
    %v1125 = vunpack.c.h.b16 %v263
    %v1126 = vunpack.c.l.b16 %v264
    %v1127 = vunpack.c.h.b16 %v264
    %v1128 = vunpack.c.l.b16 %v265
    %v1129 = vunpack.c.h.b16 %v265
    %v1130 = vunpack.c.l.b16 %v266
    %v1131 = vunpack.c.h.b16 %v266
    %v1132 = vunpack.c.l.b16 %v267
    %v1133 = vunpack.c.h.b16 %v267
    %v1134 = vunpack.c.l.b16 %v268
    %v1135 = vunpack.c.h.b16 %v268
    %v1136 = vunpack.c.l.b16 %v269
    %v1137 = vunpack.c.h.b16 %v269
    %v1138 = vunpack.c.l.b16 %v270
    %v1139 = vunpack.c.h.b16 %v270
    %v1140 = vunpack.c.l.b16 %v271
    %v1141 = vunpack.c.h.b16 %v271
    %v1142 = vunpack.c.l.b16 %v272
    %v1143 = vunpack.c.h.b16 %v272
    %v1144 = vunpack.c.l.b16 %v273
    %v1145 = vunpack.c.h.b16 %v273
    %v1146 = vunpack.c.l.b16 %v274
    %v1147 = vunpack.c.h.b16 %v274
    %v1148 = vunpack.c.l.b16 %v275
    %v1149 = vunpack.c.h.b16 %v275
    %v1150 = vunpack.c.l.b16 %v276
    %v1151 = vunpack.c.h.b16 %v276
    %v1152 = vunpack.c.l.b16 %v277
    %v1153 = vunpack.c.h.b16 %v277
    %v1154 = vunpack.c.l.b16 %v278
    %v1155 = vunpack.c.h.b16 %v278
    %v1156 = vunpack.c.l.b16 %v279
    %v1157 = vunpack.c.h.b16 %v279
    %v1158 = vunpack.c.l.b16 %v280
    %v1159 = vunpack.c.h.b16 %v280
    %v1160 = vunpack.c.l.b16 %v281
    %v1161 = vunpack.c.h.b16 %v281
    %v1162 = vunpack.c.l.b16 %v282
    %v1163 = vunpack.c.h.b16 %v282
    %v1164 = vunpack.c.l.b16 %v283
    %v1165 = vunpack.c.h.b16 %v283
    %v1166 = vunpack.c.l.b16 %v284
    %v1167 = vunpack.c.h.b16 %v284
    %v1168 = vunpack.c.l.b16 %v285
    %v1169 = vunpack.c.h.b16 %v285
    %v1170 = vunpack.c.l.b16 %v286
    %v1171 = vunpack.c.h.b16 %v286
    %v1172 = vunpack.c.l.b16 %v287
    %v1173 = vunpack.c.h.b16 %v287
    %v1174 = vunpack.c.l.b16 %v288
    %v1175 = vunpack.c.h.b16 %v288
    %v1176 = vunpack.c.l.b16 %v289
    %v1177 = vunpack.c.h.b16 %v289
    %v1178 = vunpack.c.l.b16 %v290
    %v1179 = vunpack.c.h.b16 %v290
    %v1180 = vunpack.c.l.b16 %v291
    %v1181 = vunpack.c.h.b16 %v291
    %v1182 = vunpack.c.l.b16 %v292
    %v1183 = vunpack.c.h.b16 %v292
    %v1184 = vunpack.c.l.b16 %v293
    %v1185 = vunpack.c.h.b16 %v293
    %v1186 = vunpack.c.l.b16 %v294
    %v1187 = vunpack.c.h.b16 %v294
    %v1188 = vunpack.c.l.b16 %v295
    %v1189 = vunpack.c.h.b16 %v295
    %v1190 = vunpack.c.l.b16 %v296
    %v1191 = vunpack.c.h.b16 %v296
    %v1192 = vunpack.c.l.b16 %v297
    %v1193 = vunpack.c.h.b16 %v297
    %v1194 = vunpack.c.l.b16 %v298
    %v1195 = vunpack.c.h.b16 %v298
    %v1196 = vunpack.c.l.b16 %v299
    %v1197 = vunpack.c.h.b16 %v299
    %v1198 = vunpack.c.l.b16 %v300
    %v1199 = vunpack.c.h.b16 %v300
    %v1200 = vunpack.c.l.b16 %v301
    %v1201 = vunpack.c.h.b16 %v301
    %v1202 = vunpack.c.l.b16 %v302
    %v1203 = vunpack.c.h.b16 %v302
    %v1204 = vunpack.c.l.b16 %v303
    %v1205 = vunpack.c.h.b16 %v303
    %v1206 = vunpack.c.l.b16 %v304
    %v1207 = vunpack.c.h.b16 %v304
    %v1208 = vunpack.c.l.b16 %v305
    %v1209 = vunpack.c.h.b16 %v305
    %v1210 = vunpack.c.l.b16 %v306
    %v1211 = vunpack.c.h.b16 %v306
    %v1212 = vunpack.c.l.b16 %v307
    %v1213 = vunpack.c.h.b16 %v307
    %v1214 = vunpack.c.l.b16 %v308
    %v1215 = vunpack.c.h.b16 %v308
    %v1216 = vunpack.c.l.b16 %v309
    %v1217 = vunpack.c.h.b16 %v309
    %v1218 = vunpack.c.l.b16 %v310
    %v1219 = vunpack.c.h.b16 %v310
    %v1220 = vunpack.c.l.b16 %v311
    %v1221 = vunpack.c.h.b16 %v311
    %v1222 = vunpack.c.l.b16 %v312
    %v1223 = vunpack.c.h.b16 %v312
    %v1224 = vunpack.c.l.b16 %v313
    %v1225 = vunpack.c.h.b16 %v313
    %v1226 = vunpack.c.l.b16 %v314
    %v1227 = vunpack.c.h.b16 %v314
    %v1228 = vunpack.c.l.b16 %v315
    %v1229 = vunpack.c.h.b16 %v315
    %v1230 = vunpack.c.l.b16 %v316
    %v1231 = vunpack.c.h.b16 %v316
    %v1232 = vunpack.c.l.b16 %v317
    %v1233 = vunpack.c.h.b16 %v317
    %v1234 = vunpack.c.l.b16 %v318
    %v1235 = vunpack.c.h.b16 %v318
    %v1236 = vunpack.c.l.b16 %v319
    %v1237 = vunpack.c.h.b16 %v319
    %v1238 = vunpack.c.l.b16 %v320
    %v1239 = vunpack.c.h.b16 %v320
    %v1240 = vunpack.c.l.b16 %v321
    %v1241 = vunpack.c.h.b16 %v321
    %v1242 = vunpack.c.l.b16 %v322
    %v1243 = vunpack.c.h.b16 %v322
    %v1244 = vunpack.c.l.b16 %v323
    %v1245 = vunpack.c.h.b16 %v323
    %v1246 = vunpack.c.l.b16 %v324
    %v1247 = vunpack.c.h.b16 %v324
    %v1248 = vunpack.c.l.b16 %v325
    %v1249 = vunpack.c.h.b16 %v325
    %v1250 = vunpack.c.l.b16 %v326
    %v1251 = vunpack.c.h.b16 %v326
    %v1252 = vunpack.c.l.b16 %v327
    %v1253 = vunpack.c.h.b16 %v327
    %v1254 = vunpack.c.l.b16 %v328
    %v1255 = vunpack.c.h.b16 %v328
    %v1256 = vunpack.c.l.b16 %v329
    %v1257 = vunpack.c.h.b16 %v329
    %v1258 = vunpack.c.l.b16 %v330
    %v1259 = vunpack.c.h.b16 %v330
    %v1260 = vunpack.c.l.b16 %v331
    %v1261 = vunpack.c.h.b16 %v331
    %v1262 = vunpack.c.l.b16 %v332
    %v1263 = vunpack.c.h.b16 %v332
    %v1264 = vunpack.c.l.b16 %v333
    %v1265 = vunpack.c.h.b16 %v333
    %v1266 = vunpack.c.l.b16 %v334
    %v1267 = vunpack.c.h.b16 %v334
    %v1268 = vunpack.c.l.b16 %v335
    %v1269 = vunpack.c.h.b16 %v335
    %v1270 = vunpack.c.l.b16 %v336
    %v1271 = vunpack.c.h.b16 %v336
    %v1272 = vunpack.c.l.b16 %v337
    %v1273 = vunpack.c.h.b16 %v337
    %v1274 = vunpack.c.l.b16 %v338
    %v1275 = vunpack.c.h.b16 %v338
    %v1276 = vunpack.c.l.b16 %v339
    %v1277 = vunpack.c.h.b16 %v339
    %v1278 = vunpack.c.l.b16 %v340
    %v1279 = vunpack.c.h.b16 %v340
    %v1280 = vunpack.c.l.b16 %v341
    %v1281 = vunpack.c.h.b16 %v341
    %v1282 = vunpack.c.l.b16 %v342
    %v1283 = vunpack.c.h.b16 %v342
    %v1284 = vunpack.c.l.b16 %v343
    %v1285 = vunpack.c.h.b16 %v343
    %v1286 = vunpack.c.l.b16 %v344
    %v1287 = vunpack.c.h.b16 %v344
    %v1288 = vunpack.c.l.b16 %v345
    %v1289 = vunpack.c.h.b16 %v345
    %v1290 = vunpack.c.l.b16 %v346
    %v1291 = vunpack.c.h.b16 %v346
    %v1292 = vunpack.c.l.b16 %v347
    %v1293 = vunpack.c.h.b16 %v347
    %v1294 = vunpack.c.l.b16 %v348
    %v1295 = vunpack.c.h.b16 %v348
    %v1296 = vunpack.c.l.b16 %v349
    %v1297 = vunpack.c.h.b16 %v349
    %v1298 = vunpack.c.l.b16 %v350
    %v1299 = vunpack.c.h.b16 %v350
    %v1300 = vunpack.c.l.b16 %v351
    %v1301 = vunpack.c.h.b16 %v351
    %v1302 = vunpack.c.l.b16 %v352
    %v1303 = vunpack.c.h.b16 %v352
    %v1304 = vunpack.c.l.b16 %v353
    %v1305 = vunpack.c.h.b16 %v353
    %v1306 = vunpack.c.l.b16 %v354
    %v1307 = vunpack.c.h.b16 %v354
    %v1308 = vunpack.c.l.b16 %v355
    %v1309 = vunpack.c.h.b16 %v355
    %v1310 = vunpack.c.l.b16 %v356
    %v1311 = vunpack.c.h.b16 %v356
    %v1312 = vunpack.c.l.b16 %v357
    %v1313 = vunpack.c.h.b16 %v357
    %v1314 = vunpack.c.l.b16 %v358
    %v1315 = vunpack.c.h.b16 %v358
    %v1316 = vunpack.c.l.b16 %v359
    %v1317 = vunpack.c.h.b16 %v359
    %v1318 = vunpack.c.l.b16 %v360
    %v1319 = vunpack.c.h.b16 %v360
    %v1320 = vunpack.c.l.b16 %v361
    %v1321 = vunpack.c.h.b16 %v361
    %v1322 = vunpack.c.l.b16 %v362
    %v1323 = vunpack.c.h.b16 %v362
    %v1324 = vunpack.c.l.b16 %v363
    %v1325 = vunpack.c.h.b16 %v363
    %v1326 = vunpack.c.l.b16 %v364
    %v1327 = vunpack.c.h.b16 %v364
    %v1328 = vunpack.c.l.b16 %v365
    %v1329 = vunpack.c.h.b16 %v365
    %v1330 = vunpack.c.l.b16 %v366
    %v1331 = vunpack.c.h.b16 %v366
    %v1332 = vunpack.c.l.b16 %v367
    %v1333 = vunpack.c.h.b16 %v367
    %v1334 = vunpack.c.l.b16 %v368
    %v1335 = vunpack.c.h.b16 %v368
    %v1336 = vunpack.c.l.b16 %v369
    %v1337 = vunpack.c.h.b16 %v369
    %v1338 = vunpack.c.l.b16 %v370
    %v1339 = vunpack.c.h.b16 %v370
    %v1340 = vunpack.c.l.b16 %v371
    %v1341 = vunpack.c.h.b16 %v371
    %v1342 = vunpack.c.l.b16 %v372
    %v1343 = vunpack.c.h.b16 %v372
    %v1344 = vunpack.c.l.b16 %v373
    %v1345 = vunpack.c.h.b16 %v373
    %v1346 = vunpack.c.l.b16 %v374
    %v1347 = vunpack.c.h.b16 %v374
    %v1348 = vunpack.c.l.b16 %v375
    %v1349 = vunpack.c.h.b16 %v375
    %v1350 = vunpack.c.l.b16 %v376
    %v1351 = vunpack.c.h.b16 %v376
    %v1352 = vunpack.c.l.b16 %v377
    %v1353 = vunpack.c.h.b16 %v377
    %v1354 = vunpack.c.l.b16 %v378
    %v1355 = vunpack.c.h.b16 %v378
    %v1356 = vunpack.c.l.b16 %v379
    %v1357 = vunpack.c.h.b16 %v379
    %v1358 = vunpack.c.l.b16 %v380
    %v1359 = vunpack.c.h.b16 %v380
    %v1360 = vunpack.c.l.b16 %v381
    %v1361 = vunpack.c.h.b16 %v381
    %v1362 = vunpack.c.l.b16 %v382
    %v1363 = vunpack.c.h.b16 %v382
    %v1364 = vunpack.c.l.b16 %v383
    %v1365 = vunpack.c.h.b16 %v383
    %v1366 = vunpack.c.l.b16 %v384
    %v1367 = vunpack.c.h.b16 %v384
    %v1368 = vunpack.c.l.b16 %v385
    %v1369 = vunpack.c.h.b16 %v385
    %v1370 = vunpack.c.l.b16 %v386
    %v1371 = vunpack.c.h.b16 %v386
    %v1372 = vunpack.c.l.b16 %v387
    %v1373 = vunpack.c.h.b16 %v387
    %v1374 = vunpack.c.l.b16 %v388
    %v1375 = vunpack.c.h.b16 %v388
    %v1376 = vunpack.c.l.b16 %v389
    %v1377 = vunpack.c.h.b16 %v389
    %v1378 = vunpack.c.l.b16 %v390
    %v1379 = vunpack.c.h.b16 %v390
    %v1380 = vunpack.c.l.b16 %v391
    %v1381 = vunpack.c.h.b16 %v391
    %v1382 = vunpack.c.l.b16 %v392
    %v1383 = vunpack.c.h.b16 %v392
    %v1384 = vunpack.c.l.b16 %v393
    %v1385 = vunpack.c.h.b16 %v393
    %v1386 = vunpack.c.l.b16 %v394
    %v1387 = vunpack.c.h.b16 %v394
    %v1388 = vunpack.c.l.b16 %v395
    %v1389 = vunpack.c.h.b16 %v395
    %v1390 = vunpack.c.l.b16 %v396
    %v1391 = vunpack.c.h.b16 %v396
    %v1392 = vunpack.c.l.b16 %v397
    %v1393 = vunpack.c.h.b16 %v397
    %v1394 = vunpack.c.l.b16 %v398
    %v1395 = vunpack.c.h.b16 %v398
    %v1396 = vunpack.c.l.b16 %v399
    %v1397 = vunpack.c.h.b16 %v399
    %v1398 = vunpack.c.l.b16 %v400
    %v1399 = vunpack.c.h.b16 %v400
    %v1400 = vunpack.c.l.b16 %v401
    %v1401 = vunpack.c.h.b16 %v401
    %v1402 = vunpack.c.l.b16 %v402
    %v1403 = vunpack.c.h.b16 %v402
    %v1404 = vunpack.c.l.b16 %v403
    %v1405 = vunpack.c.h.b16 %v403
    %v1406 = vunpack.c.l.b16 %v404
    %v1407 = vunpack.c.h.b16 %v404
    %v1408 = vunpack.c.l.b16 %v405
    %v1409 = vunpack.c.h.b16 %v405
    %v1410 = vunpack.c.l.b16 %v406
    %v1411 = vunpack.c.h.b16 %v406
    %v1412 = vunpack.c.l.b16 %v407
    %v1413 = vunpack.c.h.b16 %v407
    %v1414 = vunpack.c.l.b16 %v408
    %v1415 = vunpack.c.h.b16 %v408
    %v1416 = vunpack.c.l.b16 %v409
    %v1417 = vunpack.c.h.b16 %v409
    %v1418 = vunpack.c.l.b16 %v410
    %v1419 = vunpack.c.h.b16 %v410
    %v1420 = vunpack.c.l.b16 %v411
    %v1421 = vunpack.c.h.b16 %v411
    %v1422 = vunpack.c.l.b16 %v412
    %v1423 = vunpack.c.h.b16 %v412
    %v1424 = vunpack.c.l.b16 %v413
    %v1425 = vunpack.c.h.b16 %v413
    %v1426 = vunpack.c.l.b16 %v414
    %v1427 = vunpack.c.h.b16 %v414
    %v1428 = vunpack.c.l.b16 %v415
    %v1429 = vunpack.c.h.b16 %v415
    %v1430 = vunpack.c.l.b16 %v416
    %v1431 = vunpack.c.h.b16 %v416
    %v1432 = vunpack.c.l.b16 %v417
    %v1433 = vunpack.c.h.b16 %v417
    %v1434 = vunpack.c.l.b16 %v418
    %v1435 = vunpack.c.h.b16 %v418
    %v1436 = vunpack.c.l.b16 %v419
    %v1437 = vunpack.c.h.b16 %v419
    %v1438 = vunpack.c.l.b16 %v420
    %v1439 = vunpack.c.h.b16 %v420
    %v1440 = vunpack.c.l.b16 %v421
    %v1441 = vunpack.c.h.b16 %v421
    %v1442 = vunpack.c.l.b16 %v422
    %v1443 = vunpack.c.h.b16 %v422
    %v1444 = vunpack.c.l.b16 %v423
    %v1445 = vunpack.c.h.b16 %v423
    %v1446 = vunpack.c.l.b16 %v424
    %v1447 = vunpack.c.h.b16 %v424
    %v1448 = vunpack.c.l.b16 %v425
    %v1449 = vunpack.c.h.b16 %v425
    %v1450 = vunpack.c.l.b16 %v426
    %v1451 = vunpack.c.h.b16 %v426
    %v1452 = vunpack.c.l.b16 %v427
    %v1453 = vunpack.c.h.b16 %v427
    %v1454 = vunpack.c.l.b16 %v428
    %v1455 = vunpack.c.h.b16 %v428
    %v1456 = vunpack.c.l.b16 %v429
    %v1457 = vunpack.c.h.b16 %v429
    %v1458 = vunpack.c.l.b16 %v430
    %v1459 = vunpack.c.h.b16 %v430
    %v1460 = vunpack.c.l.b16 %v431
    %v1461 = vunpack.c.h.b16 %v431
    %v1462 = vunpack.c.l.b16 %v432
    %v1463 = vunpack.c.h.b16 %v432
    %v1464 = vunpack.c.l.b16 %v433
    %v1465 = vunpack.c.h.b16 %v433
    %v1466 = vunpack.c.l.b16 %v434
    %v1467 = vunpack.c.h.b16 %v434
    %v1468 = vunpack.c.l.b16 %v435
    %v1469 = vunpack.c.h.b16 %v435
    %v1470 = vunpack.c.l.b16 %v436
    %v1471 = vunpack.c.h.b16 %v436
    %v1472 = vunpack.c.l.b16 %v437
    %v1473 = vunpack.c.h.b16 %v437
    %v1474 = vunpack.c.l.b16 %v438
    %v1475 = vunpack.c.h.b16 %v438
    %v1476 = vunpack.c.l.b16 %v439
    %v1477 = vunpack.c.h.b16 %v439
    %v1478 = vunpack.c.l.b16 %v440
    %v1479 = vunpack.c.h.b16 %v440
    %v1480 = vunpack.c.l.b16 %v441
    %v1481 = vunpack.c.h.b16 %v441
    %v1482 = vunpack.c.l.b16 %v442
    %v1483 = vunpack.c.h.b16 %v442
    %v1484 = vunpack.c.l.b16 %v443
    %v1485 = vunpack.c.h.b16 %v443
    %v1486 = vunpack.c.l.b16 %v444
    %v1487 = vunpack.c.h.b16 %v444
    %v1488 = vunpack.c.l.b16 %v445
    %v1489 = vunpack.c.h.b16 %v445
    %v1490 = vunpack.c.l.b16 %v446
    %v1491 = vunpack.c.h.b16 %v446
    %v1492 = vunpack.c.l.b16 %v447
    %v1493 = vunpack.c.h.b16 %v447
    %v1494 = vunpack.c.l.b16 %v448
    %v1495 = vunpack.c.h.b16 %v448
    %v1496 = vunpack.c.l.b16 %v449
    %v1497 = vunpack.c.h.b16 %v449
    %v1498 = vunpack.c.l.b16 %v450
    %v1499 = vunpack.c.h.b16 %v450
    %v1500 = vunpack.c.l.b16 %v451
    %v1501 = vunpack.c.h.b16 %v451
    %v1502 = vunpack.c.l.b16 %v452
    %v1503 = vunpack.c.h.b16 %v452
    %v1504 = vunpack.c.l.b16 %v453
    %v1505 = vunpack.c.h.b16 %v453
    %v1506 = vunpack.c.l.b16 %v454
    %v1507 = vunpack.c.h.b16 %v454
    %v1508 = vunpack.c.l.b16 %v455
    %v1509 = vunpack.c.h.b16 %v455
    %v1510 = vunpack.c.l.b16 %v456
    %v1511 = vunpack.c.h.b16 %v456
    %v1512 = vunpack.c.l.b16 %v457
    %v1513 = vunpack.c.h.b16 %v457
    %v1514 = vunpack.c.l.b16 %v458
    %v1515 = vunpack.c.h.b16 %v458
    %v1516 = vunpack.c.l.b16 %v459
    %v1517 = vunpack.c.h.b16 %v459
    %v1518 = vunpack.c.l.b16 %v460
    %v1519 = vunpack.c.h.b16 %v460
    %v1520 = vunpack.c.l.b16 %v461
    %v1521 = vunpack.c.h.b16 %v461
    %v1522 = vunpack.c.l.b16 %v462
    %v1523 = vunpack.c.h.b16 %v462
    %v1524 = vunpack.c.l.b16 %v463
    %v1525 = vunpack.c.h.b16 %v463
    %v1526 = vunpack.c.l.b16 %v464
    %v1527 = vunpack.c.h.b16 %v464
    %v1528 = vunpack.c.l.b16 %v465
    %v1529 = vunpack.c.h.b16 %v465
    %v1530 = vunpack.c.l.b16 %v466
    %v1531 = vunpack.c.h.b16 %v466
    %v1532 = vunpack.c.l.b16 %v467
    %v1533 = vunpack.c.h.b16 %v467
    %v1534 = vunpack.c.l.b16 %v468
    %v1535 = vunpack.c.h.b16 %v468
    %v1536 = vunpack.c.l.b16 %v469
    %v1537 = vunpack.c.h.b16 %v469
    %v1538 = vunpack.c.l.b16 %v470
    %v1539 = vunpack.c.h.b16 %v470
    %v1540 = vunpack.c.l.b16 %v471
    %v1541 = vunpack.c.h.b16 %v471
    %v1542 = vunpack.c.l.b16 %v472
    %v1543 = vunpack.c.h.b16 %v472
    %v1544 = vunpack.c.l.b16 %v473
    %v1545 = vunpack.c.h.b16 %v473
    %v1546 = vunpack.c.l.b16 %v474
    %v1547 = vunpack.c.h.b16 %v474
    %v1548 = vunpack.c.l.b16 %v475
    %v1549 = vunpack.c.h.b16 %v475
    %v1550 = vunpack.c.l.b16 %v476
    %v1551 = vunpack.c.h.b16 %v476
    %v1552 = vunpack.c.l.b16 %v477
    %v1553 = vunpack.c.h.b16 %v477
    %v1554 = vunpack.c.l.b16 %v478
    %v1555 = vunpack.c.h.b16 %v478
    %v1556 = vunpack.c.l.b16 %v479
    %v1557 = vunpack.c.h.b16 %v479
    %v1558 = vunpack.c.l.b16 %v480
    %v1559 = vunpack.c.h.b16 %v480
    %v1560 = vunpack.c.l.b16 %v481
    %v1561 = vunpack.c.h.b16 %v481
    %v1562 = vunpack.c.l.b16 %v482
    %v1563 = vunpack.c.h.b16 %v482
    %v1564 = vunpack.c.l.b16 %v483
    %v1565 = vunpack.c.h.b16 %v483
    %v1566 = vunpack.c.l.b16 %v484
    %v1567 = vunpack.c.h.b16 %v484
    %v1568 = vunpack.c.l.b16 %v485
    %v1569 = vunpack.c.h.b16 %v485
    %v1570 = vunpack.c.l.b16 %v486
    %v1571 = vunpack.c.h.b16 %v486
    %v1572 = vunpack.c.l.b16 %v487
    %v1573 = vunpack.c.h.b16 %v487
    %v1574 = vunpack.c.l.b16 %v488
    %v1575 = vunpack.c.h.b16 %v488
    %v1576 = vunpack.c.l.b16 %v489
    %v1577 = vunpack.c.h.b16 %v489
    %v1578 = vunpack.c.l.b16 %v490
    %v1579 = vunpack.c.h.b16 %v490
    %v1580 = vunpack.c.l.b16 %v491
    %v1581 = vunpack.c.h.b16 %v491
    %v1582 = vunpack.c.l.b16 %v492
    %v1583 = vunpack.c.h.b16 %v492
    %v1584 = vunpack.c.l.b16 %v493
    %v1585 = vunpack.c.h.b16 %v493
    %v1586 = vunpack.c.l.b16 %v494
    %v1587 = vunpack.c.h.b16 %v494
    %v1588 = vunpack.c.l.b16 %v495
    %v1589 = vunpack.c.h.b16 %v495
    %v1590 = vunpack.c.l.b16 %v496
    %v1591 = vunpack.c.h.b16 %v496
    %v1592 = vunpack.c.l.b16 %v497
    %v1593 = vunpack.c.h.b16 %v497
    %v1594 = vunpack.c.l.b16 %v498
    %v1595 = vunpack.c.h.b16 %v498
    %v1596 = vunpack.c.l.b16 %v499
    %v1597 = vunpack.c.h.b16 %v499
    %v1598 = vunpack.c.l.b16 %v500
    %v1599 = vunpack.c.h.b16 %v500
    %v1600 = vunpack.c.l.b16 %v501
    %v1601 = vunpack.c.h.b16 %v501
    %v1602 = vunpack.c.l.b16 %v502
    %v1603 = vunpack.c.h.b16 %v502
    %v1604 = vunpack.c.l.b16 %v503
    %v1605 = vunpack.c.h.b16 %v503
    %v1606 = vunpack.c.l.b16 %v504
    %v1607 = vunpack.c.h.b16 %v504
    %v1608 = vunpack.c.l.b16 %v505
    %v1609 = vunpack.c.h.b16 %v505
    %v1610 = vunpack.c.l.b16 %v506
    %v1611 = vunpack.c.h.b16 %v506
    %v1612 = vunpack.c.l.b16 %v507
    %v1613 = vunpack.c.h.b16 %v507
    %v1614 = vunpack.c.l.b16 %v508
    %v1615 = vunpack.c.h.b16 %v508
    %v1616 = vunpack.c.l.b16 %v509
    %v1617 = vunpack.c.h.b16 %v509
    %v1618 = vunpack.c.l.b16 %v510
    %v1619 = vunpack.c.h.b16 %v510
    %v1620 = vunpack.c.l.b16 %v511
    %v1621 = vunpack.c.h.b16 %v511
    %v1622 = vunpack.c.l.b16 %v512
    %v1623 = vunpack.c.h.b16 %v512
    %v1624 = vunpack.c.l.b16 %v513
    %v1625 = vunpack.c.h.b16 %v513
    %v1626 = vunpack.c.l.b16 %v514
    %v1627 = vunpack.c.h.b16 %v514
    %v1628 = vunpack.c.l.b16 %v515
    %v1629 = vunpack.c.h.b16 %v515
    %v1630 = vunpack.c.l.b16 %v516
    %v1631 = vunpack.c.h.b16 %v516
    %v1632 = vunpack.c.l.b16 %v517
    %v1633 = vunpack.c.h.b16 %v517
    %v1634 = vunpack.c.l.b16 %v518
    %v1635 = vunpack.c.h.b16 %v518
    %v1636 = vunpack.c.l.b16 %v519
    %v1637 = vunpack.c.h.b16 %v519
    %v1638 = vunpack.c.l.b16 %v520
    %v1639 = vunpack.c.h.b16 %v520
    %v1640 = vunpack.c.l.b16 %v521
    %v1641 = vunpack.c.h.b16 %v521
    %v1642 = vunpack.c.l.b16 %v522
    %v1643 = vunpack.c.h.b16 %v522
    %v1644 = vunpack.c.l.b16 %v523
    %v1645 = vunpack.c.h.b16 %v523
    %v1646 = vunpack.c.l.b16 %v524
    %v1647 = vunpack.c.h.b16 %v524
    %v1648 = vunpack.c.l.b16 %v525
    %v1649 = vunpack.c.h.b16 %v525
    %v1650 = vunpack.c.l.b16 %v526
    %v1651 = vunpack.c.h.b16 %v526
    %v1652 = vunpack.c.l.b16 %v527
    %v1653 = vunpack.c.h.b16 %v527
    %v1654 = vunpack.c.l.b16 %v528
    %v1655 = vunpack.c.h.b16 %v528
    %v1656 = vunpack.c.l.b16 %v529
    %v1657 = vunpack.c.h.b16 %v529
    %v1658 = vunpack.c.l.b16 %v530
    %v1659 = vunpack.c.h.b16 %v530
    %v1660 = vunpack.c.l.b16 %v531
    %v1661 = vunpack.c.h.b16 %v531
    %v1662 = vunpack.c.l.b16 %v532
    %v1663 = vunpack.c.h.b16 %v532
    %v1664 = vunpack.c.l.b16 %v533
    %v1665 = vunpack.c.h.b16 %v533
    %v1666 = vunpack.c.l.b16 %v534
    %v1667 = vunpack.c.h.b16 %v534
    %v1668 = vunpack.c.l.b16 %v535
    %v1669 = vunpack.c.h.b16 %v535
    %v1670 = vunpack.c.l.b16 %v536
    %v1671 = vunpack.c.h.b16 %v536
    %v1672 = vunpack.c.l.b16 %v537
    %v1673 = vunpack.c.h.b16 %v537
    %v1674 = vunpack.c.l.b16 %v538
    %v1675 = vunpack.c.h.b16 %v538
    %v1676 = vunpack.c.l.b16 %v539
    %v1677 = vunpack.c.h.b16 %v539
    %v1678 = vunpack.c.l.b16 %v540
    %v1679 = vunpack.c.h.b16 %v540
    %v1680 = vunpack.c.l.b16 %v541
    %v1681 = vunpack.c.h.b16 %v541
    %v1682 = vunpack.c.l.b16 %v542
    %v1683 = vunpack.c.h.b16 %v542
    %v1684 = vunpack.c.l.b16 %v543
    %v1685 = vunpack.c.h.b16 %v543
    %v1686 = vunpack.c.l.b16 %v544
    %v1687 = vunpack.c.h.b16 %v544
    %v1688 = vunpack.c.l.b16 %v545
    %v1689 = vunpack.c.h.b16 %v545
    %v1690 = vunpack.c.l.b16 %v546
    %v1691 = vunpack.c.h.b16 %v546
    %v1692 = vunpack.c.l.b16 %v547
    %v1693 = vunpack.c.h.b16 %v547
    %v1694 = vunpack.c.l.b16 %v548
    %v1695 = vunpack.c.h.b16 %v548
    %v1696 = vunpack.c.l.b16 %v549
    %v1697 = vunpack.c.h.b16 %v549
    %v1698 = vunpack.c.l.b16 %v550
    %v1699 = vunpack.c.h.b16 %v550
    %v1700 = vunpack.c.l.b16 %v551
    %v1701 = vunpack.c.h.b16 %v551
    %v1702 = vunpack.c.l.b16 %v552
    %v1703 = vunpack.c.h.b16 %v552
    %v1704 = vunpack.c.l.b16 %v553
    %v1705 = vunpack.c.h.b16 %v553
    %v1706 = vunpack.c.l.b16 %v554
    %v1707 = vunpack.c.h.b16 %v554
    %v1708 = vunpack.c.l.b16 %v555
    %v1709 = vunpack.c.h.b16 %v555
    %v1710 = vunpack.c.l.b16 %v556
    %v1711 = vunpack.c.h.b16 %v556
    %v1712 = vunpack.c.l.b16 %v557
    %v1713 = vunpack.c.h.b16 %v557
    %v1714 = vunpack.c.l.b16 %v558
    %v1715 = vunpack.c.h.b16 %v558
    %v1716 = vunpack.c.l.b16 %v559
    %v1717 = vunpack.c.h.b16 %v559
    %v1718 = vpack.c.b16 %v952, %v950
    %v1719 = vpack.c.b16 %v953, %v951
    %v1720 = vpack.c.b16 %v956, %v954
    %v1721 = vpack.c.b16 %v957, %v955
    %v1722 = vpack.c.b16 %v960, %v958
    %v1723 = vpack.c.b16 %v961, %v959
    %v1724 = vpack.c.b16 %v964, %v962
    %v1725 = vpack.c.b16 %v965, %v963
    %v1726 = vpack.c.b16 %v968, %v966
    %v1727 = vpack.c.b16 %v969, %v967
    %v1728 = vpack.c.b16 %v972, %v970
    %v1729 = vpack.c.b16 %v973, %v971
    %v1730 = vpack.c.b16 %v976, %v974
    %v1731 = vpack.c.b16 %v977, %v975
    %v1732 = vpack.c.b16 %v980, %v978
    %v1733 = vpack.c.b16 %v981, %v979
    %v1734 = vpack.c.b16 %v984, %v982
    %v1735 = vpack.c.b16 %v985, %v983
    %v1736 = vpack.c.b16 %v988, %v986
    %v1737 = vpack.c.b16 %v989, %v987
    %v1738 = vpack.c.b16 %v992, %v990
    %v1739 = vpack.c.b16 %v993, %v991
    %v1740 = vpack.c.b16 %v996, %v994
    %v1741 = vpack.c.b16 %v997, %v995
    %v1742 = vpack.c.b16 %v1000, %v998
    %v1743 = vpack.c.b16 %v1001, %v999
    %v1744 = vpack.c.b16 %v1004, %v1002
    %v1745 = vpack.c.b16 %v1005, %v1003
    %v1746 = vpack.c.b16 %v1008, %v1006
    %v1747 = vpack.c.b16 %v1009, %v1007
    %v1748 = vpack.c.b16 %v1012, %v1010
    %v1749 = vpack.c.b16 %v1013, %v1011
    %v1750 = vpack.c.b16 %v1016, %v1014
    %v1751 = vpack.c.b16 %v1017, %v1015
    %v1752 = vpack.c.b16 %v1020, %v1018
    %v1753 = vpack.c.b16 %v1021, %v1019
    %v1754 = vpack.c.b16 %v1024, %v1022
    %v1755 = vpack.c.b16 %v1025, %v1023
    %v1756 = vpack.c.b16 %v1028, %v1026
    %v1757 = vpack.c.b16 %v1029, %v1027
    %v1758 = vpack.c.b16 %v1032, %v1030
    %v1759 = vpack.c.b16 %v1033, %v1031
    %v1760 = vpack.c.b16 %v1036, %v1034
    %v1761 = vpack.c.b16 %v1037, %v1035
    %v1762 = vpack.c.b16 %v1040, %v1038
    %v1763 = vpack.c.b16 %v1041, %v1039
    %v1764 = vpack.c.b16 %v1044, %v1042
    %v1765 = vpack.c.b16 %v1045, %v1043
    %v1766 = vpack.c.b16 %v1048, %v1046
    %v1767 = vpack.c.b16 %v1049, %v1047
    %v1768 = vpack.c.b16 %v1052, %v1050
    %v1769 = vpack.c.b16 %v1053, %v1051
    %v1770 = vpack.c.b16 %v1056, %v1054
    %v1771 = vpack.c.b16 %v1057, %v1055
    %v1772 = vpack.c.b16 %v1060, %v1058
    %v1773 = vpack.c.b16 %v1061, %v1059
    %v1774 = vpack.c.b16 %v1064, %v1062
    %v1775 = vpack.c.b16 %v1065, %v1063
    %v1776 = vpack.c.b16 %v1068, %v1066
    %v1777 = vpack.c.b16 %v1069, %v1067
    %v1778 = vpack.c.b16 %v1072, %v1070
    %v1779 = vpack.c.b16 %v1073, %v1071
    %v1780 = vpack.c.b16 %v1076, %v1074
    %v1781 = vpack.c.b16 %v1077, %v1075
    %v1782 = vpack.c.b16 %v1080, %v1078
    %v1783 = vpack.c.b16 %v1081, %v1079
    %v1784 = vpack.c.b16 %v1084, %v1082
    %v1785 = vpack.c.b16 %v1085, %v1083
    %v1786 = vpack.c.b16 %v1088, %v1086
    %v1787 = vpack.c.b16 %v1089, %v1087
    %v1788 = vpack.c.b16 %v1092, %v1090
    %v1789 = vpack.c.b16 %v1093, %v1091
    %v1790 = vpack.c.b16 %v1096, %v1094
    %v1791 = vpack.c.b16 %v1097, %v1095
    %v1792 = vpack.c.b16 %v1100, %v1098
    %v1793 = vpack.c.b16 %v1101, %v1099
    %v1794 = vpack.c.b16 %v1104, %v1102
    %v1795 = vpack.c.b16 %v1105, %v1103
    %v1796 = vpack.c.b16 %v1108, %v1106
    %v1797 = vpack.c.b16 %v1109, %v1107
    %v1798 = vpack.c.b16 %v1112, %v1110
    %v1799 = vpack.c.b16 %v1113, %v1111
    %v1800 = vpack.c.b16 %v1116, %v1114
    %v1801 = vpack.c.b16 %v1117, %v1115
    %v1802 = vpack.c.b16 %v1120, %v1118
    %v1803 = vpack.c.b16 %v1121, %v1119
    %v1804 = vpack.c.b16 %v1124, %v1122
    %v1805 = vpack.c.b16 %v1125, %v1123
    %v1806 = vpack.c.b16 %v1128, %v1126
    %v1807 = vpack.c.b16 %v1129, %v1127
    %v1808 = vpack.c.b16 %v1132, %v1130
    %v1809 = vpack.c.b16 %v1133, %v1131
    %v1810 = vpack.c.b16 %v1136, %v1134
    %v1811 = vpack.c.b16 %v1137, %v1135
    %v1812 = vpack.c.b16 %v1140, %v1138
    %v1813 = vpack.c.b16 %v1141, %v1139
    %v1814 = vpack.c.b16 %v1144, %v1142
    %v1815 = vpack.c.b16 %v1145, %v1143
    %v1816 = vpack.c.b16 %v1148, %v1146
    %v1817 = vpack.c.b16 %v1149, %v1147
    %v1818 = vpack.c.b16 %v1152, %v1150
    %v1819 = vpack.c.b16 %v1153, %v1151
    %v1820 = vpack.c.b16 %v1156, %v1154
    %v1821 = vpack.c.b16 %v1157, %v1155
    %v1822 = vpack.c.b16 %v1160, %v1158
    %v1823 = vpack.c.b16 %v1161, %v1159
    %v1824 = vpack.c.b16 %v1164, %v1162
    %v1825 = vpack.c.b16 %v1165, %v1163
    %v1826 = vpack.c.b16 %v1168, %v1166
    %v1827 = vpack.c.b16 %v1169, %v1167
    %v1828 = vpack.c.b16 %v1172, %v1170
    %v1829 = vpack.c.b16 %v1173, %v1171
    %v1830 = vpack.c.b16 %v1176, %v1174
    %v1831 = vpack.c.b16 %v1177, %v1175
    %v1832 = vpack.c.b16 %v1180, %v1178
    %v1833 = vpack.c.b16 %v1181, %v1179
    %v1834 = vpack.c.b16 %v1184, %v1182
    %v1835 = vpack.c.b16 %v1185, %v1183
    %v1836 = vpack.c.b16 %v1188, %v1186
    %v1837 = vpack.c.b16 %v1189, %v1187
    %v1838 = vpack.c.b16 %v1192, %v1190
    %v1839 = vpack.c.b16 %v1193, %v1191
    %v1840 = vpack.c.b16 %v1196, %v1194
    %v1841 = vpack.c.b16 %v1197, %v1195
    %v1842 = vpack.c.b16 %v1200, %v1198
    %v1843 = vpack.c.b16 %v1201, %v1199
    %v1844 = vpack.c.b16 %v1204, %v1202
    %v1845 = vpack.c.b16 %v1205, %v1203
    %v1846 = vpack.c.b16 %v1208, %v1206
    %v1847 = vpack.c.b16 %v1209, %v1207
    %v1848 = vpack.c.b16 %v1212, %v1210
    %v1849 = vpack.c.b16 %v1213, %v1211
    %v1850 = vpack.c.b16 %v1216, %v1214
    %v1851 = vpack.c.b16 %v1217, %v1215
    %v1852 = vpack.c.b16 %v1220, %v1218
    %v1853 = vpack.c.b16 %v1221, %v1219
    %v1854 = vpack.c.b16 %v1224, %v1222
    %v1855 = vpack.c.b16 %v1225, %v1223
    %v1856 = vpack.c.b16 %v1228, %v1226
    %v1857 = vpack.c.b16 %v1229, %v1227
    %v1858 = vpack.c.b16 %v1232, %v1230
    %v1859 = vpack.c.b16 %v1233, %v1231
    %v1860 = vpack.c.b16 %v1236, %v1234
    %v1861 = vpack.c.b16 %v1237, %v1235
    %v1862 = vpack.c.b16 %v1240, %v1238
    %v1863 = vpack.c.b16 %v1241, %v1239
    %v1864 = vpack.c.b16 %v1244, %v1242
    %v1865 = vpack.c.b16 %v1245, %v1243
    %v1866 = vpack.c.b16 %v1248, %v1246
    %v1867 = vpack.c.b16 %v1249, %v1247
    %v1868 = vpack.c.b16 %v1252, %v1250
    %v1869 = vpack.c.b16 %v1253, %v1251
    %v1870 = vpack.c.b16 %v1256, %v1254
    %v1871 = vpack.c.b16 %v1257, %v1255
    %v1872 = vpack.c.b16 %v1260, %v1258
    %v1873 = vpack.c.b16 %v1261, %v1259
    %v1874 = vpack.c.b16 %v1264, %v1262
    %v1875 = vpack.c.b16 %v1265, %v1263
    %v1876 = vpack.c.b16 %v1268, %v1266
    %v1877 = vpack.c.b16 %v1269, %v1267
    %v1878 = vpack.c.b16 %v1272, %v1270
    %v1879 = vpack.c.b16 %v1273, %v1271
    %v1880 = vpack.c.b16 %v1276, %v1274
    %v1881 = vpack.c.b16 %v1277, %v1275
    %v1882 = vpack.c.b16 %v1280, %v1278
    %v1883 = vpack.c.b16 %v1281, %v1279
    %v1884 = vpack.c.b16 %v1284, %v1282
    %v1885 = vpack.c.b16 %v1285, %v1283
    %v1886 = vpack.c.b16 %v1288, %v1286
    %v1887 = vpack.c.b16 %v1289, %v1287
    %v1888 = vpack.c.b16 %v1292, %v1290
    %v1889 = vpack.c.b16 %v1293, %v1291
    %v1890 = vpack.c.b16 %v1296, %v1294
    %v1891 = vpack.c.b16 %v1297, %v1295
    %v1892 = vpack.c.b16 %v1300, %v1298
    %v1893 = vpack.c.b16 %v1301, %v1299
    %v1894 = vpack.c.b16 %v1304, %v1302
    %v1895 = vpack.c.b16 %v1305, %v1303
    %v1896 = vpack.c.b16 %v1308, %v1306
    %v1897 = vpack.c.b16 %v1309, %v1307
    %v1898 = vpack.c.b16 %v1312, %v1310
    %v1899 = vpack.c.b16 %v1313, %v1311
    %v1900 = vpack.c.b16 %v1316, %v1314
    %v1901 = vpack.c.b16 %v1317, %v1315
    %v1902 = vpack.c.b16 %v1320, %v1318
    %v1903 = vpack.c.b16 %v1321, %v1319
    %v1904 = vpack.c.b16 %v1324, %v1322
    %v1905 = vpack.c.b16 %v1325, %v1323
    %v1906 = vpack.c.b16 %v1328, %v1326
    %v1907 = vpack.c.b16 %v1329, %v1327
    %v1908 = vpack.c.b16 %v1332, %v1330
    %v1909 = vpack.c.b16 %v1333, %v1331
    %v1910 = vpack.c.b16 %v1336, %v1334
    %v1911 = vpack.c.b16 %v1337, %v1335
    %v1912 = vpack.c.b16 %v1340, %v1338
    %v1913 = vpack.c.b16 %v1341, %v1339
    %v1914 = vpack.c.b16 %v1344, %v1342
    %v1915 = vpack.c.b16 %v1345, %v1343
    %v1916 = vpack.c.b16 %v1348, %v1346
    %v1917 = vpack.c.b16 %v1349, %v1347
    %v1918 = vpack.c.b16 %v1352, %v1350
    %v1919 = vpack.c.b16 %v1353, %v1351
    %v1920 = vpack.c.b16 %v1356, %v1354
    %v1921 = vpack.c.b16 %v1357, %v1355
    %v1922 = vpack.c.b16 %v1360, %v1358
    %v1923 = vpack.c.b16 %v1361, %v1359
    %v1924 = vpack.c.b16 %v1364, %v1362
    %v1925 = vpack.c.b16 %v1365, %v1363
    %v1926 = vpack.c.b16 %v1368, %v1366
    %v1927 = vpack.c.b16 %v1369, %v1367
    %v1928 = vpack.c.b16 %v1372, %v1370
    %v1929 = vpack.c.b16 %v1373, %v1371
    %v1930 = vpack.c.b16 %v1376, %v1374
    %v1931 = vpack.c.b16 %v1377, %v1375
    %v1932 = vpack.c.b16 %v1380, %v1378
    %v1933 = vpack.c.b16 %v1381, %v1379
    %v1934 = vpack.c.b16 %v1384, %v1382
    %v1935 = vpack.c.b16 %v1385, %v1383
    %v1936 = vpack.c.b16 %v1388, %v1386
    %v1937 = vpack.c.b16 %v1389, %v1387
    %v1938 = vpack.c.b16 %v1392, %v1390
    %v1939 = vpack.c.b16 %v1393, %v1391
    %v1940 = vpack.c.b16 %v1396, %v1394
    %v1941 = vpack.c.b16 %v1397, %v1395
    %v1942 = vpack.c.b16 %v1400, %v1398
    %v1943 = vpack.c.b16 %v1401, %v1399
    %v1944 = vpack.c.b16 %v1404, %v1402
    %v1945 = vpack.c.b16 %v1405, %v1403
    %v1946 = vpack.c.b16 %v1408, %v1406
    %v1947 = vpack.c.b16 %v1409, %v1407
    %v1948 = vpack.c.b16 %v1412, %v1410
    %v1949 = vpack.c.b16 %v1413, %v1411
    %v1950 = vpack.c.b16 %v1416, %v1414
    %v1951 = vpack.c.b16 %v1417, %v1415
    %v1952 = vpack.c.b16 %v1420, %v1418
    %v1953 = vpack.c.b16 %v1421, %v1419
    %v1954 = vpack.c.b16 %v1424, %v1422
    %v1955 = vpack.c.b16 %v1425, %v1423
    %v1956 = vpack.c.b16 %v1428, %v1426
    %v1957 = vpack.c.b16 %v1429, %v1427
    %v1958 = vpack.c.b16 %v1432, %v1430
    %v1959 = vpack.c.b16 %v1433, %v1431
    %v1960 = vpack.c.b16 %v1436, %v1434
    %v1961 = vpack.c.b16 %v1437, %v1435
    %v1962 = vpack.c.b16 %v1440, %v1438
    %v1963 = vpack.c.b16 %v1441, %v1439
    %v1964 = vpack.c.b16 %v1444, %v1442
    %v1965 = vpack.c.b16 %v1445, %v1443
    %v1966 = vpack.c.b16 %v1448, %v1446
    %v1967 = vpack.c.b16 %v1449, %v1447
    %v1968 = vpack.c.b16 %v1452, %v1450
    %v1969 = vpack.c.b16 %v1453, %v1451
    %v1970 = vpack.c.b16 %v1456, %v1454
    %v1971 = vpack.c.b16 %v1457, %v1455
    %v1972 = vpack.c.b16 %v1460, %v1458
    %v1973 = vpack.c.b16 %v1461, %v1459
    %v1974 = vpack.c.b16 %v1464, %v1462
    %v1975 = vpack.c.b16 %v1465, %v1463
    %v1976 = vpack.c.b16 %v1468, %v1466
    %v1977 = vpack.c.b16 %v1469, %v1467
    %v1978 = vpack.c.b16 %v1472, %v1470
    %v1979 = vpack.c.b16 %v1473, %v1471
    %v1980 = vpack.c.b16 %v1476, %v1474
    %v1981 = vpack.c.b16 %v1477, %v1475
    %v1982 = vpack.c.b16 %v1480, %v1478
    %v1983 = vpack.c.b16 %v1481, %v1479
    %v1984 = vpack.c.b16 %v1484, %v1482
    %v1985 = vpack.c.b16 %v1485, %v1483
    %v1986 = vpack.c.b16 %v1488, %v1486
    %v1987 = vpack.c.b16 %v1489, %v1487
    %v1988 = vpack.c.b16 %v1492, %v1490
    %v1989 = vpack.c.b16 %v1493, %v1491
    %v1990 = vpack.c.b16 %v1496, %v1494
    %v1991 = vpack.c.b16 %v1497, %v1495
    %v1992 = vpack.c.b16 %v1500, %v1498
    %v1993 = vpack.c.b16 %v1501, %v1499
    %v1994 = vpack.c.b16 %v1504, %v1502
    %v1995 = vpack.c.b16 %v1505, %v1503
    %v1996 = vpack.c.b16 %v1508, %v1506
    %v1997 = vpack.c.b16 %v1509, %v1507
    %v1998 = vpack.c.b16 %v1512, %v1510
    %v1999 = vpack.c.b16 %v1513, %v1511
    %v2000 = vpack.c.b16 %v1516, %v1514
    %v2001 = vpack.c.b16 %v1517, %v1515
    %v2002 = vpack.c.b16 %v1520, %v1518
    %v2003 = vpack.c.b16 %v1521, %v1519
    %v2004 = vpack.c.b16 %v1524, %v1522
    %v2005 = vpack.c.b16 %v1525, %v1523
    %v2006 = vpack.c.b16 %v1528, %v1526
    %v2007 = vpack.c.b16 %v1529, %v1527
    %v2008 = vpack.c.b16 %v1532, %v1530
    %v2009 = vpack.c.b16 %v1533, %v1531
    %v2010 = vpack.c.b16 %v1536, %v1534
    %v2011 = vpack.c.b16 %v1537, %v1535
    %v2012 = vpack.c.b16 %v1540, %v1538
    %v2013 = vpack.c.b16 %v1541, %v1539
    %v2014 = vpack.c.b16 %v1544, %v1542
    %v2015 = vpack.c.b16 %v1545, %v1543
    %v2016 = vpack.c.b16 %v1548, %v1546
    %v2017 = vpack.c.b16 %v1549, %v1547
    %v2018 = vpack.c.b16 %v1552, %v1550
    %v2019 = vpack.c.b16 %v1553, %v1551
    %v2020 = vpack.c.b16 %v1556, %v1554
    %v2021 = vpack.c.b16 %v1557, %v1555
    %v2022 = vpack.c.b16 %v1560, %v1558
    %v2023 = vpack.c.b16 %v1561, %v1559
    %v2024 = vpack.c.b16 %v1564, %v1562
    %v2025 = vpack.c.b16 %v1565, %v1563
    %v2026 = vpack.c.b16 %v1568, %v1566
    %v2027 = vpack.c.b16 %v1569, %v1567
    %v2028 = vpack.c.b16 %v1572, %v1570
    %v2029 = vpack.c.b16 %v1573, %v1571
    %v2030 = vpack.c.b16 %v1576, %v1574
    %v2031 = vpack.c.b16 %v1577, %v1575
    %v2032 = vpack.c.b16 %v1580, %v1578
    %v2033 = vpack.c.b16 %v1581, %v1579
    %v2034 = vpack.c.b16 %v1584, %v1582
    %v2035 = vpack.c.b16 %v1585, %v1583
    %v2036 = vpack.c.b16 %v1588, %v1586
    %v2037 = vpack.c.b16 %v1589, %v1587
    %v2038 = vpack.c.b16 %v1592, %v1590
    %v2039 = vpack.c.b16 %v1593, %v1591
    %v2040 = vpack.c.b16 %v1596, %v1594
    %v2041 = vpack.c.b16 %v1597, %v1595
    %v2042 = vpack.c.b16 %v1600, %v1598
    %v2043 = vpack.c.b16 %v1601, %v1599
    %v2044 = vpack.c.b16 %v1604, %v1602
    %v2045 = vpack.c.b16 %v1605, %v1603
    %v2046 = vpack.c.b16 %v1608, %v1606
    %v2047 = vpack.c.b16 %v1609, %v1607
    %v2048 = vpack.c.b16 %v1612, %v1610
    %v2049 = vpack.c.b16 %v1613, %v1611
    %v2050 = vpack.c.b16 %v1616, %v1614
    %v2051 = vpack.c.b16 %v1617, %v1615
    %v2052 = vpack.c.b16 %v1620, %v1618
    %v2053 = vpack.c.b16 %v1621, %v1619
    %v2054 = vpack.c.b16 %v1624, %v1622
    %v2055 = vpack.c.b16 %v1625, %v1623
    %v2056 = vpack.c.b16 %v1628, %v1626
    %v2057 = vpack.c.b16 %v1629, %v1627
    %v2058 = vpack.c.b16 %v1632, %v1630
    %v2059 = vpack.c.b16 %v1633, %v1631
    %v2060 = vpack.c.b16 %v1636, %v1634
    %v2061 = vpack.c.b16 %v1637, %v1635
    %v2062 = vpack.c.b16 %v1640, %v1638
    %v2063 = vpack.c.b16 %v1641, %v1639
    %v2064 = vpack.c.b16 %v1644, %v1642
    %v2065 = vpack.c.b16 %v1645, %v1643
    %v2066 = vpack.c.b16 %v1648, %v1646
    %v2067 = vpack.c.b16 %v1649, %v1647
    %v2068 = vpack.c.b16 %v1652, %v1650
    %v2069 = vpack.c.b16 %v1653, %v1651
    %v2070 = vpack.c.b16 %v1656, %v1654
    %v2071 = vpack.c.b16 %v1657, %v1655
    %v2072 = vpack.c.b16 %v1660, %v1658
    %v2073 = vpack.c.b16 %v1661, %v1659
    %v2074 = vpack.c.b16 %v1664, %v1662
    %v2075 = vpack.c.b16 %v1665, %v1663
    %v2076 = vpack.c.b16 %v1668, %v1666
    %v2077 = vpack.c.b16 %v1669, %v1667
    %v2078 = vpack.c.b16 %v1672, %v1670
    %v2079 = vpack.c.b16 %v1673, %v1671
    %v2080 = vpack.c.b16 %v1676, %v1674
    %v2081 = vpack.c.b16 %v1677, %v1675
    %v2082 = vpack.c.b16 %v1680, %v1678
    %v2083 = vpack.c.b16 %v1681, %v1679
    %v2084 = vpack.c.b16 %v1684, %v1682
    %v2085 = vpack.c.b16 %v1685, %v1683
    %v2086 = vpack.c.b16 %v1688, %v1686
    %v2087 = vpack.c.b16 %v1689, %v1687
    %v2088 = vpack.c.b16 %v1692, %v1690
    %v2089 = vpack.c.b16 %v1693, %v1691
    %v2090 = vpack.c.b16 %v1696, %v1694
    %v2091 = vpack.c.b16 %v1697, %v1695
    %v2092 = vpack.c.b16 %v1700, %v1698
    %v2093 = vpack.c.b16 %v1701, %v1699
    %v2094 = vpack.c.b16 %v1704, %v1702
    %v2095 = vpack.c.b16 %v1705, %v1703
    %v2096 = vpack.c.b16 %v1708, %v1706
    %v2097 = vpack.c.b16 %v1709, %v1707
    %v2098 = vpack.c.b16 %v1712, %v1710
    %v2099 = vpack.c.b16 %v1713, %v1711
    %v2100 = vpack.c.b16 %v1716, %v1714
    %v2101 = vpack.c.b16 %v1717, %v1715
    %2486 = vmatpush.bf16.msra.mxu0 %v1732
    %2487 = vmatpush.bf16.msra.mxu0 %v1730
    %2488 = vmatpush.bf16.msra.mxu0 %v1728
    %2489 = vmatpush.bf16.msra.mxu0 %v1726
    %2490 = vmatpush.bf16.msra.mxu0 %v1724
    %2491 = vmatpush.bf16.msra.mxu0 %v1722
    %2492 = vmatpush.bf16.msra.mxu0 %v1720
    %2493 = vmatpush.bf16.msra.mxu0 %v1718
    %2494 = vmatmul.bf16.gmra.mxu0 %v152
    %v2495 = vpop.f32.mrf.mxu0
    %v2496 = vadd.f32 %v562, %v2495
    %v2497 = vpop.f32.mrf.mxu0
    %2498 = vdwg.mxu0
    %2499 = vmatpush.bf16.msra.mxu0 %v1748
    %2500 = vmatpush.bf16.msra.mxu0 %v1746
    %2501 = vmatpush.bf16.msra.mxu0 %v1744
    %2502 = vmatpush.bf16.msra.mxu0 %v1742
    %2503 = vmatpush.bf16.msra.mxu0 %v1740
    %2504 = vmatpush.bf16.msra.mxu0 %v1738
    %2505 = vmatpush.bf16.msra.mxu0 %v1736
    %2506 = vmatpush.bf16.msra.mxu0 %v1734
    %2507 = vmatmul.bf16.gmra.mxu0 %v153
    %v2508 = vpop.f32.mrf.mxu0
    %v2509 = vadd.f32 %v2496, %v2508
    %v2510 = vpop.f32.mrf.mxu0
    %2511 = vdwg.mxu0
    %2512 = vmatpush.bf16.msra.mxu0 %v1764
    %2513 = vmatpush.bf16.msra.mxu0 %v1762
    %2514 = vmatpush.bf16.msra.mxu0 %v1760
    %2515 = vmatpush.bf16.msra.mxu0 %v1758
    %2516 = vmatpush.bf16.msra.mxu0 %v1756
    %2517 = vmatpush.bf16.msra.mxu0 %v1754
    %2518 = vmatpush.bf16.msra.mxu0 %v1752
    %2519 = vmatpush.bf16.msra.mxu0 %v1750
    %2520 = vmatmul.bf16.gmra.mxu0 %v154
    %v2521 = vpop.f32.mrf.mxu0
    %v2522 = vadd.f32 %v2509, %v2521
    %v2523 = vpop.f32.mrf.mxu0
    %2524 = vdwg.mxu0
    %2525 = vmatpush.bf16.msra.mxu0 %v1780
    %2526 = vmatpush.bf16.msra.mxu0 %v1778
    %2527 = vmatpush.bf16.msra.mxu0 %v1776
    %2528 = vmatpush.bf16.msra.mxu0 %v1774
    %2529 = vmatpush.bf16.msra.mxu0 %v1772
    %2530 = vmatpush.bf16.msra.mxu0 %v1770
    %2531 = vmatpush.bf16.msra.mxu0 %v1768
    %2532 = vmatpush.bf16.msra.mxu0 %v1766
    %2533 = vmatmul.bf16.gmra.mxu0 %v155
    %v2534 = vpop.f32.mrf.mxu0
    %v2535 = vadd.f32 %v2522, %v2534
    %v2536 = vpop.f32.mrf.mxu0
    %2537 = vdwg.mxu0
    %2538 = vmatpush.bf16.msra.mxu0 %v1796
    %2539 = vmatpush.bf16.msra.mxu0 %v1794
    %2540 = vmatpush.bf16.msra.mxu0 %v1792
    %2541 = vmatpush.bf16.msra.mxu0 %v1790
    %2542 = vmatpush.bf16.msra.mxu0 %v1788
    %2543 = vmatpush.bf16.msra.mxu0 %v1786
    %2544 = vmatpush.bf16.msra.mxu0 %v1784
    %2545 = vmatpush.bf16.msra.mxu0 %v1782
    %2546 = vmatmul.bf16.gmra.mxu0 %v156
    %v2547 = vpop.f32.mrf.mxu0
    %v2548 = vadd.f32 %v2535, %v2547
    %v2549 = vpop.f32.mrf.mxu0
    %2550 = vdwg.mxu0
    %2551 = vmatpush.bf16.msra.mxu0 %v1812
    %2552 = vmatpush.bf16.msra.mxu0 %v1810
    %2553 = vmatpush.bf16.msra.mxu0 %v1808
    %2554 = vmatpush.bf16.msra.mxu0 %v1806
    %2555 = vmatpush.bf16.msra.mxu0 %v1804
    %2556 = vmatpush.bf16.msra.mxu0 %v1802
    %2557 = vmatpush.bf16.msra.mxu0 %v1800
    %2558 = vmatpush.bf16.msra.mxu0 %v1798
    %2559 = vmatmul.bf16.gmra.mxu0 %v157
    %v2560 = vpop.f32.mrf.mxu0
    %v2561 = vadd.f32 %v2548, %v2560
    %v2562 = vpop.f32.mrf.mxu0
    %2563 = vdwg.mxu0
    %2564 = vmatpush.bf16.msra.mxu0 %v1828
    %2565 = vmatpush.bf16.msra.mxu0 %v1826
    %2566 = vmatpush.bf16.msra.mxu0 %v1824
    %2567 = vmatpush.bf16.msra.mxu0 %v1822
    %2568 = vmatpush.bf16.msra.mxu0 %v1820
    %2569 = vmatpush.bf16.msra.mxu0 %v1818
    %2570 = vmatpush.bf16.msra.mxu0 %v1816
    %2571 = vmatpush.bf16.msra.mxu0 %v1814
    %2572 = vmatmul.bf16.gmra.mxu0 %v158
    %v2573 = vpop.f32.mrf.mxu0
    %v2574 = vadd.f32 %v2561, %v2573
    %v2575 = vpop.f32.mrf.mxu0
    %2576 = vdwg.mxu0
    %2577 = vmatpush.bf16.msra.mxu0 %v1844
    %2578 = vmatpush.bf16.msra.mxu0 %v1842
    %2579 = vmatpush.bf16.msra.mxu0 %v1840
    %2580 = vmatpush.bf16.msra.mxu0 %v1838
    %2581 = vmatpush.bf16.msra.mxu0 %v1836
    %2582 = vmatpush.bf16.msra.mxu0 %v1834
    %2583 = vmatpush.bf16.msra.mxu0 %v1832
    %2584 = vmatpush.bf16.msra.mxu0 %v1830
    %2585 = vmatmul.bf16.gmra.mxu0 %v159
    %v2586 = vpop.f32.mrf.mxu0
    %v2587 = vadd.f32 %v2574, %v2586
    %v2588 = vpop.f32.mrf.mxu0
    %2589 = vdwg.mxu0
    %2590 = vmatpush.bf16.msra.mxu0 %v1860
    %2591 = vmatpush.bf16.msra.mxu0 %v1858
    %2592 = vmatpush.bf16.msra.mxu0 %v1856
    %2593 = vmatpush.bf16.msra.mxu0 %v1854
    %2594 = vmatpush.bf16.msra.mxu0 %v1852
    %2595 = vmatpush.bf16.msra.mxu0 %v1850
    %2596 = vmatpush.bf16.msra.mxu0 %v1848
    %2597 = vmatpush.bf16.msra.mxu0 %v1846
    %2598 = vmatmul.bf16.gmra.mxu0 %v160
    %v2599 = vpop.f32.mrf.mxu0
    %v2600 = vadd.f32 %v2587, %v2599
    %v2601 = vpop.f32.mrf.mxu0
    %2602 = vdwg.mxu0
    %2603 = vmatpush.bf16.msra.mxu0 %v1876
    %2604 = vmatpush.bf16.msra.mxu0 %v1874
    %2605 = vmatpush.bf16.msra.mxu0 %v1872
    %2606 = vmatpush.bf16.msra.mxu0 %v1870
    %2607 = vmatpush.bf16.msra.mxu0 %v1868
    %2608 = vmatpush.bf16.msra.mxu0 %v1866
    %2609 = vmatpush.bf16.msra.mxu0 %v1864
    %2610 = vmatpush.bf16.msra.mxu0 %v1862
    %2611 = vmatmul.bf16.gmra.mxu0 %v161
    %v2612 = vpop.f32.mrf.mxu0
    %v2613 = vadd.f32 %v2600, %v2612
    %v2614 = vpop.f32.mrf.mxu0
    %2615 = vdwg.mxu0
    %2616 = vmatpush.bf16.msra.mxu0 %v1892
    %2617 = vmatpush.bf16.msra.mxu0 %v1890
    %2618 = vmatpush.bf16.msra.mxu0 %v1888
    %2619 = vmatpush.bf16.msra.mxu0 %v1886
    %2620 = vmatpush.bf16.msra.mxu0 %v1884
    %2621 = vmatpush.bf16.msra.mxu0 %v1882
    %2622 = vmatpush.bf16.msra.mxu0 %v1880
    %2623 = vmatpush.bf16.msra.mxu0 %v1878
    %2624 = vmatmul.bf16.gmra.mxu0 %v162
    %v2625 = vpop.f32.mrf.mxu0
    %v2626 = vadd.f32 %v2613, %v2625
    %v2627 = vpop.f32.mrf.mxu0
    %2628 = vdwg.mxu0
    %2629 = vmatpush.bf16.msra.mxu0 %v1908
    %2630 = vmatpush.bf16.msra.mxu0 %v1906
    %2631 = vmatpush.bf16.msra.mxu0 %v1904
    %2632 = vmatpush.bf16.msra.mxu0 %v1902
    %2633 = vmatpush.bf16.msra.mxu0 %v1900
    %2634 = vmatpush.bf16.msra.mxu0 %v1898
    %2635 = vmatpush.bf16.msra.mxu0 %v1896
    %2636 = vmatpush.bf16.msra.mxu0 %v1894
    %2637 = vmatmul.bf16.gmra.mxu0 %v163
    %v2638 = vpop.f32.mrf.mxu0
    %v2639 = vadd.f32 %v2626, %v2638
    %v2640 = vpop.f32.mrf.mxu0
    %2641 = vdwg.mxu0
    %2642 = vmatpush.bf16.msra.mxu0 %v1924
    %2643 = vmatpush.bf16.msra.mxu0 %v1922
    %2644 = vmatpush.bf16.msra.mxu0 %v1920
    %2645 = vmatpush.bf16.msra.mxu0 %v1918
    %2646 = vmatpush.bf16.msra.mxu0 %v1916
    %2647 = vmatpush.bf16.msra.mxu0 %v1914
    %2648 = vmatpush.bf16.msra.mxu0 %v1912
    %2649 = vmatpush.bf16.msra.mxu0 %v1910
    %2650 = vmatmul.bf16.gmra.mxu0 %v164
    %v2651 = vpop.f32.mrf.mxu0
    %v2652 = vadd.f32 %v2639, %v2651
    %v2653 = vpop.f32.mrf.mxu0
    %2654 = vdwg.mxu0
    %2655 = vmatpush.bf16.msra.mxu0 %v1940
    %2656 = vmatpush.bf16.msra.mxu0 %v1938
    %2657 = vmatpush.bf16.msra.mxu0 %v1936
    %2658 = vmatpush.bf16.msra.mxu0 %v1934
    %2659 = vmatpush.bf16.msra.mxu0 %v1932
    %2660 = vmatpush.bf16.msra.mxu0 %v1930
    %2661 = vmatpush.bf16.msra.mxu0 %v1928
    %2662 = vmatpush.bf16.msra.mxu0 %v1926
    %2663 = vmatmul.bf16.gmra.mxu0 %v165
    %v2664 = vpop.f32.mrf.mxu0
    %v2665 = vadd.f32 %v2652, %v2664
    %v2666 = vpop.f32.mrf.mxu0
    %2667 = vdwg.mxu0
    %2668 = vmatpush.bf16.msra.mxu0 %v1956
    %2669 = vmatpush.bf16.msra.mxu0 %v1954
    %2670 = vmatpush.bf16.msra.mxu0 %v1952
    %2671 = vmatpush.bf16.msra.mxu0 %v1950
    %2672 = vmatpush.bf16.msra.mxu0 %v1948
    %2673 = vmatpush.bf16.msra.mxu0 %v1946
    %2674 = vmatpush.bf16.msra.mxu0 %v1944
    %2675 = vmatpush.bf16.msra.mxu0 %v1942
    %2676 = vmatmul.bf16.gmra.mxu0 %v166
    %v2677 = vpop.f32.mrf.mxu0
    %v2678 = vadd.f32 %v2665, %v2677
    %v2679 = vpop.f32.mrf.mxu0
    %2680 = vdwg.mxu0
    %2681 = vmatpush.bf16.msra.mxu0 %v1972
    %2682 = vmatpush.bf16.msra.mxu0 %v1970
    %2683 = vmatpush.bf16.msra.mxu0 %v1968
    %2684 = vmatpush.bf16.msra.mxu0 %v1966
    %2685 = vmatpush.bf16.msra.mxu0 %v1964
    %2686 = vmatpush.bf16.msra.mxu0 %v1962
    %2687 = vmatpush.bf16.msra.mxu0 %v1960
    %2688 = vmatpush.bf16.msra.mxu0 %v1958
    %2689 = vmatmul.bf16.gmra.mxu0 %v167
    %v2690 = vpop.f32.mrf.mxu0
    %v2691 = vadd.f32 %v2678, %v2690
    %v2692 = vpop.f32.mrf.mxu0
    %2693 = vdwg.mxu0
    %2694 = vmatpush.bf16.msra.mxu0 %v1988
    %2695 = vmatpush.bf16.msra.mxu0 %v1986
    %2696 = vmatpush.bf16.msra.mxu0 %v1984
    %2697 = vmatpush.bf16.msra.mxu0 %v1982
    %2698 = vmatpush.bf16.msra.mxu0 %v1980
    %2699 = vmatpush.bf16.msra.mxu0 %v1978
    %2700 = vmatpush.bf16.msra.mxu0 %v1976
    %2701 = vmatpush.bf16.msra.mxu0 %v1974
    %2702 = vmatmul.bf16.gmra.mxu0 %v168
    %v2703 = vpop.f32.mrf.mxu0
    %v2704 = vadd.f32 %v2691, %v2703
    %v2705 = vpop.f32.mrf.mxu0
    %2706 = vdwg.mxu0
    %2707 = vmatpush.bf16.msra.mxu0 %v2004
    %2708 = vmatpush.bf16.msra.mxu0 %v2002
    %2709 = vmatpush.bf16.msra.mxu0 %v2000
    %2710 = vmatpush.bf16.msra.mxu0 %v1998
    %2711 = vmatpush.bf16.msra.mxu0 %v1996
    %2712 = vmatpush.bf16.msra.mxu0 %v1994
    %2713 = vmatpush.bf16.msra.mxu0 %v1992
    %2714 = vmatpush.bf16.msra.mxu0 %v1990
    %2715 = vmatmul.bf16.gmra.mxu0 %v169
    %v2716 = vpop.f32.mrf.mxu0
    %v2717 = vadd.f32 %v2704, %v2716
    %v2718 = vpop.f32.mrf.mxu0
    %2719 = vdwg.mxu0
    %2720 = vmatpush.bf16.msra.mxu0 %v2020
    %2721 = vmatpush.bf16.msra.mxu0 %v2018
    %2722 = vmatpush.bf16.msra.mxu0 %v2016
    %2723 = vmatpush.bf16.msra.mxu0 %v2014
    %2724 = vmatpush.bf16.msra.mxu0 %v2012
    %2725 = vmatpush.bf16.msra.mxu0 %v2010
    %2726 = vmatpush.bf16.msra.mxu0 %v2008
    %2727 = vmatpush.bf16.msra.mxu0 %v2006
    %2728 = vmatmul.bf16.gmra.mxu0 %v170
    %v2729 = vpop.f32.mrf.mxu0
    %v2730 = vadd.f32 %v2717, %v2729
    %v2731 = vpop.f32.mrf.mxu0
    %2732 = vdwg.mxu0
    %2733 = vmatpush.bf16.msra.mxu0 %v2036
    %2734 = vmatpush.bf16.msra.mxu0 %v2034
    %2735 = vmatpush.bf16.msra.mxu0 %v2032
    %2736 = vmatpush.bf16.msra.mxu0 %v2030
    %2737 = vmatpush.bf16.msra.mxu0 %v2028
    %2738 = vmatpush.bf16.msra.mxu0 %v2026
    %2739 = vmatpush.bf16.msra.mxu0 %v2024
    %2740 = vmatpush.bf16.msra.mxu0 %v2022
    %2741 = vmatmul.bf16.gmra.mxu0 %v171
    %v2742 = vpop.f32.mrf.mxu0
    %v2743 = vadd.f32 %v2730, %v2742
    %v2744 = vpop.f32.mrf.mxu0
    %2745 = vdwg.mxu0
    %2746 = vmatpush.bf16.msra.mxu0 %v2052
    %2747 = vmatpush.bf16.msra.mxu0 %v2050
    %2748 = vmatpush.bf16.msra.mxu0 %v2048
    %2749 = vmatpush.bf16.msra.mxu0 %v2046
    %2750 = vmatpush.bf16.msra.mxu0 %v2044
    %2751 = vmatpush.bf16.msra.mxu0 %v2042
    %2752 = vmatpush.bf16.msra.mxu0 %v2040
    %2753 = vmatpush.bf16.msra.mxu0 %v2038
    %2754 = vmatmul.bf16.gmra.mxu0 %v172
    %v2755 = vpop.f32.mrf.mxu0
    %v2756 = vadd.f32 %v2743, %v2755
    %v2757 = vpop.f32.mrf.mxu0
    %2758 = vdwg.mxu0
    %2759 = vmatpush.bf16.msra.mxu0 %v2068
    %2760 = vmatpush.bf16.msra.mxu0 %v2066
    %2761 = vmatpush.bf16.msra.mxu0 %v2064
    %2762 = vmatpush.bf16.msra.mxu0 %v2062
    %2763 = vmatpush.bf16.msra.mxu0 %v2060
    %2764 = vmatpush.bf16.msra.mxu0 %v2058
    %2765 = vmatpush.bf16.msra.mxu0 %v2056
    %2766 = vmatpush.bf16.msra.mxu0 %v2054
    %2767 = vmatmul.bf16.gmra.mxu0 %v173
    %v2768 = vpop.f32.mrf.mxu0
    %v2769 = vadd.f32 %v2756, %v2768
    %v2770 = vpop.f32.mrf.mxu0
    %2771 = vdwg.mxu0
    %2772 = vmatpush.bf16.msra.mxu0 %v2084
    %2773 = vmatpush.bf16.msra.mxu0 %v2082
    %2774 = vmatpush.bf16.msra.mxu0 %v2080
    %2775 = vmatpush.bf16.msra.mxu0 %v2078
    %2776 = vmatpush.bf16.msra.mxu0 %v2076
    %2777 = vmatpush.bf16.msra.mxu0 %v2074
    %2778 = vmatpush.bf16.msra.mxu0 %v2072
    %2779 = vmatpush.bf16.msra.mxu0 %v2070
    %2780 = vmatmul.bf16.gmra.mxu0 %v174
    %v2781 = vpop.f32.mrf.mxu0
    %v2782 = vadd.f32 %v2769, %v2781
    %v2783 = vpop.f32.mrf.mxu0
    %2784 = vdwg.mxu0
    %2785 = vmatpush.bf16.msra.mxu0 %v2100
    %2786 = vmatpush.bf16.msra.mxu0 %v2098
    %2787 = vmatpush.bf16.msra.mxu0 %v2096
    %2788 = vmatpush.bf16.msra.mxu0 %v2094
    %2789 = vmatpush.bf16.msra.mxu0 %v2092
    %2790 = vmatpush.bf16.msra.mxu0 %v2090
    %2791 = vmatpush.bf16.msra.mxu0 %v2088
    %2792 = vmatpush.bf16.msra.mxu0 %v2086
    %2793 = vmatmul.bf16.gmra.mxu0 %v175
    %v2794 = vpop.f32.mrf.mxu0
    %v2795 = vadd.f32 %v2782, %v2794
    %v2796 = vpop.f32.mrf.mxu0
    %2797 = vdwg.mxu0
    %2798 = vmatpush.bf16.msra.mxu0 %v1733
    %2799 = vmatpush.bf16.msra.mxu0 %v1731
    %2800 = vmatpush.bf16.msra.mxu0 %v1729
    %2801 = vmatpush.bf16.msra.mxu0 %v1727
    %2802 = vmatpush.bf16.msra.mxu0 %v1725
    %2803 = vmatpush.bf16.msra.mxu0 %v1723
    %2804 = vmatpush.bf16.msra.mxu0 %v1721
    %2805 = vmatpush.bf16.msra.mxu0 %v1719
    %2806 = vmatmul.bf16.gmra.mxu0 %v152
    %v2807 = vpop.f32.mrf.mxu0
    %v2808 = vadd.f32 %v563, %v2807
    %v2809 = vpop.f32.mrf.mxu0
    %2810 = vdwg.mxu0
    %2811 = vmatpush.bf16.msra.mxu0 %v1749
    %2812 = vmatpush.bf16.msra.mxu0 %v1747
    %2813 = vmatpush.bf16.msra.mxu0 %v1745
    %2814 = vmatpush.bf16.msra.mxu0 %v1743
    %2815 = vmatpush.bf16.msra.mxu0 %v1741
    %2816 = vmatpush.bf16.msra.mxu0 %v1739
    %2817 = vmatpush.bf16.msra.mxu0 %v1737
    %2818 = vmatpush.bf16.msra.mxu0 %v1735
    %2819 = vmatmul.bf16.gmra.mxu0 %v153
    %v2820 = vpop.f32.mrf.mxu0
    %v2821 = vadd.f32 %v2808, %v2820
    %v2822 = vpop.f32.mrf.mxu0
    %2823 = vdwg.mxu0
    %2824 = vmatpush.bf16.msra.mxu0 %v1765
    %2825 = vmatpush.bf16.msra.mxu0 %v1763
    %2826 = vmatpush.bf16.msra.mxu0 %v1761
    %2827 = vmatpush.bf16.msra.mxu0 %v1759
    %2828 = vmatpush.bf16.msra.mxu0 %v1757
    %2829 = vmatpush.bf16.msra.mxu0 %v1755
    %2830 = vmatpush.bf16.msra.mxu0 %v1753
    %2831 = vmatpush.bf16.msra.mxu0 %v1751
    %2832 = vmatmul.bf16.gmra.mxu0 %v154
    %v2833 = vpop.f32.mrf.mxu0
    %v2834 = vadd.f32 %v2821, %v2833
    %v2835 = vpop.f32.mrf.mxu0
    %2836 = vdwg.mxu0
    %2837 = vmatpush.bf16.msra.mxu0 %v1781
    %2838 = vmatpush.bf16.msra.mxu0 %v1779
    %2839 = vmatpush.bf16.msra.mxu0 %v1777
    %2840 = vmatpush.bf16.msra.mxu0 %v1775
    %2841 = vmatpush.bf16.msra.mxu0 %v1773
    %2842 = vmatpush.bf16.msra.mxu0 %v1771
    %2843 = vmatpush.bf16.msra.mxu0 %v1769
    %2844 = vmatpush.bf16.msra.mxu0 %v1767
    %2845 = vmatmul.bf16.gmra.mxu0 %v155
    %v2846 = vpop.f32.mrf.mxu0
    %v2847 = vadd.f32 %v2834, %v2846
    %v2848 = vpop.f32.mrf.mxu0
    %2849 = vdwg.mxu0
    %2850 = vmatpush.bf16.msra.mxu0 %v1797
    %2851 = vmatpush.bf16.msra.mxu0 %v1795
    %2852 = vmatpush.bf16.msra.mxu0 %v1793
    %2853 = vmatpush.bf16.msra.mxu0 %v1791
    %2854 = vmatpush.bf16.msra.mxu0 %v1789
    %2855 = vmatpush.bf16.msra.mxu0 %v1787
    %2856 = vmatpush.bf16.msra.mxu0 %v1785
    %2857 = vmatpush.bf16.msra.mxu0 %v1783
    %2858 = vmatmul.bf16.gmra.mxu0 %v156
    %v2859 = vpop.f32.mrf.mxu0
    %v2860 = vadd.f32 %v2847, %v2859
    %v2861 = vpop.f32.mrf.mxu0
    %2862 = vdwg.mxu0
    %2863 = vmatpush.bf16.msra.mxu0 %v1813
    %2864 = vmatpush.bf16.msra.mxu0 %v1811
    %2865 = vmatpush.bf16.msra.mxu0 %v1809
    %2866 = vmatpush.bf16.msra.mxu0 %v1807
    %2867 = vmatpush.bf16.msra.mxu0 %v1805
    %2868 = vmatpush.bf16.msra.mxu0 %v1803
    %2869 = vmatpush.bf16.msra.mxu0 %v1801
    %2870 = vmatpush.bf16.msra.mxu0 %v1799
    %2871 = vmatmul.bf16.gmra.mxu0 %v157
    %v2872 = vpop.f32.mrf.mxu0
    %v2873 = vadd.f32 %v2860, %v2872
    %v2874 = vpop.f32.mrf.mxu0
    %2875 = vdwg.mxu0
    %2876 = vmatpush.bf16.msra.mxu0 %v1829
    %2877 = vmatpush.bf16.msra.mxu0 %v1827
    %2878 = vmatpush.bf16.msra.mxu0 %v1825
    %2879 = vmatpush.bf16.msra.mxu0 %v1823
    %2880 = vmatpush.bf16.msra.mxu0 %v1821
    %2881 = vmatpush.bf16.msra.mxu0 %v1819
    %2882 = vmatpush.bf16.msra.mxu0 %v1817
    %2883 = vmatpush.bf16.msra.mxu0 %v1815
    %2884 = vmatmul.bf16.gmra.mxu0 %v158
    %v2885 = vpop.f32.mrf.mxu0
    %v2886 = vadd.f32 %v2873, %v2885
    %v2887 = vpop.f32.mrf.mxu0
    %2888 = vdwg.mxu0
    %2889 = vmatpush.bf16.msra.mxu0 %v1845
    %2890 = vmatpush.bf16.msra.mxu0 %v1843
    %2891 = vmatpush.bf16.msra.mxu0 %v1841
    %2892 = vmatpush.bf16.msra.mxu0 %v1839
    %2893 = vmatpush.bf16.msra.mxu0 %v1837
    %2894 = vmatpush.bf16.msra.mxu0 %v1835
    %2895 = vmatpush.bf16.msra.mxu0 %v1833
    %2896 = vmatpush.bf16.msra.mxu0 %v1831
    %2897 = vmatmul.bf16.gmra.mxu0 %v159
    %v2898 = vpop.f32.mrf.mxu0
    %v2899 = vadd.f32 %v2886, %v2898
    %v2900 = vpop.f32.mrf.mxu0
    %2901 = vdwg.mxu0
    %2902 = vmatpush.bf16.msra.mxu0 %v1861
    %2903 = vmatpush.bf16.msra.mxu0 %v1859
    %2904 = vmatpush.bf16.msra.mxu0 %v1857
    %2905 = vmatpush.bf16.msra.mxu0 %v1855
    %2906 = vmatpush.bf16.msra.mxu0 %v1853
    %2907 = vmatpush.bf16.msra.mxu0 %v1851
    %2908 = vmatpush.bf16.msra.mxu0 %v1849
    %2909 = vmatpush.bf16.msra.mxu0 %v1847
    %2910 = vmatmul.bf16.gmra.mxu0 %v160
    %v2911 = vpop.f32.mrf.mxu0
    %v2912 = vadd.f32 %v2899, %v2911
    %v2913 = vpop.f32.mrf.mxu0
    %2914 = vdwg.mxu0
    %2915 = vmatpush.bf16.msra.mxu0 %v1877
    %2916 = vmatpush.bf16.msra.mxu0 %v1875
    %2917 = vmatpush.bf16.msra.mxu0 %v1873
    %2918 = vmatpush.bf16.msra.mxu0 %v1871
    %2919 = vmatpush.bf16.msra.mxu0 %v1869
    %2920 = vmatpush.bf16.msra.mxu0 %v1867
    %2921 = vmatpush.bf16.msra.mxu0 %v1865
    %2922 = vmatpush.bf16.msra.mxu0 %v1863
    %2923 = vmatmul.bf16.gmra.mxu0 %v161
    %v2924 = vpop.f32.mrf.mxu0
    %v2925 = vadd.f32 %v2912, %v2924
    %v2926 = vpop.f32.mrf.mxu0
    %2927 = vdwg.mxu0
    %2928 = vmatpush.bf16.msra.mxu0 %v1893
    %2929 = vmatpush.bf16.msra.mxu0 %v1891
    %2930 = vmatpush.bf16.msra.mxu0 %v1889
    %2931 = vmatpush.bf16.msra.mxu0 %v1887
    %2932 = vmatpush.bf16.msra.mxu0 %v1885
    %2933 = vmatpush.bf16.msra.mxu0 %v1883
    %2934 = vmatpush.bf16.msra.mxu0 %v1881
    %2935 = vmatpush.bf16.msra.mxu0 %v1879
    %2936 = vmatmul.bf16.gmra.mxu0 %v162
    %v2937 = vpop.f32.mrf.mxu0
    %v2938 = vadd.f32 %v2925, %v2937
    %v2939 = vpop.f32.mrf.mxu0
    %2940 = vdwg.mxu0
    %2941 = vmatpush.bf16.msra.mxu0 %v1909
    %2942 = vmatpush.bf16.msra.mxu0 %v1907
    %2943 = vmatpush.bf16.msra.mxu0 %v1905
    %2944 = vmatpush.bf16.msra.mxu0 %v1903
    %2945 = vmatpush.bf16.msra.mxu0 %v1901
    %2946 = vmatpush.bf16.msra.mxu0 %v1899
    %2947 = vmatpush.bf16.msra.mxu0 %v1897
    %2948 = vmatpush.bf16.msra.mxu0 %v1895
    %2949 = vmatmul.bf16.gmra.mxu0 %v163
    %v2950 = vpop.f32.mrf.mxu0
    %v2951 = vadd.f32 %v2938, %v2950
    %v2952 = vpop.f32.mrf.mxu0
    %2953 = vdwg.mxu0
    %2954 = vmatpush.bf16.msra.mxu0 %v1925
    %2955 = vmatpush.bf16.msra.mxu0 %v1923
    %2956 = vmatpush.bf16.msra.mxu0 %v1921
    %2957 = vmatpush.bf16.msra.mxu0 %v1919
    %2958 = vmatpush.bf16.msra.mxu0 %v1917
    %2959 = vmatpush.bf16.msra.mxu0 %v1915
    %2960 = vmatpush.bf16.msra.mxu0 %v1913
    %2961 = vmatpush.bf16.msra.mxu0 %v1911
    %2962 = vmatmul.bf16.gmra.mxu0 %v164
    %v2963 = vpop.f32.mrf.mxu0
    %v2964 = vadd.f32 %v2951, %v2963
    %v2965 = vpop.f32.mrf.mxu0
    %2966 = vdwg.mxu0
    %2967 = vmatpush.bf16.msra.mxu0 %v1941
    %2968 = vmatpush.bf16.msra.mxu0 %v1939
    %2969 = vmatpush.bf16.msra.mxu0 %v1937
    %2970 = vmatpush.bf16.msra.mxu0 %v1935
    %2971 = vmatpush.bf16.msra.mxu0 %v1933
    %2972 = vmatpush.bf16.msra.mxu0 %v1931
    %2973 = vmatpush.bf16.msra.mxu0 %v1929
    %2974 = vmatpush.bf16.msra.mxu0 %v1927
    %2975 = vmatmul.bf16.gmra.mxu0 %v165
    %v2976 = vpop.f32.mrf.mxu0
    %v2977 = vadd.f32 %v2964, %v2976
    %v2978 = vpop.f32.mrf.mxu0
    %2979 = vdwg.mxu0
    %2980 = vmatpush.bf16.msra.mxu0 %v1957
    %2981 = vmatpush.bf16.msra.mxu0 %v1955
    %2982 = vmatpush.bf16.msra.mxu0 %v1953
    %2983 = vmatpush.bf16.msra.mxu0 %v1951
    %2984 = vmatpush.bf16.msra.mxu0 %v1949
    %2985 = vmatpush.bf16.msra.mxu0 %v1947
    %2986 = vmatpush.bf16.msra.mxu0 %v1945
    %2987 = vmatpush.bf16.msra.mxu0 %v1943
    %2988 = vmatmul.bf16.gmra.mxu0 %v166
    %v2989 = vpop.f32.mrf.mxu0
    %v2990 = vadd.f32 %v2977, %v2989
    %v2991 = vpop.f32.mrf.mxu0
    %2992 = vdwg.mxu0
    %2993 = vmatpush.bf16.msra.mxu0 %v1973
    %2994 = vmatpush.bf16.msra.mxu0 %v1971
    %2995 = vmatpush.bf16.msra.mxu0 %v1969
    %2996 = vmatpush.bf16.msra.mxu0 %v1967
    %2997 = vmatpush.bf16.msra.mxu0 %v1965
    %2998 = vmatpush.bf16.msra.mxu0 %v1963
    %2999 = vmatpush.bf16.msra.mxu0 %v1961
    %3000 = vmatpush.bf16.msra.mxu0 %v1959
    %3001 = vmatmul.bf16.gmra.mxu0 %v167
    %v3002 = vpop.f32.mrf.mxu0
    %v3003 = vadd.f32 %v2990, %v3002
    %v3004 = vpop.f32.mrf.mxu0
    %3005 = vdwg.mxu0
    %3006 = vmatpush.bf16.msra.mxu0 %v1989
    %3007 = vmatpush.bf16.msra.mxu0 %v1987
    %3008 = vmatpush.bf16.msra.mxu0 %v1985
    %3009 = vmatpush.bf16.msra.mxu0 %v1983
    %3010 = vmatpush.bf16.msra.mxu0 %v1981
    %3011 = vmatpush.bf16.msra.mxu0 %v1979
    %3012 = vmatpush.bf16.msra.mxu0 %v1977
    %3013 = vmatpush.bf16.msra.mxu0 %v1975
    %3014 = vmatmul.bf16.gmra.mxu0 %v168
    %v3015 = vpop.f32.mrf.mxu0
    %v3016 = vadd.f32 %v3003, %v3015
    %v3017 = vpop.f32.mrf.mxu0
    %3018 = vdwg.mxu0
    %3019 = vmatpush.bf16.msra.mxu0 %v2005
    %3020 = vmatpush.bf16.msra.mxu0 %v2003
    %3021 = vmatpush.bf16.msra.mxu0 %v2001
    %3022 = vmatpush.bf16.msra.mxu0 %v1999
    %3023 = vmatpush.bf16.msra.mxu0 %v1997
    %3024 = vmatpush.bf16.msra.mxu0 %v1995
    %3025 = vmatpush.bf16.msra.mxu0 %v1993
    %3026 = vmatpush.bf16.msra.mxu0 %v1991
    %3027 = vmatmul.bf16.gmra.mxu0 %v169
    %v3028 = vpop.f32.mrf.mxu0
    %v3029 = vadd.f32 %v3016, %v3028
    %v3030 = vpop.f32.mrf.mxu0
    %3031 = vdwg.mxu0
    %3032 = vmatpush.bf16.msra.mxu0 %v2021
    %3033 = vmatpush.bf16.msra.mxu0 %v2019
    %3034 = vmatpush.bf16.msra.mxu0 %v2017
    %3035 = vmatpush.bf16.msra.mxu0 %v2015
    %3036 = vmatpush.bf16.msra.mxu0 %v2013
    %3037 = vmatpush.bf16.msra.mxu0 %v2011
    %3038 = vmatpush.bf16.msra.mxu0 %v2009
    %3039 = vmatpush.bf16.msra.mxu0 %v2007
    %3040 = vmatmul.bf16.gmra.mxu0 %v170
    %v3041 = vpop.f32.mrf.mxu0
    %v3042 = vadd.f32 %v3029, %v3041
    %v3043 = vpop.f32.mrf.mxu0
    %3044 = vdwg.mxu0
    %3045 = vmatpush.bf16.msra.mxu0 %v2037
    %3046 = vmatpush.bf16.msra.mxu0 %v2035
    %3047 = vmatpush.bf16.msra.mxu0 %v2033
    %3048 = vmatpush.bf16.msra.mxu0 %v2031
    %3049 = vmatpush.bf16.msra.mxu0 %v2029
    %3050 = vmatpush.bf16.msra.mxu0 %v2027
    %3051 = vmatpush.bf16.msra.mxu0 %v2025
    %3052 = vmatpush.bf16.msra.mxu0 %v2023
    %3053 = vmatmul.bf16.gmra.mxu0 %v171
    %v3054 = vpop.f32.mrf.mxu0
    %v3055 = vadd.f32 %v3042, %v3054
    %v3056 = vpop.f32.mrf.mxu0
    %3057 = vdwg.mxu0
    %3058 = vmatpush.bf16.msra.mxu0 %v2053
    %3059 = vmatpush.bf16.msra.mxu0 %v2051
    %3060 = vmatpush.bf16.msra.mxu0 %v2049
    %3061 = vmatpush.bf16.msra.mxu0 %v2047
    %3062 = vmatpush.bf16.msra.mxu0 %v2045
    %3063 = vmatpush.bf16.msra.mxu0 %v2043
    %3064 = vmatpush.bf16.msra.mxu0 %v2041
    %3065 = vmatpush.bf16.msra.mxu0 %v2039
    %3066 = vmatmul.bf16.gmra.mxu0 %v172
    %v3067 = vpop.f32.mrf.mxu0
    %v3068 = vadd.f32 %v3055, %v3067
    %v3069 = vpop.f32.mrf.mxu0
    %3070 = vdwg.mxu0
    %3071 = vmatpush.bf16.msra.mxu0 %v2069
    %3072 = vmatpush.bf16.msra.mxu0 %v2067
    %3073 = vmatpush.bf16.msra.mxu0 %v2065
    %3074 = vmatpush.bf16.msra.mxu0 %v2063
    %3075 = vmatpush.bf16.msra.mxu0 %v2061
    %3076 = vmatpush.bf16.msra.mxu0 %v2059
    %3077 = vmatpush.bf16.msra.mxu0 %v2057
    %3078 = vmatpush.bf16.msra.mxu0 %v2055
    %3079 = vmatmul.bf16.gmra.mxu0 %v173
    %v3080 = vpop.f32.mrf.mxu0
    %v3081 = vadd.f32 %v3068, %v3080
    %v3082 = vpop.f32.mrf.mxu0
    %3083 = vdwg.mxu0
    %3084 = vmatpush.bf16.msra.mxu0 %v2085
    %3085 = vmatpush.bf16.msra.mxu0 %v2083
    %3086 = vmatpush.bf16.msra.mxu0 %v2081
    %3087 = vmatpush.bf16.msra.mxu0 %v2079
    %3088 = vmatpush.bf16.msra.mxu0 %v2077
    %3089 = vmatpush.bf16.msra.mxu0 %v2075
    %3090 = vmatpush.bf16.msra.mxu0 %v2073
    %3091 = vmatpush.bf16.msra.mxu0 %v2071
    %3092 = vmatmul.bf16.gmra.mxu0 %v174
    %v3093 = vpop.f32.mrf.mxu0
    %v3094 = vadd.f32 %v3081, %v3093
    %v3095 = vpop.f32.mrf.mxu0
    %3096 = vdwg.mxu0
    %3097 = vmatpush.bf16.msra.mxu0 %v2101
    %3098 = vmatpush.bf16.msra.mxu0 %v2099
    %3099 = vmatpush.bf16.msra.mxu0 %v2097
    %3100 = vmatpush.bf16.msra.mxu0 %v2095
    %3101 = vmatpush.bf16.msra.mxu0 %v2093
    %3102 = vmatpush.bf16.msra.mxu0 %v2091
    %3103 = vmatpush.bf16.msra.mxu0 %v2089
    %3104 = vmatpush.bf16.msra.mxu0 %v2087
    %3105 = vmatmul.bf16.gmra.mxu0 %v175
    %v3106 = vpop.f32.mrf.mxu0
    %v3107 = vadd.f32 %v3094, %v3106
    %v3108 = vpop.f32.mrf.mxu0
    %3109 = vdwg.mxu0
    %v3110 = vmax.f32 %v2795, 0.0
    %v3111 = vmax.f32 %v3107, 0.0
    %v3112 = vpack.c.bf16 %v3110, %v3110
    %v3113 = vpack.c.bf16 %v3111, %v3111
    %v3114 = vld [vmem:[#allocation8] sm:$0xff]
    %v3115 = vld [vmem:[#allocation8 + $0x8] sm:$0xff]
    %v3116 = vld [vmem:[#allocation8 + $0x10] sm:$0xff]
    %v3117 = vld [vmem:[#allocation8 + $0x18] sm:$0xff]
    %v3118 = vld [vmem:[#allocation8 + $0x20] sm:$0xff]
    %v3119 = vld [vmem:[#allocation8 + $0x28] sm:$0xff]
    %v3120 = vld [vmem:[#allocation8 + $0x30] sm:$0xff]
    %v3121 = vld [vmem:[#allocation8 + $0x38] sm:$0xff]
    %v3122 = vld [vmem:[#allocation8 + $0x40] sm:$0xff]
    %v3123 = vld [vmem:[#allocation8 + $0x48] sm:$0xff]
    %v3124 = vld [vmem:[#allocation8 + $0x50] sm:$0xff]
    %v3125 = vld [vmem:[#allocation8 + $0x58] sm:$0xff]
    %v3126 = vld [vmem:[#allocation8 + $0x60] sm:$0xff]
    %v3127 = vld [vmem:[#allocation8 + $0x68] sm:$0xff]
    %v3128 = vld [vmem:[#allocation8 + $0x70] sm:$0xff]
    %v3129 = vld [vmem:[#allocation8 + $0x78] sm:$0xff]
    %v3130 = vld [vmem:[#allocation8 + $0x80] sm:$0xff]
    %v3131 = vld [vmem:[#allocation8 + $0x88] sm:$0xff]
    %v3132 = vld [vmem:[#allocation8 + $0x90] sm:$0xff]
    %v3133 = vld [vmem:[#allocation8 + $0x98] sm:$0xff]
    %v3134 = vld [vmem:[#allocation8 + $0xa0] sm:$0xff]
    %v3135 = vld [vmem:[#allocation8 + $0xa8] sm:$0xff]
    %v3136 = vld [vmem:[#allocation8 + $0xb0] sm:$0xff]
    %v3137 = vld [vmem:[#allocation8 + $0xb8] sm:$0xff]
    %v3138 = vld [vmem:[#allocation8 + $0xc0] sm:$0xff]
    %v3139 = vld [vmem:[#allocation8 + $0xc8] sm:$0xff]
    %v3140 = vld [vmem:[#allocation8 + $0xd0] sm:$0xff]
    %v3141 = vld [vmem:[#allocation8 + $0xd8] sm:$0xff]
    %v3142 = vld [vmem:[#allocation8 + $0xe0] sm:$0xff]
    %v3143 = vld [vmem:[#allocation8 + $0xe8] sm:$0xff]
    %v3144 = vld [vmem:[#allocation8 + $0xf0] sm:$0xff]
    %v3145 = vld [vmem:[#allocation8 + $0xf8] sm:$0xff]
    %v3146 = vld [vmem:[#allocation10] sm:$0x3]
    %v3148 = vperm.slane %v3146, 0
    %v3149 = vperm.slane %v3146, 1
    %v3184 = vunpack.c.l.b16 %v3114
    %v3185 = vunpack.c.h.b16 %v3114
    %v3186 = vunpack.c.l.b16 %v3115
    %v3187 = vunpack.c.h.b16 %v3115
    %v3188 = vunpack.c.l.b16 %v3116
    %v3189 = vunpack.c.h.b16 %v3116
    %v3190 = vunpack.c.l.b16 %v3117
    %v3191 = vunpack.c.h.b16 %v3117
    %v3192 = vunpack.c.l.b16 %v3118
    %v3193 = vunpack.c.h.b16 %v3118
    %v3194 = vunpack.c.l.b16 %v3119
    %v3195 = vunpack.c.h.b16 %v3119
    %v3196 = vunpack.c.l.b16 %v3120
    %v3197 = vunpack.c.h.b16 %v3120
    %v3198 = vunpack.c.l.b16 %v3121
    %v3199 = vunpack.c.h.b16 %v3121
    %v3200 = vunpack.c.l.b16 %v3122
    %v3201 = vunpack.c.h.b16 %v3122
    %v3202 = vunpack.c.l.b16 %v3123
    %v3203 = vunpack.c.h.b16 %v3123
    %v3204 = vunpack.c.l.b16 %v3124
    %v3205 = vunpack.c.h.b16 %v3124
    %v3206 = vunpack.c.l.b16 %v3125
    %v3207 = vunpack.c.h.b16 %v3125
    %v3208 = vunpack.c.l.b16 %v3126
    %v3209 = vunpack.c.h.b16 %v3126
    %v3210 = vunpack.c.l.b16 %v3127
    %v3211 = vunpack.c.h.b16 %v3127
    %v3212 = vunpack.c.l.b16 %v3128
    %v3213 = vunpack.c.h.b16 %v3128
    %v3214 = vunpack.c.l.b16 %v3129
    %v3215 = vunpack.c.h.b16 %v3129
    %v3216 = vunpack.c.l.b16 %v3130
    %v3217 = vunpack.c.h.b16 %v3130
    %v3218 = vunpack.c.l.b16 %v3131
    %v3219 = vunpack.c.h.b16 %v3131
    %v3220 = vunpack.c.l.b16 %v3132
    %v3221 = vunpack.c.h.b16 %v3132
    %v3222 = vunpack.c.l.b16 %v3133
    %v3223 = vunpack.c.h.b16 %v3133
    %v3224 = vunpack.c.l.b16 %v3134
    %v3225 = vunpack.c.h.b16 %v3134
    %v3226 = vunpack.c.l.b16 %v3135
    %v3227 = vunpack.c.h.b16 %v3135
    %v3228 = vunpack.c.l.b16 %v3136
    %v3229 = vunpack.c.h.b16 %v3136
    %v3230 = vunpack.c.l.b16 %v3137
    %v3231 = vunpack.c.h.b16 %v3137
    %v3232 = vunpack.c.l.b16 %v3138
    %v3233 = vunpack.c.h.b16 %v3138
    %v3234 = vunpack.c.l.b16 %v3139
    %v3235 = vunpack.c.h.b16 %v3139
    %v3236 = vunpack.c.l.b16 %v3140
    %v3237 = vunpack.c.h.b16 %v3140
    %v3238 = vunpack.c.l.b16 %v3141
    %v3239 = vunpack.c.h.b16 %v3141
    %v3240 = vunpack.c.l.b16 %v3142
    %v3241 = vunpack.c.h.b16 %v3142
    %v3242 = vunpack.c.l.b16 %v3143
    %v3243 = vunpack.c.h.b16 %v3143
    %v3244 = vunpack.c.l.b16 %v3144
    %v3245 = vunpack.c.h.b16 %v3144
    %v3246 = vunpack.c.l.b16 %v3145
    %v3247 = vunpack.c.h.b16 %v3145
    %v3248 = vpack.c.b16 %v3186, %v3184
    %v3249 = vpack.c.b16 %v3187, %v3185
    %v3250 = vpack.c.b16 %v3190, %v3188
    %v3251 = vpack.c.b16 %v3191, %v3189
    %v3252 = vpack.c.b16 %v3194, %v3192
    %v3253 = vpack.c.b16 %v3195, %v3193
    %v3254 = vpack.c.b16 %v3198, %v3196
    %v3255 = vpack.c.b16 %v3199, %v3197
    %v3256 = vpack.c.b16 %v3202, %v3200
    %v3257 = vpack.c.b16 %v3203, %v3201
    %v3258 = vpack.c.b16 %v3206, %v3204
    %v3259 = vpack.c.b16 %v3207, %v3205
    %v3260 = vpack.c.b16 %v3210, %v3208
    %v3261 = vpack.c.b16 %v3211, %v3209
    %v3262 = vpack.c.b16 %v3214, %v3212
    %v3263 = vpack.c.b16 %v3215, %v3213
    %v3264 = vpack.c.b16 %v3218, %v3216
    %v3265 = vpack.c.b16 %v3219, %v3217
    %v3266 = vpack.c.b16 %v3222, %v3220
    %v3267 = vpack.c.b16 %v3223, %v3221
    %v3268 = vpack.c.b16 %v3226, %v3224
    %v3269 = vpack.c.b16 %v3227, %v3225
    %v3270 = vpack.c.b16 %v3230, %v3228
    %v3271 = vpack.c.b16 %v3231, %v3229
    %v3272 = vpack.c.b16 %v3234, %v3232
    %v3273 = vpack.c.b16 %v3235, %v3233
    %v3274 = vpack.c.b16 %v3238, %v3236
    %v3275 = vpack.c.b16 %v3239, %v3237
    %v3276 = vpack.c.b16 %v3242, %v3240
    %v3277 = vpack.c.b16 %v3243, %v3241
    %v3278 = vpack.c.b16 %v3246, %v3244
    %v3279 = vpack.c.b16 %v3247, %v3245
    %3312 = vmatpush.bf16.msra.mxu0 %v3262
    %3313 = vmatpush.bf16.msra.mxu0 %v3260
    %3314 = vmatpush.bf16.msra.mxu0 %v3258
    %3315 = vmatpush.bf16.msra.mxu0 %v3256
    %3316 = vmatpush.bf16.msra.mxu0 %v3254
    %3317 = vmatpush.bf16.msra.mxu0 %v3252
    %3318 = vmatpush.bf16.msra.mxu0 %v3250
    %3319 = vmatpush.bf16.msra.mxu0 %v3248
    %3320 = vmatmul.bf16.gmra.mxu0 %v3112
    %v3321 = vpop.f32.mrf.mxu0
    %v3322 = vadd.f32 %v3148, %v3321
    %v3323 = vpop.f32.mrf.mxu0
    %3324 = vdwg.mxu0
    %3325 = vmatpush.bf16.msra.mxu0 %v3278
    %3326 = vmatpush.bf16.msra.mxu0 %v3276
    %3327 = vmatpush.bf16.msra.mxu0 %v3274
    %3328 = vmatpush.bf16.msra.mxu0 %v3272
    %3329 = vmatpush.bf16.msra.mxu0 %v3270
    %3330 = vmatpush.bf16.msra.mxu0 %v3268
    %3331 = vmatpush.bf16.msra.mxu0 %v3266
    %3332 = vmatpush.bf16.msra.mxu0 %v3264
    %3333 = vmatmul.bf16.gmra.mxu0 %v3113
    %v3334 = vpop.f32.mrf.mxu0
    %v3335 = vadd.f32 %v3322, %v3334
    %v3336 = vpop.f32.mrf.mxu0
    %3337 = vdwg.mxu0
    %3338 = vmatpush.bf16.msra.mxu0 %v3263
    %3339 = vmatpush.bf16.msra.mxu0 %v3261
    %3340 = vmatpush.bf16.msra.mxu0 %v3259
    %3341 = vmatpush.bf16.msra.mxu0 %v3257
    %3342 = vmatpush.bf16.msra.mxu0 %v3255
    %3343 = vmatpush.bf16.msra.mxu0 %v3253
    %3344 = vmatpush.bf16.msra.mxu0 %v3251
    %3345 = vmatpush.bf16.msra.mxu0 %v3249
    %3346 = vmatmul.bf16.gmra.mxu0 %v3112
    %v3347 = vpop.f32.mrf.mxu0
    %v3348 = vadd.f32 %v3149, %v3347
    %v3349 = vpop.f32.mrf.mxu0
    %3350 = vdwg.mxu0
    %3351 = vmatpush.bf16.msra.mxu0 %v3279
    %3352 = vmatpush.bf16.msra.mxu0 %v3277
    %3353 = vmatpush.bf16.msra.mxu0 %v3275
    %3354 = vmatpush.bf16.msra.mxu0 %v3273
    %3355 = vmatpush.bf16.msra.mxu0 %v3271
    %3356 = vmatpush.bf16.msra.mxu0 %v3269
    %3357 = vmatpush.bf16.msra.mxu0 %v3267
    %3358 = vmatpush.bf16.msra.mxu0 %v3265
    %3359 = vmatmul.bf16.gmra.mxu0 %v3113
    %v3360 = vpop.f32.mrf.mxu0
    %v3361 = vadd.f32 %v3348, %v3360
    %v3362 = vpop.f32.mrf.mxu0
    %3363 = vdwg.mxu0
    %v3364 = vmax.f32 %v3335, 0.0
    %v3365 = vmax.f32 %v3361, 0.0
    %v3366 = vpack.c.bf16 %v3364, %v3364
    %v3367 = vpack.c.bf16 %v3365, %v3365
    %v3368 = vld [vmem:[#allocation11] sm:$0xf]
    %v3369 = vld [vmem:[#allocation11 + $0x4] sm:$0xf]
    %v3370 = vld [vmem:[#allocation11 + $0x8] sm:$0xf]
    %v3371 = vld [vmem:[#allocation11 + $0xc] sm:$0xf]
    %v3372 = vld [vmem:[#allocation11 + $0x10] sm:$0xf]
    %v3373 = vld [vmem:[#allocation11 + $0x14] sm:$0xf]
    %v3374 = vld [vmem:[#allocation11 + $0x18] sm:$0xf]
    %v3375 = vld [vmem:[#allocation11 + $0x1c] sm:$0xf]
    %v3376 = vld [vmem:[#allocation11 + $0x20] sm:$0xf]
    %v3377 = vld [vmem:[#allocation11 + $0x24] sm:$0xf]
    %v3378 = vld [vmem:[#allocation11 + $0x28] sm:$0xf]
    %v3379 = vld [vmem:[#allocation11 + $0x2c] sm:$0xf]
    %v3380 = vld [vmem:[#allocation11 + $0x30] sm:$0xf]
    %v3381 = vld [vmem:[#allocation11 + $0x34] sm:$0xf]
    %v3382 = vld [vmem:[#allocation11 + $0x38] sm:$0xf]
    %v3383 = vld [vmem:[#allocation11 + $0x3c] sm:$0xf]
    %v3384 = vld [vmem:[#allocation11 + $0x40] sm:$0xf]
    %v3385 = vld [vmem:[#allocation11 + $0x44] sm:$0xf]
    %v3386 = vld [vmem:[#allocation11 + $0x48] sm:$0xf]
    %v3387 = vld [vmem:[#allocation11 + $0x4c] sm:$0xf]
    %v3388 = vld [vmem:[#allocation11 + $0x50] sm:$0xf]
    %v3389 = vld [vmem:[#allocation11 + $0x54] sm:$0xf]
    %v3390 = vld [vmem:[#allocation11 + $0x58] sm:$0xf]
    %v3391 = vld [vmem:[#allocation11 + $0x5c] sm:$0xf]
    %v3392 = vld [vmem:[#allocation11 + $0x60] sm:$0xf]
    %v3393 = vld [vmem:[#allocation11 + $0x64] sm:$0xf]
    %v3394 = vld [vmem:[#allocation11 + $0x68] sm:$0xf]
    %v3395 = vld [vmem:[#allocation11 + $0x6c] sm:$0xf]
    %v3396 = vld [vmem:[#allocation11 + $0x70] sm:$0xf]
    %v3397 = vld [vmem:[#allocation11 + $0x74] sm:$0xf]
    %v3398 = vld [vmem:[#allocation11 + $0x78] sm:$0xf]
    %v3399 = vld [vmem:[#allocation11 + $0x7c] sm:$0xf]
    %v3400 = vld [vmem:[#allocation13] sm:$0x1]
    %v3402 = vperm.slane %v3400, 0
    %v3436 = vunpack.c.l.b16 %v3368
    %v3437 = vunpack.c.l.b16 %v3369
    %v3438 = vunpack.c.l.b16 %v3370
    %v3439 = vunpack.c.l.b16 %v3371
    %v3440 = vunpack.c.l.b16 %v3372
    %v3441 = vunpack.c.l.b16 %v3373
    %v3442 = vunpack.c.l.b16 %v3374
    %v3443 = vunpack.c.l.b16 %v3375
    %v3444 = vunpack.c.l.b16 %v3376
    %v3445 = vunpack.c.l.b16 %v3377
    %v3446 = vunpack.c.l.b16 %v3378
    %v3447 = vunpack.c.l.b16 %v3379
    %v3448 = vunpack.c.l.b16 %v3380
    %v3449 = vunpack.c.l.b16 %v3381
    %v3450 = vunpack.c.l.b16 %v3382
    %v3451 = vunpack.c.l.b16 %v3383
    %v3452 = vunpack.c.l.b16 %v3384
    %v3453 = vunpack.c.l.b16 %v3385
    %v3454 = vunpack.c.l.b16 %v3386
    %v3455 = vunpack.c.l.b16 %v3387
    %v3456 = vunpack.c.l.b16 %v3388
    %v3457 = vunpack.c.l.b16 %v3389
    %v3458 = vunpack.c.l.b16 %v3390
    %v3459 = vunpack.c.l.b16 %v3391
    %v3460 = vunpack.c.l.b16 %v3392
    %v3461 = vunpack.c.l.b16 %v3393
    %v3462 = vunpack.c.l.b16 %v3394
    %v3463 = vunpack.c.l.b16 %v3395
    %v3464 = vunpack.c.l.b16 %v3396
    %v3465 = vunpack.c.l.b16 %v3397
    %v3466 = vunpack.c.l.b16 %v3398
    %v3467 = vunpack.c.l.b16 %v3399
    %v3468 = vpack.c.b16 %v3437, %v3436
    %v3469 = vpack.c.b16 %v3439, %v3438
    %v3470 = vpack.c.b16 %v3441, %v3440
    %v3471 = vpack.c.b16 %v3443, %v3442
    %v3472 = vpack.c.b16 %v3445, %v3444
    %v3473 = vpack.c.b16 %v3447, %v3446
    %v3474 = vpack.c.b16 %v3449, %v3448
    %v3475 = vpack.c.b16 %v3451, %v3450
    %v3476 = vpack.c.b16 %v3453, %v3452
    %v3477 = vpack.c.b16 %v3455, %v3454
    %v3478 = vpack.c.b16 %v3457, %v3456
    %v3479 = vpack.c.b16 %v3459, %v3458
    %v3480 = vpack.c.b16 %v3461, %v3460
    %v3481 = vpack.c.b16 %v3463, %v3462
    %v3482 = vpack.c.b16 %v3465, %v3464
    %v3483 = vpack.c.b16 %v3467, %v3466
    %3500 = vmatpush.bf16.msra.mxu0 %v3475
    %3501 = vmatpush.bf16.msra.mxu0 %v3474
    %3502 = vmatpush.bf16.msra.mxu0 %v3473
    %3503 = vmatpush.bf16.msra.mxu0 %v3472
    %3504 = vmatpush.bf16.msra.mxu0 %v3471
    %3505 = vmatpush.bf16.msra.mxu0 %v3470
    %3506 = vmatpush.bf16.msra.mxu0 %v3469
    %3507 = vmatpush.bf16.msra.mxu0 %v3468
    %3508 = vmatmul.bf16.gmra.mxu0 %v3366
    %v3509 = vpop.f32.mrf.mxu0
    %v3510 = vadd.f32 %v3402, %v3509
    %v3511 = vpop.f32.mrf.mxu0
    %3512 = vdwg.mxu0
    %3513 = vmatpush.bf16.msra.mxu0 %v3483
    %3514 = vmatpush.bf16.msra.mxu0 %v3482
    %3515 = vmatpush.bf16.msra.mxu0 %v3481
    %3516 = vmatpush.bf16.msra.mxu0 %v3480
    %3517 = vmatpush.bf16.msra.mxu0 %v3479
    %3518 = vmatpush.bf16.msra.mxu0 %v3478
    %3519 = vmatpush.bf16.msra.mxu0 %v3477
    %3520 = vmatpush.bf16.msra.mxu0 %v3476
    %3521 = vmatmul.bf16.gmra.mxu0 %v3367
    %v3522 = vpop.f32.mrf.mxu0
    %v3523 = vadd.f32 %v3510, %v3522
    %v3524 = vpop.f32.mrf.mxu0
    %3525 = vdwg.mxu0
    %3526 = vmax.xlane.f32.xlu0 %v3523
    %v3527 = vpop.xlane.xlu0 %3526
    %v3528 = vsub.f32 %v3523, %v3527
    %v3529 = vmul.f32 %v3528, 1.442695
    %v3530 = vpow.pop %v3529
    %3531 = vadd.xlane.f32.xlu0 %v3530
    %v3532 = vpop.xlane.xlu0 %3531
    %v3533 = vlog2.pop %v3532
    %v3534 = vmul.f32 %v3533, 0.6931472
    %v3535 = vsub.f32 %v3528, %v3534
    %3536 = vst [vmem:[#allocation14] sm:$0xff] %v3535
    // Predicated region
    $region58: #{tpu_custom_call.1} parent=1 // pred_check
      _
    $region59: #{tpu_custom_call.1} parent=1 // pred_check_branch
      %3538 = sbr.rel (0) target = $region61
    $region60: #{tpu_custom_call.1} parent=1 // pred_region
      %3540 = vsyncadd [#allocation4], 0
      %s3542 = sshll.u32 [#allocation14], 4
      %s3543 = int_to_ptr.vmem [resolvable:$true] %s3542
      %s3544 = sshll.u32 %s7, 4
      %s3545 = int_to_ptr.hbm [resolvable:$true] %s3544
      %3547 = dma.vmem_to_hbm [thread:$0]  %s3543, 128, %s3545, [#allocation4]
    $region61: #{tpu_custom_call.1} parent=1 // pred_fallthru
      _
    // Predicated region
    $region62: #{tpu_custom_call.1} parent=1 // pred_check
      _
    $region63: #{tpu_custom_call.1} parent=1 // pred_check_branch
      %3549 = sbr.rel (0) target = $region65
    $region64: #{tpu_custom_call.1} parent=1 // pred_region
      %3551 = dma.done [#allocation4], 128
    $region65: #{tpu_custom_call.1} parent=1 // pred_fallthru
      _
    %3552 = vsyncpa [#allocation3], 1
    %3553 = vsyncpa [#allocation6], 1
    %3554 = vsyncpa [#allocation9], 1
    %3555 = vsyncpa [#allocation12], 1
    %3556 = vsyncpa [#allocation4], 1

// kernel: tpu_custom_call.1
$region0: #{tpu_custom_call.1}
  #allocation0 [shape = 'u32[]', space=smem, size = 0x4, offset = 0x4, fixed_abs, tag = 'smem constant byte address 0x4 - core index']
  #allocation1 [shape = 'u32[72,128]{1,0:T(1,128)}', space=vmem, size = 0x9000, scoped, tag = 'internal scratch']
  %s0 = inlined_call_operand.hbm [shape: f32[8,3072], index: 0, kind: input, shape index: {}]
  %s1 = inlined_call_operand.hbm [shape: bf16[3072,256], index: 1, kind: input, shape index: {}]
  %s2 = inlined_call_operand.hbm [shape: f32[1,256], index: 2, kind: input, shape index: {}]
  %s3 = inlined_call_operand.hbm [shape: bf16[256,256], index: 3, kind: input, shape index: {}]
  %s4 = inlined_call_operand.hbm [shape: f32[1,256], index: 4, kind: input, shape index: {}]
  %s5 = inlined_call_operand.hbm [shape: bf16[256,128], index: 5, kind: input, shape index: {}]
  %s6 = inlined_call_operand.hbm [shape: f32[1,128], index: 6, kind: input, shape index: {}]
  %s7 = inlined_call_operand.hbm [shape: f32[8,128], index: 7, kind: output, shape index: {}]
  %s8 = sld [smem:[#allocation0]]
  $region66: #{tpu_custom_call.1} parent=0
    _
  %s10 = ssub.s32 1, %s8
  %s11 = scalar_select 0, %s10, %s8
  $region1: #{tpu_custom_call.1} parent=0
    #allocation2 [shape = 'u8[98304]{0}', space=vmem, size = 0x18000, scoped, tag = 'input window, operand 0, single buffered']
    #allocation3 [shape = 's32[1]{0}', space=sflag, size = 0x4, scoped, tag = 'scoped memory for tpu_custom_call.1']
    #allocation4 [shape = 's32[1]{0}', space=sflag, size = 0x4, scoped, tag = 'scoped memory for tpu_custom_call.1']
    #allocation5 [shape = 'u8[1572864]{0}', space=vmem, size = 0x180000, scoped, tag = 'input window, operand 1, single buffered']
    #allocation6 [shape = 's32[1]{0}', space=sflag, size = 0x4, scoped, tag = 'scoped memory for tpu_custom_call.1']
    #allocation7 [shape = 'u8[1024]{0}', space=vmem, size = 0x400, scoped, tag = 'input window, operand 2, single buffered']
    #allocation8 [shape = 'u8[131072]{0}', space=vmem, size = 0x20000, scoped, tag = 'input window, operand 3, single buffered']
    #allocation9 [shape = 's32[1]{0}', space=sflag, size = 0x4, scoped, tag = 'scoped memory for tpu_custom_call.1']
    #allocation10 [shape = 'u8[1024]{0}', space=vmem, size = 0x400, scoped, tag = 'input window, operand 4, single buffered']
    #allocation11 [shape = 'u8[65536]{0}', space=vmem, size = 0x10000, scoped, tag = 'input window, operand 5, single buffered']
    #allocation12 [shape = 's32[1]{0}', space=sflag, size = 0x4, scoped, tag = 'scoped memory for tpu_custom_call.1']
    #allocation13 [shape = 'u8[512]{0}', space=vmem, size = 0x400, scoped, tag = 'input window, operand 6, single buffered']
    #allocation14 [shape = 'u8[4096]{0}', space=vmem, size = 0x1000, scoped, tag = 'output window, operand 0, single buffered']
    %12 = vsyncpa [#allocation3], 0
    %13 = vsyncpa [#allocation6], 0
    %14 = vsyncpa [#allocation9], 0
    %15 = vsyncpa [#allocation12], 0
    %16 = vsyncpa [#allocation4], 0
    // Predicated region
    $region2: #{tpu_custom_call.1} parent=1 // pred_check
      _
    $region3: #{tpu_custom_call.1} parent=1 // pred_check_branch
      %18 = sbr.rel (0) target = $region5
    $region4: #{tpu_custom_call.1} parent=1 // pred_region
      %20 = vsyncadd [#allocation3], 0
      %s22 = sshll.u32 %s0, 4
      %s23 = int_to_ptr.hbm [resolvable:$true] %s22
      %s24 = sshll.u32 [#allocation2], 4
      %s25 = int_to_ptr.vmem [resolvable:$true] %s24
      %27 = dma.hbm_to_vmem [thread:$0]  %s23, 3072, %s25, [#allocation3]
    $region5: #{tpu_custom_call.1} parent=1 // pred_fallthru
      _
    // Predicated region
    $region6: #{tpu_custom_call.1} parent=1 // pred_check
      _
    $region7: #{tpu_custom_call.1} parent=1 // pred_check_branch
      %29 = sbr.rel (0) target = $region9
    $region8: #{tpu_custom_call.1} parent=1 // pred_region
      %31 = vsyncadd [#allocation6], 0
      %s32 = sshll.u32 %s1, 4
      %s33 = int_to_ptr.hbm [resolvable:$true] %s32
      %s34 = sshll.u32 [#allocation5], 4
      %s35 = int_to_ptr.vmem [resolvable:$true] %s34
      %40 = dma.hbm_to_vmem [thread:$0]  %s33, 49152, %s35, [#allocation6], 128, 128, 8
    $region9: #{tpu_custom_call.1} parent=1 // pred_fallthru
      _
    // Predicated region
    $region10: #{tpu_custom_call.1} parent=1 // pred_check
      _
    $region11: #{tpu_custom_call.1} parent=1 // pred_check_branch
      %42 = sbr.rel (0) target = $region13
    $region12: #{tpu_custom_call.1} parent=1 // pred_region
      %44 = vsyncadd [#allocation6], 0
      %s46 = sshll.u32 %s2, 4
      %s47 = int_to_ptr.hbm [resolvable:$true] %s46
      %s48 = sshll.u32 [#allocation7], 4
      %s49 = int_to_ptr.vmem [resolvable:$true] %s48
      %51 = dma.hbm_to_vmem [thread:$0]  %s47, 32, %s49, [#allocation6]
    $region13: #{tpu_custom_call.1} parent=1 // pred_fallthru
      _
    // Predicated region
    $region14: #{tpu_custom_call.1} parent=1 // pred_check
      _
    $region15: #{tpu_custom_call.1} parent=1 // pred_check_branch
      %53 = sbr.rel (0) target = $region17
    $region16: #{tpu_custom_call.1} parent=1 // pred_region
      %55 = vsyncadd [#allocation9], 0
      %s56 = sshll.u32 %s3, 4
      %s57 = int_to_ptr.hbm [resolvable:$true] %s56
      %s58 = sshll.u32 [#allocation8], 4
      %s59 = int_to_ptr.vmem [resolvable:$true] %s58
      %64 = dma.hbm_to_vmem [thread:$0]  %s57, 4096, %s59, [#allocation9], 128, 128, 8
    $region17: #{tpu_custom_call.1} parent=1 // pred_fallthru
      _
    // Predicated region
    $region18: #{tpu_custom_call.1} parent=1 // pred_check
      _
    $region19: #{tpu_custom_call.1} parent=1 // pred_check_branch
      %66 = sbr.rel (0) target = $region21
    $region20: #{tpu_custom_call.1} parent=1 // pred_region
      %68 = vsyncadd [#allocation9], 0
      %s70 = sshll.u32 %s4, 4
      %s71 = int_to_ptr.hbm [resolvable:$true] %s70
      %s72 = sshll.u32 [#allocation10], 4
      %s73 = int_to_ptr.vmem [resolvable:$true] %s72
      %75 = dma.hbm_to_vmem [thread:$0]  %s71, 32, %s73, [#allocation9]
    $region21: #{tpu_custom_call.1} parent=1 // pred_fallthru
      _
    // Predicated region
    $region22: #{tpu_custom_call.1} parent=1 // pred_check
      _
    $region23: #{tpu_custom_call.1} parent=1 // pred_check_branch
      %77 = sbr.rel (0) target = $region25
    $region24: #{tpu_custom_call.1} parent=1 // pred_region
      %79 = vsyncadd [#allocation12], 0
      %s80 = sshll.u32 %s5, 4
      %s81 = int_to_ptr.hbm [resolvable:$true] %s80
      %s82 = sshll.u32 [#allocation11], 4
      %s83 = int_to_ptr.vmem [resolvable:$true] %s82
      %88 = dma.hbm_to_vmem [thread:$0]  %s81, 2048, %s83, [#allocation12], 64, 64, 4
    $region25: #{tpu_custom_call.1} parent=1 // pred_fallthru
      _
    // Predicated region
    $region26: #{tpu_custom_call.1} parent=1 // pred_check
      _
    $region27: #{tpu_custom_call.1} parent=1 // pred_check_branch
      %90 = sbr.rel (0) target = $region29
    $region28: #{tpu_custom_call.1} parent=1 // pred_region
      %92 = vsyncadd [#allocation12], 0
      %s94 = sshll.u32 %s6, 4
      %s95 = int_to_ptr.hbm [resolvable:$true] %s94
      %s96 = sshll.u32 [#allocation13], 4
      %s97 = int_to_ptr.vmem [resolvable:$true] %s96
      %99 = dma.hbm_to_vmem [thread:$0]  %s95, 16, %s97, [#allocation12]
    $region29: #{tpu_custom_call.1} parent=1 // pred_fallthru
      _
    // Predicated region
    $region30: #{tpu_custom_call.1} parent=1 // pred_check
      _
    $region31: #{tpu_custom_call.1} parent=1 // pred_check_branch
      %101 = sbr.rel (0) target = $region33
    $region32: #{tpu_custom_call.1} parent=1 // pred_region
      %103 = dma.done [#allocation3], 3072
    $region33: #{tpu_custom_call.1} parent=1 // pred_fallthru
      _
    // Predicated region
    $region34: #{tpu_custom_call.1} parent=1 // pred_check
      _
    $region35: #{tpu_custom_call.1} parent=1 // pred_check_branch
      %105 = sbr.rel (0) target = $region37
    $region36: #{tpu_custom_call.1} parent=1 // pred_region
      %107 = dma.done [#allocation6], 49152
    $region37: #{tpu_custom_call.1} parent=1 // pred_fallthru
      _
    // Predicated region
    $region38: #{tpu_custom_call.1} parent=1 // pred_check
      _
    $region39: #{tpu_custom_call.1} parent=1 // pred_check_branch
      %109 = sbr.rel (0) target = $region41
    $region40: #{tpu_custom_call.1} parent=1 // pred_region
      %111 = dma.done [#allocation6], 32
    $region41: #{tpu_custom_call.1} parent=1 // pred_fallthru
      _
    // Predicated region
    $region42: #{tpu_custom_call.1} parent=1 // pred_check
      _
    $region43: #{tpu_custom_call.1} parent=1 // pred_check_branch
      %113 = sbr.rel (0) target = $region45
    $region44: #{tpu_custom_call.1} parent=1 // pred_region
      %115 = dma.done [#allocation9], 4096
    $region45: #{tpu_custom_call.1} parent=1 // pred_fallthru
      _
    // Predicated region
    $region46: #{tpu_custom_call.1} parent=1 // pred_check
      _
    $region47: #{tpu_custom_call.1} parent=1 // pred_check_branch
      %117 = sbr.rel (0) target = $region49
    $region48: #{tpu_custom_call.1} parent=1 // pred_region
      %119 = dma.done [#allocation9], 32
    $region49: #{tpu_custom_call.1} parent=1 // pred_fallthru
      _
    // Predicated region
    $region50: #{tpu_custom_call.1} parent=1 // pred_check
      _
    $region51: #{tpu_custom_call.1} parent=1 // pred_check_branch
      %121 = sbr.rel (0) target = $region53
    $region52: #{tpu_custom_call.1} parent=1 // pred_region
      %123 = dma.done [#allocation12], 2048
    $region53: #{tpu_custom_call.1} parent=1 // pred_fallthru
      _
    // Predicated region
    $region54: #{tpu_custom_call.1} parent=1 // pred_check
      _
    $region55: #{tpu_custom_call.1} parent=1 // pred_check_branch
      %125 = sbr.rel (0) target = $region57
    $region56: #{tpu_custom_call.1} parent=1 // pred_region
      %127 = dma.done [#allocation12], 16
    $region57: #{tpu_custom_call.1} parent=1 // pred_fallthru
      _
    %v128 = vld [vmem:[#allocation2] sm:$0xff]
    %v129 = vld [vmem:[#allocation2 + $0x8] sm:$0xff]
    %v130 = vld [vmem:[#allocation2 + $0x10] sm:$0xff]
    %v131 = vld [vmem:[#allocation2 + $0x18] sm:$0xff]
    %v132 = vld [vmem:[#allocation2 + $0x20] sm:$0xff]
    %v133 = vld [vmem:[#allocation2 + $0x28] sm:$0xff]
    %v134 = vld [vmem:[#allocation2 + $0x30] sm:$0xff]
    %v135 = vld [vmem:[#allocation2 + $0x38] sm:$0xff]
    %v136 = vld [vmem:[#allocation2 + $0x40] sm:$0xff]
    %v137 = vld [vmem:[#allocation2 + $0x48] sm:$0xff]
    %v138 = vld [vmem:[#allocation2 + $0x50] sm:$0xff]
    %v139 = vld [vmem:[#allocation2 + $0x58] sm:$0xff]
    %v140 = vld [vmem:[#allocation2 + $0x60] sm:$0xff]
    %v141 = vld [vmem:[#allocation2 + $0x68] sm:$0xff]
    %v142 = vld [vmem:[#allocation2 + $0x70] sm:$0xff]
    %v143 = vld [vmem:[#allocation2 + $0x78] sm:$0xff]
    %v144 = vld [vmem:[#allocation2 + $0x80] sm:$0xff]
    %v145 = vld [vmem:[#allocation2 + $0x88] sm:$0xff]
    %v146 = vld [vmem:[#allocation2 + $0x90] sm:$0xff]
    %v147 = vld [vmem:[#allocation2 + $0x98] sm:$0xff]
    %v148 = vld [vmem:[#allocation2 + $0xa0] sm:$0xff]
    %v149 = vld [vmem:[#allocation2 + $0xa8] sm:$0xff]
    %v150 = vld [vmem:[#allocation2 + $0xb0] sm:$0xff]
    %v151 = vld [vmem:[#allocation2 + $0xb8] sm:$0xff]
    %v152 = vpack.c.bf16 %v128, %v128
    %v153 = vpack.c.bf16 %v129, %v129
    %v154 = vpack.c.bf16 %v130, %v130
    %v155 = vpack.c.bf16 %v131, %v131
    %v156 = vpack.c.bf16 %v132, %v132
    %v157 = vpack.c.bf16 %v133, %v133
    %v158 = vpack.c.bf16 %v134, %v134
    %v159 = vpack.c.bf16 %v135, %v135
    %v160 = vpack.c.bf16 %v136, %v136
    %v161 = vpack.c.bf16 %v137, %v137
    %v162 = vpack.c.bf16 %v138, %v138
    %v163 = vpack.c.bf16 %v139, %v139
    %v164 = vpack.c.bf16 %v140, %v140
    %v165 = vpack.c.bf16 %v141, %v141
    %v166 = vpack.c.bf16 %v142, %v142
    %v167 = vpack.c.bf16 %v143, %v143
    %v168 = vpack.c.bf16 %v144, %v144
    %v169 = vpack.c.bf16 %v145, %v145
    %v170 = vpack.c.bf16 %v146, %v146
    %v171 = vpack.c.bf16 %v147, %v147
    %v172 = vpack.c.bf16 %v148, %v148
    %v173 = vpack.c.bf16 %v149, %v149
    %v174 = vpack.c.bf16 %v150, %v150
    %v175 = vpack.c.bf16 %v151, %v151
    %v176 = vld [vmem:[#allocation5] sm:$0xff]
    %v177 = vld [vmem:[#allocation5 + $0x8] sm:$0xff]
    %v178 = vld [vmem:[#allocation5 + $0x10] sm:$0xff]
    %v179 = vld [vmem:[#allocation5 + $0x18] sm:$0xff]
    %v180 = vld [vmem:[#allocation5 + $0x20] sm:$0xff]
    %v181 = vld [vmem:[#allocation5 + $0x28] sm:$0xff]
    %v182 = vld [vmem:[#allocation5 + $0x30] sm:$0xff]
    %v183 = vld [vmem:[#allocation5 + $0x38] sm:$0xff]
    %v184 = vld [vmem:[#allocation5 + $0x40] sm:$0xff]
    %v185 = vld [vmem:[#allocation5 + $0x48] sm:$0xff]
    %v186 = vld [vmem:[#allocation5 + $0x50] sm:$0xff]
    %v187 = vld [vmem:[#allocation5 + $0x58] sm:$0xff]
    %v188 = vld [vmem:[#allocation5 + $0x60] sm:$0xff]
    %v189 = vld [vmem:[#allocation5 + $0x68] sm:$0xff]
    %v190 = vld [vmem:[#allocation5 + $0x70] sm:$0xff]
    %v191 = vld [vmem:[#allocation5 + $0x78] sm:$0xff]
    %v192 = vld [vmem:[#allocation5 + $0x80] sm:$0xff]
    %v193 = vld [vmem:[#allocation5 + $0x88] sm:$0xff]
    %v194 = vld [vmem:[#allocation5 + $0x90] sm:$0xff]
    %v195 = vld [vmem:[#allocation5 + $0x98] sm:$0xff]
    %v196 = vld [vmem:[#allocation5 + $0xa0] sm:$0xff]
    %v197 = vld [vmem:[#allocation5 + $0xa8] sm:$0xff]
    %v198 = vld [vmem:[#allocation5 + $0xb0] sm:$0xff]
    %v199 = vld [vmem:[#allocation5 + $0xb8] sm:$0xff]
    %v200 = vld [vmem:[#allocation5 + $0xc0] sm:$0xff]
    %v201 = vld [vmem:[#allocation5 + $0xc8] sm:$0xff]
    %v202 = vld [vmem:[#allocation5 + $0xd0] sm:$0xff]
    %v203 = vld [vmem:[#allocation5 + $0xd8] sm:$0xff]
    %v204 = vld [vmem:[#allocation5 + $0xe0] sm:$0xff]
    %v205 = vld [vmem:[#allocation5 + $0xe8] sm:$0xff]
    %v206 = vld [vmem:[#allocation5 + $0xf0] sm:$0xff]
    %v207 = vld [vmem:[#allocation5 + $0xf8] sm:$0xff]
    %v208 = vld [vmem:[#allocation5 + $0x100] sm:$0xff]
    %v209 = vld [vmem:[#allocation5 + $0x108] sm:$0xff]
    %v210 = vld [vmem:[#allocation5 + $0x110] sm:$0xff]
    %v211 = vld [vmem:[#allocation5 + $0x118] sm:$0xff]
    %v212 = vld [vmem:[#allocation5 + $0x120] sm:$0xff]
    %v213 = vld [vmem:[#allocation5 + $0x128] sm:$0xff]
    %v214 = vld [vmem:[#allocation5 + $0x130] sm:$0xff]
    %v215 = vld [vmem:[#allocation5 + $0x138] sm:$0xff]
    %v216 = vld [vmem:[#allocation5 + $0x140] sm:$0xff]
    %v217 = vld [vmem:[#allocation5 + $0x148] sm:$0xff]
    %v218 = vld [vmem:[#allocation5 + $0x150] sm:$0xff]
    %v219 = vld [vmem:[#allocation5 + $0x158] sm:$0xff]
    %v220 = vld [vmem:[#allocation5 + $0x160] sm:$0xff]
    %v221 = vld [vmem:[#allocation5 + $0x168] sm:$0xff]
    %v222 = vld [vmem:[#allocation5 + $0x170] sm:$0xff]
    %v223 = vld [vmem:[#allocation5 + $0x178] sm:$0xff]
    %v224 = vld [vmem:[#allocation5 + $0x180] sm:$0xff]
    %v225 = vld [vmem:[#allocation5 + $0x188] sm:$0xff]
    %v226 = vld [vmem:[#allocation5 + $0x190] sm:$0xff]
    %v227 = vld [vmem:[#allocation5 + $0x198] sm:$0xff]
    %v228 = vld [vmem:[#allocation5 + $0x1a0] sm:$0xff]
    %v229 = vld [vmem:[#allocation5 + $0x1a8] sm:$0xff]
    %v230 = vld [vmem:[#allocation5 + $0x1b0] sm:$0xff]
    %v231 = vld [vmem:[#allocation5 + $0x1b8] sm:$0xff]
    %v232 = vld [vmem:[#allocation5 + $0x1c0] sm:$0xff]
    %v233 = vld [vmem:[#allocation5 + $0x1c8] sm:$0xff]
    %v234 = vld [vmem:[#allocation5 + $0x1d0] sm:$0xff]
    %v235 = vld [vmem:[#allocation5 + $0x1d8] sm:$0xff]
    %v236 = vld [vmem:[#allocation5 + $0x1e0] sm:$0xff]
    %v237 = vld [vmem:[#allocation5 + $0x1e8] sm:$0xff]
    %v238 = vld [vmem:[#allocation5 + $0x1f0] sm:$0xff]
    %v239 = vld [vmem:[#allocation5 + $0x1f8] sm:$0xff]
    %v240 = vld [vmem:[#allocation5 + $0x200] sm:$0xff]
    %v241 = vld [vmem:[#allocation5 + $0x208] sm:$0xff]
    %v242 = vld [vmem:[#allocation5 + $0x210] sm:$0xff]
    %v243 = vld [vmem:[#allocation5 + $0x218] sm:$0xff]
    %v244 = vld [vmem:[#allocation5 + $0x220] sm:$0xff]
    %v245 = vld [vmem:[#allocation5 + $0x228] sm:$0xff]
    %v246 = vld [vmem:[#allocation5 + $0x230] sm:$0xff]
    %v247 = vld [vmem:[#allocation5 + $0x238] sm:$0xff]
    %v248 = vld [vmem:[#allocation5 + $0x240] sm:$0xff]
    %v249 = vld [vmem:[#allocation5 + $0x248] sm:$0xff]
    %v250 = vld [vmem:[#allocation5 + $0x250] sm:$0xff]
    %v251 = vld [vmem:[#allocation5 + $0x258] sm:$0xff]
    %v252 = vld [vmem:[#allocation5 + $0x260] sm:$0xff]
    %v253 = vld [vmem:[#allocation5 + $0x268] sm:$0xff]
    %v254 = vld [vmem:[#allocation5 + $0x270] sm:$0xff]
    %v255 = vld [vmem:[#allocation5 + $0x278] sm:$0xff]
    %v256 = vld [vmem:[#allocation5 + $0x280] sm:$0xff]
    %v257 = vld [vmem:[#allocation5 + $0x288] sm:$0xff]
    %v258 = vld [vmem:[#allocation5 + $0x290] sm:$0xff]
    %v259 = vld [vmem:[#allocation5 + $0x298] sm:$0xff]
    %v260 = vld [vmem:[#allocation5 + $0x2a0] sm:$0xff]
    %v261 = vld [vmem:[#allocation5 + $0x2a8] sm:$0xff]
    %v262 = vld [vmem:[#allocation5 + $0x2b0] sm:$0xff]
    %v263 = vld [vmem:[#allocation5 + $0x2b8] sm:$0xff]
    %v264 = vld [vmem:[#allocation5 + $0x2c0] sm:$0xff]
    %v265 = vld [vmem:[#allocation5 + $0x2c8] sm:$0xff]
    %v266 = vld [vmem:[#allocation5 + $0x2d0] sm:$0xff]
    %v267 = vld [vmem:[#allocation5 + $0x2d8] sm:$0xff]
    %v268 = vld [vmem:[#allocation5 + $0x2e0] sm:$0xff]
    %v269 = vld [vmem:[#allocation5 + $0x2e8] sm:$0xff]
    %v270 = vld [vmem:[#allocation5 + $0x2f0] sm:$0xff]
    %v271 = vld [vmem:[#allocation5 + $0x2f8] sm:$0xff]
    %v272 = vld [vmem:[#allocation5 + $0x300] sm:$0xff]
    %v273 = vld [vmem:[#allocation5 + $0x308] sm:$0xff]
    %v274 = vld [vmem:[#allocation5 + $0x310] sm:$0xff]
    %v275 = vld [vmem:[#allocation5 + $0x318] sm:$0xff]
    %v276 = vld [vmem:[#allocation5 + $0x320] sm:$0xff]
    %v277 = vld [vmem:[#allocation5 + $0x328] sm:$0xff]
    %v278 = vld [vmem:[#allocation5 + $0x330] sm:$0xff]
    %v279 = vld [vmem:[#allocation5 + $0x338] sm:$0xff]
    %v280 = vld [vmem:[#allocation5 + $0x340] sm:$0xff]
    %v281 = vld [vmem:[#allocation5 + $0x348] sm:$0xff]
    %v282 = vld [vmem:[#allocation5 + $0x350] sm:$0xff]
    %v283 = vld [vmem:[#allocation5 + $0x358] sm:$0xff]
    %v284 = vld [vmem:[#allocation5 + $0x360] sm:$0xff]
    %v285 = vld [vmem:[#allocation5 + $0x368] sm:$0xff]
    %v286 = vld [vmem:[#allocation5 + $0x370] sm:$0xff]
    %v287 = vld [vmem:[#allocation5 + $0x378] sm:$0xff]
    %v288 = vld [vmem:[#allocation5 + $0x380] sm:$0xff]
    %v289 = vld [vmem:[#allocation5 + $0x388] sm:$0xff]
    %v290 = vld [vmem:[#allocation5 + $0x390] sm:$0xff]
    %v291 = vld [vmem:[#allocation5 + $0x398] sm:$0xff]
    %v292 = vld [vmem:[#allocation5 + $0x3a0] sm:$0xff]
    %v293 = vld [vmem:[#allocation5 + $0x3a8] sm:$0xff]
    %v294 = vld [vmem:[#allocation5 + $0x3b0] sm:$0xff]
    %v295 = vld [vmem:[#allocation5 + $0x3b8] sm:$0xff]
    %v296 = vld [vmem:[#allocation5 + $0x3c0] sm:$0xff]
    %v297 = vld [vmem:[#allocation5 + $0x3c8] sm:$0xff]
    %v298 = vld [vmem:[#allocation5 + $0x3d0] sm:$0xff]
    %v299 = vld [vmem:[#allocation5 + $0x3d8] sm:$0xff]
    %v300 = vld [vmem:[#allocation5 + $0x3e0] sm:$0xff]
    %v301 = vld [vmem:[#allocation5 + $0x3e8] sm:$0xff]
    %v302 = vld [vmem:[#allocation5 + $0x3f0] sm:$0xff]
    %v303 = vld [vmem:[#allocation5 + $0x3f8] sm:$0xff]
    %v304 = vld [vmem:[#allocation5 + $0x400] sm:$0xff]
    %v305 = vld [vmem:[#allocation5 + $0x408] sm:$0xff]
    %v306 = vld [vmem:[#allocation5 + $0x410] sm:$0xff]
    %v307 = vld [vmem:[#allocation5 + $0x418] sm:$0xff]
    %v308 = vld [vmem:[#allocation5 + $0x420] sm:$0xff]
    %v309 = vld [vmem:[#allocation5 + $0x428] sm:$0xff]
    %v310 = vld [vmem:[#allocation5 + $0x430] sm:$0xff]
    %v311 = vld [vmem:[#allocation5 + $0x438] sm:$0xff]
    %v312 = vld [vmem:[#allocation5 + $0x440] sm:$0xff]
    %v313 = vld [vmem:[#allocation5 + $0x448] sm:$0xff]
    %v314 = vld [vmem:[#allocation5 + $0x450] sm:$0xff]
    %v315 = vld [vmem:[#allocation5 + $0x458] sm:$0xff]
    %v316 = vld [vmem:[#allocation5 + $0x460] sm:$0xff]
    %v317 = vld [vmem:[#allocation5 + $0x468] sm:$0xff]
    %v318 = vld [vmem:[#allocation5 + $0x470] sm:$0xff]
    %v319 = vld [vmem:[#allocation5 + $0x478] sm:$0xff]
    %v320 = vld [vmem:[#allocation5 + $0x480] sm:$0xff]
    %v321 = vld [vmem:[#allocation5 + $0x488] sm:$0xff]
    %v322 = vld [vmem:[#allocation5 + $0x490] sm:$0xff]
    %v323 = vld [vmem:[#allocation5 + $0x498] sm:$0xff]
    %v324 = vld [vmem:[#allocation5 + $0x4a0] sm:$0xff]
    %v325 = vld [vmem:[#allocation5 + $0x4a8] sm:$0xff]
    %v326 = vld [vmem:[#allocation5 + $0x4b0] sm:$0xff]
    %v327 = vld [vmem:[#allocation5 + $0x4b8] sm:$0xff]
    %v328 = vld [vmem:[#allocation5 + $0x4c0] sm:$0xff]
    %v329 = vld [vmem:[#allocation5 + $0x4c8] sm:$0xff]
    %v330 = vld [vmem:[#allocation5 + $0x4d0] sm:$0xff]
    %v331 = vld [vmem:[#allocation5 + $0x4d8] sm:$0xff]
    %v332 = vld [vmem:[#allocation5 + $0x4e0] sm:$0xff]
    %v333 = vld [vmem:[#allocation5 + $0x4e8] sm:$0xff]
    %v334 = vld [vmem:[#allocation5 + $0x4f0] sm:$0xff]
    %v335 = vld [vmem:[#allocation5 + $0x4f8] sm:$0xff]
    %v336 = vld [vmem:[#allocation5 + $0x500] sm:$0xff]
    %v337 = vld [vmem:[#allocation5 + $0x508] sm:$0xff]
    %v338 = vld [vmem:[#allocation5 + $0x510] sm:$0xff]
    %v339 = vld [vmem:[#allocation5 + $0x518] sm:$0xff]
    %v340 = vld [vmem:[#allocation5 + $0x520] sm:$0xff]
    %v341 = vld [vmem:[#allocation5 + $0x528] sm:$0xff]
    %v342 = vld [vmem:[#allocation5 + $0x530] sm:$0xff]
    %v343 = vld [vmem:[#allocation5 + $0x538] sm:$0xff]
    %v344 = vld [vmem:[#allocation5 + $0x540] sm:$0xff]
    %v345 = vld [vmem:[#allocation5 + $0x548] sm:$0xff]
    %v346 = vld [vmem:[#allocation5 + $0x550] sm:$0xff]
    %v347 = vld [vmem:[#allocation5 + $0x558] sm:$0xff]
    %v348 = vld [vmem:[#allocation5 + $0x560] sm:$0xff]
    %v349 = vld [vmem:[#allocation5 + $0x568] sm:$0xff]
    %v350 = vld [vmem:[#allocation5 + $0x570] sm:$0xff]
    %v351 = vld [vmem:[#allocation5 + $0x578] sm:$0xff]
    %v352 = vld [vmem:[#allocation5 + $0x580] sm:$0xff]
    %v353 = vld [vmem:[#allocation5 + $0x588] sm:$0xff]
    %v354 = vld [vmem:[#allocation5 + $0x590] sm:$0xff]
    %v355 = vld [vmem:[#allocation5 + $0x598] sm:$0xff]
    %v356 = vld [vmem:[#allocation5 + $0x5a0] sm:$0xff]
    %v357 = vld [vmem:[#allocation5 + $0x5a8] sm:$0xff]
    %v358 = vld [vmem:[#allocation5 + $0x5b0] sm:$0xff]
    %v359 = vld [vmem:[#allocation5 + $0x5b8] sm:$0xff]
    %v360 = vld [vmem:[#allocation5 + $0x5c0] sm:$0xff]
    %v361 = vld [vmem:[#allocation5 + $0x5c8] sm:$0xff]
    %v362 = vld [vmem:[#allocation5 + $0x5d0] sm:$0xff]
    %v363 = vld [vmem:[#allocation5 + $0x5d8] sm:$0xff]
    %v364 = vld [vmem:[#allocation5 + $0x5e0] sm:$0xff]
    %v365 = vld [vmem:[#allocation5 + $0x5e8] sm:$0xff]
    %v366 = vld [vmem:[#allocation5 + $0x5f0] sm:$0xff]
    %v367 = vld [vmem:[#allocation5 + $0x5f8] sm:$0xff]
    %v368 = vld [vmem:[#allocation5 + $0x600] sm:$0xff]
    %v369 = vld [vmem:[#allocation5 + $0x608] sm:$0xff]
    %v370 = vld [vmem:[#allocation5 + $0x610] sm:$0xff]
    %v371 = vld [vmem:[#allocation5 + $0x618] sm:$0xff]
    %v372 = vld [vmem:[#allocation5 + $0x620] sm:$0xff]
    %v373 = vld [vmem:[#allocation5 + $0x628] sm:$0xff]
    %v374 = vld [vmem:[#allocation5 + $0x630] sm:$0xff]
    %v375 = vld [vmem:[#allocation5 + $0x638] sm:$0xff]
    %v376 = vld [vmem:[#allocation5 + $0x640] sm:$0xff]
    %v377 = vld [vmem:[#allocation5 + $0x648] sm:$0xff]
    %v378 = vld [vmem:[#allocation5 + $0x650] sm:$0xff]
    %v379 = vld [vmem:[#allocation5 + $0x658] sm:$0xff]
    %v380 = vld [vmem:[#allocation5 + $0x660] sm:$0xff]
    %v381 = vld [vmem:[#allocation5 + $0x668] sm:$0xff]
    %v382 = vld [vmem:[#allocation5 + $0x670] sm:$0xff]
    %v383 = vld [vmem:[#allocation5 + $0x678] sm:$0xff]
    %v384 = vld [vmem:[#allocation5 + $0x680] sm:$0xff]
    %v385 = vld [vmem:[#allocation5 + $0x688] sm:$0xff]
    %v386 = vld [vmem:[#allocation5 + $0x690] sm:$0xff]
    %v387 = vld [vmem:[#allocation5 + $0x698] sm:$0xff]
    %v388 = vld [vmem:[#allocation5 + $0x6a0] sm:$0xff]
    %v389 = vld [vmem:[#allocation5 + $0x6a8] sm:$0xff]
    %v390 = vld [vmem:[#allocation5 + $0x6b0] sm:$0xff]
    %v391 = vld [vmem:[#allocation5 + $0x6b8] sm:$0xff]
    %v392 = vld [vmem:[#allocation5 + $0x6c0] sm:$0xff]
    %v393 = vld [vmem:[#allocation5 + $0x6c8] sm:$0xff]
    %v394 = vld [vmem:[#allocation5 + $0x6d0] sm:$0xff]
    %v395 = vld [vmem:[#allocation5 + $0x6d8] sm:$0xff]
    %v396 = vld [vmem:[#allocation5 + $0x6e0] sm:$0xff]
    %v397 = vld [vmem:[#allocation5 + $0x6e8] sm:$0xff]
    %v398 = vld [vmem:[#allocation5 + $0x6f0] sm:$0xff]
    %v399 = vld [vmem:[#allocation5 + $0x6f8] sm:$0xff]
    %v400 = vld [vmem:[#allocation5 + $0x700] sm:$0xff]
    %v401 = vld [vmem:[#allocation5 + $0x708] sm:$0xff]
    %v402 = vld [vmem:[#allocation5 + $0x710] sm:$0xff]
    %v403 = vld [vmem:[#allocation5 + $0x718] sm:$0xff]
    %v404 = vld [vmem:[#allocation5 + $0x720] sm:$0xff]
    %v405 = vld [vmem:[#allocation5 + $0x728] sm:$0xff]
    %v406 = vld [vmem:[#allocation5 + $0x730] sm:$0xff]
    %v407 = vld [vmem:[#allocation5 + $0x738] sm:$0xff]
    %v408 = vld [vmem:[#allocation5 + $0x740] sm:$0xff]
    %v409 = vld [vmem:[#allocation5 + $0x748] sm:$0xff]
    %v410 = vld [vmem:[#allocation5 + $0x750] sm:$0xff]
    %v411 = vld [vmem:[#allocation5 + $0x758] sm:$0xff]
    %v412 = vld [vmem:[#allocation5 + $0x760] sm:$0xff]
    %v413 = vld [vmem:[#allocation5 + $0x768] sm:$0xff]
    %v414 = vld [vmem:[#allocation5 + $0x770] sm:$0xff]
    %v415 = vld [vmem:[#allocation5 + $0x778] sm:$0xff]
    %v416 = vld [vmem:[#allocation5 + $0x780] sm:$0xff]
    %v417 = vld [vmem:[#allocation5 + $0x788] sm:$0xff]
    %v418 = vld [vmem:[#allocation5 + $0x790] sm:$0xff]
    %v419 = vld [vmem:[#allocation5 + $0x798] sm:$0xff]
    %v420 = vld [vmem:[#allocation5 + $0x7a0] sm:$0xff]
    %v421 = vld [vmem:[#allocation5 + $0x7a8] sm:$0xff]
    %v422 = vld [vmem:[#allocation5 + $0x7b0] sm:$0xff]
    %v423 = vld [vmem:[#allocation5 + $0x7b8] sm:$0xff]
    %v424 = vld [vmem:[#allocation5 + $0x7c0] sm:$0xff]
    %v425 = vld [vmem:[#allocation5 + $0x7c8] sm:$0xff]
    %v426 = vld [vmem:[#allocation5 + $0x7d0] sm:$0xff]
    %v427 = vld [vmem:[#allocation5 + $0x7d8] sm:$0xff]
    %v428 = vld [vmem:[#allocation5 + $0x7e0] sm:$0xff]
    %v429 = vld [vmem:[#allocation5 + $0x7e8] sm:$0xff]
    %v430 = vld [vmem:[#allocation5 + $0x7f0] sm:$0xff]
    %v431 = vld [vmem:[#allocation5 + $0x7f8] sm:$0xff]
    %v432 = vld [vmem:[#allocation5 + $0x800] sm:$0xff]
    %v433 = vld [vmem:[#allocation5 + $0x808] sm:$0xff]
    %v434 = vld [vmem:[#allocation5 + $0x810] sm:$0xff]
    %v435 = vld [vmem:[#allocation5 + $0x818] sm:$0xff]
    %v436 = vld [vmem:[#allocation5 + $0x820] sm:$0xff]
    %v437 = vld [vmem:[#allocation5 + $0x828] sm:$0xff]
    %v438 = vld [vmem:[#allocation5 + $0x830] sm:$0xff]
    %v439 = vld [vmem:[#allocation5 + $0x838] sm:$0xff]
    %v440 = vld [vmem:[#allocation5 + $0x840] sm:$0xff]
    %v441 = vld [vmem:[#allocation5 + $0x848] sm:$0xff]
    %v442 = vld [vmem:[#allocation5 + $0x850] sm:$0xff]
    %v443 = vld [vmem:[#allocation5 + $0x858] sm:$0xff]
    %v444 = vld [vmem:[#allocation5 + $0x860] sm:$0xff]
    %v445 = vld [vmem:[#allocation5 + $0x868] sm:$0xff]
    %v446 = vld [vmem:[#allocation5 + $0x870] sm:$0xff]
    %v447 = vld [vmem:[#allocation5 + $0x878] sm:$0xff]
    %v448 = vld [vmem:[#allocation5 + $0x880] sm:$0xff]
    %v449 = vld [vmem:[#allocation5 + $0x888] sm:$0xff]
    %v450 = vld [vmem:[#allocation5 + $0x890] sm:$0xff]
    %v451 = vld [vmem:[#allocation5 + $0x898] sm:$0xff]
    %v452 = vld [vmem:[#allocation5 + $0x8a0] sm:$0xff]
    %v453 = vld [vmem:[#allocation5 + $0x8a8] sm:$0xff]
    %v454 = vld [vmem:[#allocation5 + $0x8b0] sm:$0xff]
    %v455 = vld [vmem:[#allocation5 + $0x8b8] sm:$0xff]
    %v456 = vld [vmem:[#allocation5 + $0x8c0] sm:$0xff]
    %v457 = vld [vmem:[#allocation5 + $0x8c8] sm:$0xff]
    %v458 = vld [vmem:[#allocation5 + $0x8d0] sm:$0xff]
    %v459 = vld [vmem:[#allocation5 + $0x8d8] sm:$0xff]
    %v460 = vld [vmem:[#allocation5 + $0x8e0] sm:$0xff]
    %v461 = vld [vmem:[#allocation5 + $0x8e8] sm:$0xff]
    %v462 = vld [vmem:[#allocation5 + $0x8f0] sm:$0xff]
    %v463 = vld [vmem:[#allocation5 + $0x8f8] sm:$0xff]
    %v464 = vld [vmem:[#allocation5 + $0x900] sm:$0xff]
    %v465 = vld [vmem:[#allocation5 + $0x908] sm:$0xff]
    %v466 = vld [vmem:[#allocation5 + $0x910] sm:$0xff]
    %v467 = vld [vmem:[#allocation5 + $0x918] sm:$0xff]
    %v468 = vld [vmem:[#allocation5 + $0x920] sm:$0xff]
    %v469 = vld [vmem:[#allocation5 + $0x928] sm:$0xff]
    %v470 = vld [vmem:[#allocation5 + $0x930] sm:$0xff]
    %v471 = vld [vmem:[#allocation5 + $0x938] sm:$0xff]
    %v472 = vld [vmem:[#allocation5 + $0x940] sm:$0xff]
    %v473 = vld [vmem:[#allocation5 + $0x948] sm:$0xff]
    %v474 = vld [vmem:[#allocation5 + $0x950] sm:$0xff]
    %v475 = vld [vmem:[#allocation5 + $0x958] sm:$0xff]
    %v476 = vld [vmem:[#allocation5 + $0x960] sm:$0xff]
    %v477 = vld [vmem:[#allocation5 + $0x968] sm:$0xff]
    %v478 = vld [vmem:[#allocation5 + $0x970] sm:$0xff]
    %v479 = vld [vmem:[#allocation5 + $0x978] sm:$0xff]
    %v480 = vld [vmem:[#allocation5 + $0x980] sm:$0xff]
    %v481 = vld [vmem:[#allocation5 + $0x988] sm:$0xff]
    %v482 = vld [vmem:[#allocation5 + $0x990] sm:$0xff]
    %v483 = vld [vmem:[#allocation5 + $0x998] sm:$0xff]
    %v484 = vld [vmem:[#allocation5 + $0x9a0] sm:$0xff]
    %v485 = vld [vmem:[#allocation5 + $0x9a8] sm:$0xff]
    %v486 = vld [vmem:[#allocation5 + $0x9b0] sm:$0xff]
    %v487 = vld [vmem:[#allocation5 + $0x9b8] sm:$0xff]
    %v488 = vld [vmem:[#allocation5 + $0x9c0] sm:$0xff]
    %v489 = vld [vmem:[#allocation5 + $0x9c8] sm:$0xff]
    %v490 = vld [vmem:[#allocation5 + $0x9d0] sm:$0xff]
    %v491 = vld [vmem:[#allocation5 + $0x9d8] sm:$0xff]
    %v492 = vld [vmem:[#allocation5 + $0x9e0] sm:$0xff]
    %v493 = vld [vmem:[#allocation5 + $0x9e8] sm:$0xff]
    %v494 = vld [vmem:[#allocation5 + $0x9f0] sm:$0xff]
    %v495 = vld [vmem:[#allocation5 + $0x9f8] sm:$0xff]
    %v496 = vld [vmem:[#allocation5 + $0xa00] sm:$0xff]
    %v497 = vld [vmem:[#allocation5 + $0xa08] sm:$0xff]
    %v498 = vld [vmem:[#allocation5 + $0xa10] sm:$0xff]
    %v499 = vld [vmem:[#allocation5 + $0xa18] sm:$0xff]
    %v500 = vld [vmem:[#allocation5 + $0xa20] sm:$0xff]
    %v501 = vld [vmem:[#allocation5 + $0xa28] sm:$0xff]
    %v502 = vld [vmem:[#allocation5 + $0xa30] sm:$0xff]
    %v503 = vld [vmem:[#allocation5 + $0xa38] sm:$0xff]
    %v504 = vld [vmem:[#allocation5 + $0xa40] sm:$0xff]
    %v505 = vld [vmem:[#allocation5 + $0xa48] sm:$0xff]
    %v506 = vld [vmem:[#allocation5 + $0xa50] sm:$0xff]
    %v507 = vld [vmem:[#allocation5 + $0xa58] sm:$0xff]
    %v508 = vld [vmem:[#allocation5 + $0xa60] sm:$0xff]
    %v509 = vld [vmem:[#allocation5 + $0xa68] sm:$0xff]
    %v510 = vld [vmem:[#allocation5 + $0xa70] sm:$0xff]
    %v511 = vld [vmem:[#allocation5 + $0xa78] sm:$0xff]
    %v512 = vld [vmem:[#allocation5 + $0xa80] sm:$0xff]
    %v513 = vld [vmem:[#allocation5 + $0xa88] sm:$0xff]
    %v514 = vld [vmem:[#allocation5 + $0xa90] sm:$0xff]
    %v515 = vld [vmem:[#allocation5 + $0xa98] sm:$0xff]
    %v516 = vld [vmem:[#allocation5 + $0xaa0] sm:$0xff]
    %v517 = vld [vmem:[#allocation5 + $0xaa8] sm:$0xff]
    %v518 = vld [vmem:[#allocation5 + $0xab0] sm:$0xff]
    %v519 = vld [vmem:[#allocation5 + $0xab8] sm:$0xff]
    %v520 = vld [vmem:[#allocation5 + $0xac0] sm:$0xff]
    %v521 = vld [vmem:[#allocation5 + $0xac8] sm:$0xff]
    %v522 = vld [vmem:[#allocation5 + $0xad0] sm:$0xff]
    %v523 = vld [vmem:[#allocation5 + $0xad8] sm:$0xff]
    %v524 = vld [vmem:[#allocation5 + $0xae0] sm:$0xff]
    %v525 = vld [vmem:[#allocation5 + $0xae8] sm:$0xff]
    %v526 = vld [vmem:[#allocation5 + $0xaf0] sm:$0xff]
    %v527 = vld [vmem:[#allocation5 + $0xaf8] sm:$0xff]
    %v528 = vld [vmem:[#allocation5 + $0xb00] sm:$0xff]
    %v529 = vld [vmem:[#allocation5 + $0xb08] sm:$0xff]
    %v530 = vld [vmem:[#allocation5 + $0xb10] sm:$0xff]
    %v531 = vld [vmem:[#allocation5 + $0xb18] sm:$0xff]
    %v532 = vld [vmem:[#allocation5 + $0xb20] sm:$0xff]
    %v533 = vld [vmem:[#allocation5 + $0xb28] sm:$0xff]
    %v534 = vld [vmem:[#allocation5 + $0xb30] sm:$0xff]
    %v535 = vld [vmem:[#allocation5 + $0xb38] sm:$0xff]
    %v536 = vld [vmem:[#allocation5 + $0xb40] sm:$0xff]
    %v537 = vld [vmem:[#allocation5 + $0xb48] sm:$0xff]
    %v538 = vld [vmem:[#allocation5 + $0xb50] sm:$0xff]
    %v539 = vld [vmem:[#allocation5 + $0xb58] sm:$0xff]
    %v540 = vld [vmem:[#allocation5 + $0xb60] sm:$0xff]
    %v541 = vld [vmem:[#allocation5 + $0xb68] sm:$0xff]
    %v542 = vld [vmem:[#allocation5 + $0xb70] sm:$0xff]
    %v543 = vld [vmem:[#allocation5 + $0xb78] sm:$0xff]
    %v544 = vld [vmem:[#allocation5 + $0xb80] sm:$0xff]
    %v545 = vld [vmem:[#allocation5 + $0xb88] sm:$0xff]
    %v546 = vld [vmem:[#allocation5 + $0xb90] sm:$0xff]
    %v547 = vld [vmem:[#allocation5 + $0xb98] sm:$0xff]
    %v548 = vld [vmem:[#allocation5 + $0xba0] sm:$0xff]
    %v549 = vld [vmem:[#allocation5 + $0xba8] sm:$0xff]
    %v550 = vld [vmem:[#allocation5 + $0xbb0] sm:$0xff]
    %v551 = vld [vmem:[#allocation5 + $0xbb8] sm:$0xff]
    %v552 = vld [vmem:[#allocation5 + $0xbc0] sm:$0xff]
    %v553 = vld [vmem:[#allocation5 + $0xbc8] sm:$0xff]
    %v554 = vld [vmem:[#allocation5 + $0xbd0] sm:$0xff]
    %v555 = vld [vmem:[#allocation5 + $0xbd8] sm:$0xff]
    %v556 = vld [vmem:[#allocation5 + $0xbe0] sm:$0xff]
    %v557 = vld [vmem:[#allocation5 + $0xbe8] sm:$0xff]
    %v558 = vld [vmem:[#allocation5 + $0xbf0] sm:$0xff]
    %v559 = vld [vmem:[#allocation5 + $0xbf8] sm:$0xff]
    %v560 = vld [vmem:[#allocation7] sm:$0x3]
    %v562 = vperm.slane %v560, 0
    %v563 = vperm.slane %v560, 1
    %v950 = vunpack.c.l.b16 %v176
    %v951 = vunpack.c.h.b16 %v176
    %v952 = vunpack.c.l.b16 %v177
    %v953 = vunpack.c.h.b16 %v177
    %v954 = vunpack.c.l.b16 %v178
    %v955 = vunpack.c.h.b16 %v178
    %v956 = vunpack.c.l.b16 %v179
    %v957 = vunpack.c.h.b16 %v179
    %v958 = vunpack.c.l.b16 %v180
    %v959 = vunpack.c.h.b16 %v180
    %v960 = vunpack.c.l.b16 %v181
    %v961 = vunpack.c.h.b16 %v181
    %v962 = vunpack.c.l.b16 %v182
    %v963 = vunpack.c.h.b16 %v182
    %v964 = vunpack.c.l.b16 %v183
    %v965 = vunpack.c.h.b16 %v183
    %v966 = vunpack.c.l.b16 %v184
    %v967 = vunpack.c.h.b16 %v184
    %v968 = vunpack.c.l.b16 %v185
    %v969 = vunpack.c.h.b16 %v185
    %v970 = vunpack.c.l.b16 %v186
    %v971 = vunpack.c.h.b16 %v186
    %v972 = vunpack.c.l.b16 %v187
    %v973 = vunpack.c.h.b16 %v187
    %v974 = vunpack.c.l.b16 %v188
    %v975 = vunpack.c.h.b16 %v188
    %v976 = vunpack.c.l.b16 %v189
    %v977 = vunpack.c.h.b16 %v189
    %v978 = vunpack.c.l.b16 %v190
    %v979 = vunpack.c.h.b16 %v190
    %v980 = vunpack.c.l.b16 %v191
    %v981 = vunpack.c.h.b16 %v191
    %v982 = vunpack.c.l.b16 %v192
    %v983 = vunpack.c.h.b16 %v192
    %v984 = vunpack.c.l.b16 %v193
    %v985 = vunpack.c.h.b16 %v193
    %v986 = vunpack.c.l.b16 %v194
    %v987 = vunpack.c.h.b16 %v194
    %v988 = vunpack.c.l.b16 %v195
    %v989 = vunpack.c.h.b16 %v195
    %v990 = vunpack.c.l.b16 %v196
    %v991 = vunpack.c.h.b16 %v196
    %v992 = vunpack.c.l.b16 %v197
    %v993 = vunpack.c.h.b16 %v197
    %v994 = vunpack.c.l.b16 %v198
    %v995 = vunpack.c.h.b16 %v198
    %v996 = vunpack.c.l.b16 %v199
    %v997 = vunpack.c.h.b16 %v199
    %v998 = vunpack.c.l.b16 %v200
    %v999 = vunpack.c.h.b16 %v200
    %v1000 = vunpack.c.l.b16 %v201
    %v1001 = vunpack.c.h.b16 %v201
    %v1002 = vunpack.c.l.b16 %v202
    %v1003 = vunpack.c.h.b16 %v202
    %v1004 = vunpack.c.l.b16 %v203
    %v1005 = vunpack.c.h.b16 %v203
    %v1006 = vunpack.c.l.b16 %v204
    %v1007 = vunpack.c.h.b16 %v204
    %v1008 = vunpack.c.l.b16 %v205
    %v1009 = vunpack.c.h.b16 %v205
    %v1010 = vunpack.c.l.b16 %v206
    %v1011 = vunpack.c.h.b16 %v206
    %v1012 = vunpack.c.l.b16 %v207
    %v1013 = vunpack.c.h.b16 %v207
    %v1014 = vunpack.c.l.b16 %v208
    %v1015 = vunpack.c.h.b16 %v208
    %v1016 = vunpack.c.l.b16 %v209
    %v1017 = vunpack.c.h.b16 %v209
    %v1018 = vunpack.c.l.b16 %v210
    %v1019 = vunpack.c.h.b16 %v210
    %v1020 = vunpack.c.l.b16 %v211
    %v1021 = vunpack.c.h.b16 %v211
    %v1022 = vunpack.c.l.b16 %v212
    %v1023 = vunpack.c.h.b16 %v212
    %v1024 = vunpack.c.l.b16 %v213
    %v1025 = vunpack.c.h.b16 %v213
    %v1026 = vunpack.c.l.b16 %v214
    %v1027 = vunpack.c.h.b16 %v214
    %v1028 = vunpack.c.l.b16 %v215
    %v1029 = vunpack.c.h.b16 %v215
    %v1030 = vunpack.c.l.b16 %v216
    %v1031 = vunpack.c.h.b16 %v216
    %v1032 = vunpack.c.l.b16 %v217
    %v1033 = vunpack.c.h.b16 %v217
    %v1034 = vunpack.c.l.b16 %v218
    %v1035 = vunpack.c.h.b16 %v218
    %v1036 = vunpack.c.l.b16 %v219
    %v1037 = vunpack.c.h.b16 %v219
    %v1038 = vunpack.c.l.b16 %v220
    %v1039 = vunpack.c.h.b16 %v220
    %v1040 = vunpack.c.l.b16 %v221
    %v1041 = vunpack.c.h.b16 %v221
    %v1042 = vunpack.c.l.b16 %v222
    %v1043 = vunpack.c.h.b16 %v222
    %v1044 = vunpack.c.l.b16 %v223
    %v1045 = vunpack.c.h.b16 %v223
    %v1046 = vunpack.c.l.b16 %v224
    %v1047 = vunpack.c.h.b16 %v224
    %v1048 = vunpack.c.l.b16 %v225
    %v1049 = vunpack.c.h.b16 %v225
    %v1050 = vunpack.c.l.b16 %v226
    %v1051 = vunpack.c.h.b16 %v226
    %v1052 = vunpack.c.l.b16 %v227
    %v1053 = vunpack.c.h.b16 %v227
    %v1054 = vunpack.c.l.b16 %v228
    %v1055 = vunpack.c.h.b16 %v228
    %v1056 = vunpack.c.l.b16 %v229
    %v1057 = vunpack.c.h.b16 %v229
    %v1058 = vunpack.c.l.b16 %v230
    %v1059 = vunpack.c.h.b16 %v230
    %v1060 = vunpack.c.l.b16 %v231
    %v1061 = vunpack.c.h.b16 %v231
    %v1062 = vunpack.c.l.b16 %v232
    %v1063 = vunpack.c.h.b16 %v232
    %v1064 = vunpack.c.l.b16 %v233
    %v1065 = vunpack.c.h.b16 %v233
    %v1066 = vunpack.c.l.b16 %v234
    %v1067 = vunpack.c.h.b16 %v234
    %v1068 = vunpack.c.l.b16 %v235
    %v1069 = vunpack.c.h.b16 %v235
    %v1070 = vunpack.c.l.b16 %v236
    %v1071 = vunpack.c.h.b16 %v236
    %v1072 = vunpack.c.l.b16 %v237
    %v1073 = vunpack.c.h.b16 %v237
    %v1074 = vunpack.c.l.b16 %v238
    %v1075 = vunpack.c.h.b16 %v238
    %v1076 = vunpack.c.l.b16 %v239
    %v1077 = vunpack.c.h.b16 %v239
    %v1078 = vunpack.c.l.b16 %v240
    %v1079 = vunpack.c.h.b16 %v240
    %v1080 = vunpack.c.l.b16 %v241
    %v1081 = vunpack.c.h.b16 %v241
    %v1082 = vunpack.c.l.b16 %v242
    %v1083 = vunpack.c.h.b16 %v242
    %v1084 = vunpack.c.l.b16 %v243
    %v1085 = vunpack.c.h.b16 %v243
    %v1086 = vunpack.c.l.b16 %v244
    %v1087 = vunpack.c.h.b16 %v244
    %v1088 = vunpack.c.l.b16 %v245
    %v1089 = vunpack.c.h.b16 %v245
    %v1090 = vunpack.c.l.b16 %v246
    %v1091 = vunpack.c.h.b16 %v246
    %v1092 = vunpack.c.l.b16 %v247
    %v1093 = vunpack.c.h.b16 %v247
    %v1094 = vunpack.c.l.b16 %v248
    %v1095 = vunpack.c.h.b16 %v248
    %v1096 = vunpack.c.l.b16 %v249
    %v1097 = vunpack.c.h.b16 %v249
    %v1098 = vunpack.c.l.b16 %v250
    %v1099 = vunpack.c.h.b16 %v250
    %v1100 = vunpack.c.l.b16 %v251
    %v1101 = vunpack.c.h.b16 %v251
    %v1102 = vunpack.c.l.b16 %v252
    %v1103 = vunpack.c.h.b16 %v252
    %v1104 = vunpack.c.l.b16 %v253
    %v1105 = vunpack.c.h.b16 %v253
    %v1106 = vunpack.c.l.b16 %v254
    %v1107 = vunpack.c.h.b16 %v254
    %v1108 = vunpack.c.l.b16 %v255
    %v1109 = vunpack.c.h.b16 %v255
    %v1110 = vunpack.c.l.b16 %v256
    %v1111 = vunpack.c.h.b16 %v256
    %v1112 = vunpack.c.l.b16 %v257
    %v1113 = vunpack.c.h.b16 %v257
    %v1114 = vunpack.c.l.b16 %v258
    %v1115 = vunpack.c.h.b16 %v258
    %v1116 = vunpack.c.l.b16 %v259
    %v1117 = vunpack.c.h.b16 %v259
    %v1118 = vunpack.c.l.b16 %v260
    %v1119 = vunpack.c.h.b16 %v260
    %v1120 = vunpack.c.l.b16 %v261
    %v1121 = vunpack.c.h.b16 %v261
    %v1122 = vunpack.c.l.b16 %v262
    %v1123 = vunpack.c.h.b16 %v262
    %v1124 = vunpack.c.l.b16 %v263
    %v1125 = vunpack.c.h.b16 %v263
    %v1126 = vunpack.c.l.b16 %v264
    %v1127 = vunpack.c.h.b16 %v264
    %v1128 = vunpack.c.l.b16 %v265
    %v1129 = vunpack.c.h.b16 %v265
    %v1130 = vunpack.c.l.b16 %v266
    %v1131 = vunpack.c.h.b16 %v266
    %v1132 = vunpack.c.l.b16 %v267
    %v1133 = vunpack.c.h.b16 %v267
    %v1134 = vunpack.c.l.b16 %v268
    %v1135 = vunpack.c.h.b16 %v268
    %v1136 = vunpack.c.l.b16 %v269
    %v1137 = vunpack.c.h.b16 %v269
    %v1138 = vunpack.c.l.b16 %v270
    %v1139 = vunpack.c.h.b16 %v270
    %v1140 = vunpack.c.l.b16 %v271
    %v1141 = vunpack.c.h.b16 %v271
    %v1142 = vunpack.c.l.b16 %v272
    %v1143 = vunpack.c.h.b16 %v272
    %v1144 = vunpack.c.l.b16 %v273
    %v1145 = vunpack.c.h.b16 %v273
    %v1146 = vunpack.c.l.b16 %v274
    %v1147 = vunpack.c.h.b16 %v274
    %v1148 = vunpack.c.l.b16 %v275
    %v1149 = vunpack.c.h.b16 %v275
    %v1150 = vunpack.c.l.b16 %v276
    %v1151 = vunpack.c.h.b16 %v276
    %v1152 = vunpack.c.l.b16 %v277
    %v1153 = vunpack.c.h.b16 %v277
    %v1154 = vunpack.c.l.b16 %v278
    %v1155 = vunpack.c.h.b16 %v278
    %v1156 = vunpack.c.l.b16 %v279
    %v1157 = vunpack.c.h.b16 %v279
    %v1158 = vunpack.c.l.b16 %v280
    %v1159 = vunpack.c.h.b16 %v280
    %v1160 = vunpack.c.l.b16 %v281
    %v1161 = vunpack.c.h.b16 %v281
    %v1162 = vunpack.c.l.b16 %v282
    %v1163 = vunpack.c.h.b16 %v282
    %v1164 = vunpack.c.l.b16 %v283
    %v1165 = vunpack.c.h.b16 %v283
    %v1166 = vunpack.c.l.b16 %v284
    %v1167 = vunpack.c.h.b16 %v284
    %v1168 = vunpack.c.l.b16 %v285
    %v1169 = vunpack.c.h.b16 %v285
    %v1170 = vunpack.c.l.b16 %v286
    %v1171 = vunpack.c.h.b16 %v286
    %v1172 = vunpack.c.l.b16 %v287
    %v1173 = vunpack.c.h.b16 %v287
    %v1174 = vunpack.c.l.b16 %v288
    %v1175 = vunpack.c.h.b16 %v288
    %v1176 = vunpack.c.l.b16 %v289
    %v1177 = vunpack.c.h.b16 %v289
    %v1178 = vunpack.c.l.b16 %v290
    %v1179 = vunpack.c.h.b16 %v290
    %v1180 = vunpack.c.l.b16 %v291
    %v1181 = vunpack.c.h.b16 %v291
    %v1182 = vunpack.c.l.b16 %v292
    %v1183 = vunpack.c.h.b16 %v292
    %v1184 = vunpack.c.l.b16 %v293
    %v1185 = vunpack.c.h.b16 %v293
    %v1186 = vunpack.c.l.b16 %v294
    %v1187 = vunpack.c.h.b16 %v294
    %v1188 = vunpack.c.l.b16 %v295
    %v1189 = vunpack.c.h.b16 %v295
    %v1190 = vunpack.c.l.b16 %v296
    %v1191 = vunpack.c.h.b16 %v296
    %v1192 = vunpack.c.l.b16 %v297
    %v1193 = vunpack.c.h.b16 %v297
    %v1194 = vunpack.c.l.b16 %v298
    %v1195 = vunpack.c.h.b16 %v298
    %v1196 = vunpack.c.l.b16 %v299
    %v1197 = vunpack.c.h.b16 %v299
    %v1198 = vunpack.c.l.b16 %v300
    %v1199 = vunpack.c.h.b16 %v300
    %v1200 = vunpack.c.l.b16 %v301
    %v1201 = vunpack.c.h.b16 %v301
    %v1202 = vunpack.c.l.b16 %v302
    %v1203 = vunpack.c.h.b16 %v302
    %v1204 = vunpack.c.l.b16 %v303
    %v1205 = vunpack.c.h.b16 %v303
    %v1206 = vunpack.c.l.b16 %v304
    %v1207 = vunpack.c.h.b16 %v304
    %v1208 = vunpack.c.l.b16 %v305
    %v1209 = vunpack.c.h.b16 %v305
    %v1210 = vunpack.c.l.b16 %v306
    %v1211 = vunpack.c.h.b16 %v306
    %v1212 = vunpack.c.l.b16 %v307
    %v1213 = vunpack.c.h.b16 %v307
    %v1214 = vunpack.c.l.b16 %v308
    %v1215 = vunpack.c.h.b16 %v308
    %v1216 = vunpack.c.l.b16 %v309
    %v1217 = vunpack.c.h.b16 %v309
    %v1218 = vunpack.c.l.b16 %v310
    %v1219 = vunpack.c.h.b16 %v310
    %v1220 = vunpack.c.l.b16 %v311
    %v1221 = vunpack.c.h.b16 %v311
    %v1222 = vunpack.c.l.b16 %v312
    %v1223 = vunpack.c.h.b16 %v312
    %v1224 = vunpack.c.l.b16 %v313
    %v1225 = vunpack.c.h.b16 %v313
    %v1226 = vunpack.c.l.b16 %v314
    %v1227 = vunpack.c.h.b16 %v314
    %v1228 = vunpack.c.l.b16 %v315
    %v1229 = vunpack.c.h.b16 %v315
    %v1230 = vunpack.c.l.b16 %v316
    %v1231 = vunpack.c.h.b16 %v316
    %v1232 = vunpack.c.l.b16 %v317
    %v1233 = vunpack.c.h.b16 %v317
    %v1234 = vunpack.c.l.b16 %v318
    %v1235 = vunpack.c.h.b16 %v318
    %v1236 = vunpack.c.l.b16 %v319
    %v1237 = vunpack.c.h.b16 %v319
    %v1238 = vunpack.c.l.b16 %v320
    %v1239 = vunpack.c.h.b16 %v320
    %v1240 = vunpack.c.l.b16 %v321
    %v1241 = vunpack.c.h.b16 %v321
    %v1242 = vunpack.c.l.b16 %v322
    %v1243 = vunpack.c.h.b16 %v322
    %v1244 = vunpack.c.l.b16 %v323
    %v1245 = vunpack.c.h.b16 %v323
    %v1246 = vunpack.c.l.b16 %v324
    %v1247 = vunpack.c.h.b16 %v324
    %v1248 = vunpack.c.l.b16 %v325
    %v1249 = vunpack.c.h.b16 %v325
    %v1250 = vunpack.c.l.b16 %v326
    %v1251 = vunpack.c.h.b16 %v326
    %v1252 = vunpack.c.l.b16 %v327
    %v1253 = vunpack.c.h.b16 %v327
    %v1254 = vunpack.c.l.b16 %v328
    %v1255 = vunpack.c.h.b16 %v328
    %v1256 = vunpack.c.l.b16 %v329
    %v1257 = vunpack.c.h.b16 %v329
    %v1258 = vunpack.c.l.b16 %v330
    %v1259 = vunpack.c.h.b16 %v330
    %v1260 = vunpack.c.l.b16 %v331
    %v1261 = vunpack.c.h.b16 %v331
    %v1262 = vunpack.c.l.b16 %v332
    %v1263 = vunpack.c.h.b16 %v332
    %v1264 = vunpack.c.l.b16 %v333
    %v1265 = vunpack.c.h.b16 %v333
    %v1266 = vunpack.c.l.b16 %v334
    %v1267 = vunpack.c.h.b16 %v334
    %v1268 = vunpack.c.l.b16 %v335
    %v1269 = vunpack.c.h.b16 %v335
    %v1270 = vunpack.c.l.b16 %v336
    %v1271 = vunpack.c.h.b16 %v336
    %v1272 = vunpack.c.l.b16 %v337
    %v1273 = vunpack.c.h.b16 %v337
    %v1274 = vunpack.c.l.b16 %v338
    %v1275 = vunpack.c.h.b16 %v338
    %v1276 = vunpack.c.l.b16 %v339
    %v1277 = vunpack.c.h.b16 %v339
    %v1278 = vunpack.c.l.b16 %v340
    %v1279 = vunpack.c.h.b16 %v340
    %v1280 = vunpack.c.l.b16 %v341
    %v1281 = vunpack.c.h.b16 %v341
    %v1282 = vunpack.c.l.b16 %v342
    %v1283 = vunpack.c.h.b16 %v342
    %v1284 = vunpack.c.l.b16 %v343
    %v1285 = vunpack.c.h.b16 %v343
    %v1286 = vunpack.c.l.b16 %v344
    %v1287 = vunpack.c.h.b16 %v344
    %v1288 = vunpack.c.l.b16 %v345
    %v1289 = vunpack.c.h.b16 %v345
    %v1290 = vunpack.c.l.b16 %v346
    %v1291 = vunpack.c.h.b16 %v346
    %v1292 = vunpack.c.l.b16 %v347
    %v1293 = vunpack.c.h.b16 %v347
    %v1294 = vunpack.c.l.b16 %v348
    %v1295 = vunpack.c.h.b16 %v348
    %v1296 = vunpack.c.l.b16 %v349
    %v1297 = vunpack.c.h.b16 %v349
    %v1298 = vunpack.c.l.b16 %v350
    %v1299 = vunpack.c.h.b16 %v350
    %v1300 = vunpack.c.l.b16 %v351
    %v1301 = vunpack.c.h.b16 %v351
    %v1302 = vunpack.c.l.b16 %v352
    %v1303 = vunpack.c.h.b16 %v352
    %v1304 = vunpack.c.l.b16 %v353
    %v1305 = vunpack.c.h.b16 %v353
    %v1306 = vunpack.c.l.b16 %v354
    %v1307 = vunpack.c.h.b16 %v354
    %v1308 = vunpack.c.l.b16 %v355
    %v1309 = vunpack.c.h.b16 %v355
    %v1310 = vunpack.c.l.b16 %v356
    %v1311 = vunpack.c.h.b16 %v356
    %v1312 = vunpack.c.l.b16 %v357
    %v1313 = vunpack.c.h.b16 %v357
    %v1314 = vunpack.c.l.b16 %v358
    %v1315 = vunpack.c.h.b16 %v358
    %v1316 = vunpack.c.l.b16 %v359
    %v1317 = vunpack.c.h.b16 %v359
    %v1318 = vunpack.c.l.b16 %v360
    %v1319 = vunpack.c.h.b16 %v360
    %v1320 = vunpack.c.l.b16 %v361
    %v1321 = vunpack.c.h.b16 %v361
    %v1322 = vunpack.c.l.b16 %v362
    %v1323 = vunpack.c.h.b16 %v362
    %v1324 = vunpack.c.l.b16 %v363
    %v1325 = vunpack.c.h.b16 %v363
    %v1326 = vunpack.c.l.b16 %v364
    %v1327 = vunpack.c.h.b16 %v364
    %v1328 = vunpack.c.l.b16 %v365
    %v1329 = vunpack.c.h.b16 %v365
    %v1330 = vunpack.c.l.b16 %v366
    %v1331 = vunpack.c.h.b16 %v366
    %v1332 = vunpack.c.l.b16 %v367
    %v1333 = vunpack.c.h.b16 %v367
    %v1334 = vunpack.c.l.b16 %v368
    %v1335 = vunpack.c.h.b16 %v368
    %v1336 = vunpack.c.l.b16 %v369
    %v1337 = vunpack.c.h.b16 %v369
    %v1338 = vunpack.c.l.b16 %v370
    %v1339 = vunpack.c.h.b16 %v370
    %v1340 = vunpack.c.l.b16 %v371
    %v1341 = vunpack.c.h.b16 %v371
    %v1342 = vunpack.c.l.b16 %v372
    %v1343 = vunpack.c.h.b16 %v372
    %v1344 = vunpack.c.l.b16 %v373
    %v1345 = vunpack.c.h.b16 %v373
    %v1346 = vunpack.c.l.b16 %v374
    %v1347 = vunpack.c.h.b16 %v374
    %v1348 = vunpack.c.l.b16 %v375
    %v1349 = vunpack.c.h.b16 %v375
    %v1350 = vunpack.c.l.b16 %v376
    %v1351 = vunpack.c.h.b16 %v376
    %v1352 = vunpack.c.l.b16 %v377
    %v1353 = vunpack.c.h.b16 %v377
    %v1354 = vunpack.c.l.b16 %v378
    %v1355 = vunpack.c.h.b16 %v378
    %v1356 = vunpack.c.l.b16 %v379
    %v1357 = vunpack.c.h.b16 %v379
    %v1358 = vunpack.c.l.b16 %v380
    %v1359 = vunpack.c.h.b16 %v380
    %v1360 = vunpack.c.l.b16 %v381
    %v1361 = vunpack.c.h.b16 %v381
    %v1362 = vunpack.c.l.b16 %v382
    %v1363 = vunpack.c.h.b16 %v382
    %v1364 = vunpack.c.l.b16 %v383
    %v1365 = vunpack.c.h.b16 %v383
    %v1366 = vunpack.c.l.b16 %v384
    %v1367 = vunpack.c.h.b16 %v384
    %v1368 = vunpack.c.l.b16 %v385
    %v1369 = vunpack.c.h.b16 %v385
    %v1370 = vunpack.c.l.b16 %v386
    %v1371 = vunpack.c.h.b16 %v386
    %v1372 = vunpack.c.l.b16 %v387
    %v1373 = vunpack.c.h.b16 %v387
    %v1374 = vunpack.c.l.b16 %v388
    %v1375 = vunpack.c.h.b16 %v388
    %v1376 = vunpack.c.l.b16 %v389
    %v1377 = vunpack.c.h.b16 %v389
    %v1378 = vunpack.c.l.b16 %v390
    %v1379 = vunpack.c.h.b16 %v390
    %v1380 = vunpack.c.l.b16 %v391
    %v1381 = vunpack.c.h.b16 %v391
    %v1382 = vunpack.c.l.b16 %v392
    %v1383 = vunpack.c.h.b16 %v392
    %v1384 = vunpack.c.l.b16 %v393
    %v1385 = vunpack.c.h.b16 %v393
    %v1386 = vunpack.c.l.b16 %v394
    %v1387 = vunpack.c.h.b16 %v394
    %v1388 = vunpack.c.l.b16 %v395
    %v1389 = vunpack.c.h.b16 %v395
    %v1390 = vunpack.c.l.b16 %v396
    %v1391 = vunpack.c.h.b16 %v396
    %v1392 = vunpack.c.l.b16 %v397
    %v1393 = vunpack.c.h.b16 %v397
    %v1394 = vunpack.c.l.b16 %v398
    %v1395 = vunpack.c.h.b16 %v398
    %v1396 = vunpack.c.l.b16 %v399
    %v1397 = vunpack.c.h.b16 %v399
    %v1398 = vunpack.c.l.b16 %v400
    %v1399 = vunpack.c.h.b16 %v400
    %v1400 = vunpack.c.l.b16 %v401
    %v1401 = vunpack.c.h.b16 %v401
    %v1402 = vunpack.c.l.b16 %v402
    %v1403 = vunpack.c.h.b16 %v402
    %v1404 = vunpack.c.l.b16 %v403
    %v1405 = vunpack.c.h.b16 %v403
    %v1406 = vunpack.c.l.b16 %v404
    %v1407 = vunpack.c.h.b16 %v404
    %v1408 = vunpack.c.l.b16 %v405
    %v1409 = vunpack.c.h.b16 %v405
    %v1410 = vunpack.c.l.b16 %v406
    %v1411 = vunpack.c.h.b16 %v406
    %v1412 = vunpack.c.l.b16 %v407
    %v1413 = vunpack.c.h.b16 %v407
    %v1414 = vunpack.c.l.b16 %v408
    %v1415 = vunpack.c.h.b16 %v408
    %v1416 = vunpack.c.l.b16 %v409
    %v1417 = vunpack.c.h.b16 %v409
    %v1418 = vunpack.c.l.b16 %v410
    %v1419 = vunpack.c.h.b16 %v410
    %v1420 = vunpack.c.l.b16 %v411
    %v1421 = vunpack.c.h.b16 %v411
    %v1422 = vunpack.c.l.b16 %v412
    %v1423 = vunpack.c.h.b16 %v412
    %v1424 = vunpack.c.l.b16 %v413
    %v1425 = vunpack.c.h.b16 %v413
    %v1426 = vunpack.c.l.b16 %v414
    %v1427 = vunpack.c.h.b16 %v414
    %v1428 = vunpack.c.l.b16 %v415
    %v1429 = vunpack.c.h.b16 %v415
    %v1430 = vunpack.c.l.b16 %v416
    %v1431 = vunpack.c.h.b16 %v416
    %v1432 = vunpack.c.l.b16 %v417
    %v1433 = vunpack.c.h.b16 %v417
    %v1434 = vunpack.c.l.b16 %v418
    %v1435 = vunpack.c.h.b16 %v418
    %v1436 = vunpack.c.l.b16 %v419
    %v1437 = vunpack.c.h.b16 %v419
    %v1438 = vunpack.c.l.b16 %v420
    %v1439 = vunpack.c.h.b16 %v420
    %v1440 = vunpack.c.l.b16 %v421
    %v1441 = vunpack.c.h.b16 %v421
    %v1442 = vunpack.c.l.b16 %v422
    %v1443 = vunpack.c.h.b16 %v422
    %v1444 = vunpack.c.l.b16 %v423
    %v1445 = vunpack.c.h.b16 %v423
    %v1446 = vunpack.c.l.b16 %v424
    %v1447 = vunpack.c.h.b16 %v424
    %v1448 = vunpack.c.l.b16 %v425
    %v1449 = vunpack.c.h.b16 %v425
    %v1450 = vunpack.c.l.b16 %v426
    %v1451 = vunpack.c.h.b16 %v426
    %v1452 = vunpack.c.l.b16 %v427
    %v1453 = vunpack.c.h.b16 %v427
    %v1454 = vunpack.c.l.b16 %v428
    %v1455 = vunpack.c.h.b16 %v428
    %v1456 = vunpack.c.l.b16 %v429
    %v1457 = vunpack.c.h.b16 %v429
    %v1458 = vunpack.c.l.b16 %v430
    %v1459 = vunpack.c.h.b16 %v430
    %v1460 = vunpack.c.l.b16 %v431
    %v1461 = vunpack.c.h.b16 %v431
    %v1462 = vunpack.c.l.b16 %v432
    %v1463 = vunpack.c.h.b16 %v432
    %v1464 = vunpack.c.l.b16 %v433
    %v1465 = vunpack.c.h.b16 %v433
    %v1466 = vunpack.c.l.b16 %v434
    %v1467 = vunpack.c.h.b16 %v434
    %v1468 = vunpack.c.l.b16 %v435
    %v1469 = vunpack.c.h.b16 %v435
    %v1470 = vunpack.c.l.b16 %v436
    %v1471 = vunpack.c.h.b16 %v436
    %v1472 = vunpack.c.l.b16 %v437
    %v1473 = vunpack.c.h.b16 %v437
    %v1474 = vunpack.c.l.b16 %v438
    %v1475 = vunpack.c.h.b16 %v438
    %v1476 = vunpack.c.l.b16 %v439
    %v1477 = vunpack.c.h.b16 %v439
    %v1478 = vunpack.c.l.b16 %v440
    %v1479 = vunpack.c.h.b16 %v440
    %v1480 = vunpack.c.l.b16 %v441
    %v1481 = vunpack.c.h.b16 %v441
    %v1482 = vunpack.c.l.b16 %v442
    %v1483 = vunpack.c.h.b16 %v442
    %v1484 = vunpack.c.l.b16 %v443
    %v1485 = vunpack.c.h.b16 %v443
    %v1486 = vunpack.c.l.b16 %v444
    %v1487 = vunpack.c.h.b16 %v444
    %v1488 = vunpack.c.l.b16 %v445
    %v1489 = vunpack.c.h.b16 %v445
    %v1490 = vunpack.c.l.b16 %v446
    %v1491 = vunpack.c.h.b16 %v446
    %v1492 = vunpack.c.l.b16 %v447
    %v1493 = vunpack.c.h.b16 %v447
    %v1494 = vunpack.c.l.b16 %v448
    %v1495 = vunpack.c.h.b16 %v448
    %v1496 = vunpack.c.l.b16 %v449
    %v1497 = vunpack.c.h.b16 %v449
    %v1498 = vunpack.c.l.b16 %v450
    %v1499 = vunpack.c.h.b16 %v450
    %v1500 = vunpack.c.l.b16 %v451
    %v1501 = vunpack.c.h.b16 %v451
    %v1502 = vunpack.c.l.b16 %v452
    %v1503 = vunpack.c.h.b16 %v452
    %v1504 = vunpack.c.l.b16 %v453
    %v1505 = vunpack.c.h.b16 %v453
    %v1506 = vunpack.c.l.b16 %v454
    %v1507 = vunpack.c.h.b16 %v454
    %v1508 = vunpack.c.l.b16 %v455
    %v1509 = vunpack.c.h.b16 %v455
    %v1510 = vunpack.c.l.b16 %v456
    %v1511 = vunpack.c.h.b16 %v456
    %v1512 = vunpack.c.l.b16 %v457
    %v1513 = vunpack.c.h.b16 %v457
    %v1514 = vunpack.c.l.b16 %v458
    %v1515 = vunpack.c.h.b16 %v458
    %v1516 = vunpack.c.l.b16 %v459
    %v1517 = vunpack.c.h.b16 %v459
    %v1518 = vunpack.c.l.b16 %v460
    %v1519 = vunpack.c.h.b16 %v460
    %v1520 = vunpack.c.l.b16 %v461
    %v1521 = vunpack.c.h.b16 %v461
    %v1522 = vunpack.c.l.b16 %v462
    %v1523 = vunpack.c.h.b16 %v462
    %v1524 = vunpack.c.l.b16 %v463
    %v1525 = vunpack.c.h.b16 %v463
    %v1526 = vunpack.c.l.b16 %v464
    %v1527 = vunpack.c.h.b16 %v464
    %v1528 = vunpack.c.l.b16 %v465
    %v1529 = vunpack.c.h.b16 %v465
    %v1530 = vunpack.c.l.b16 %v466
    %v1531 = vunpack.c.h.b16 %v466
    %v1532 = vunpack.c.l.b16 %v467
    %v1533 = vunpack.c.h.b16 %v467
    %v1534 = vunpack.c.l.b16 %v468
    %v1535 = vunpack.c.h.b16 %v468
    %v1536 = vunpack.c.l.b16 %v469
    %v1537 = vunpack.c.h.b16 %v469
    %v1538 = vunpack.c.l.b16 %v470
    %v1539 = vunpack.c.h.b16 %v470
    %v1540 = vunpack.c.l.b16 %v471
    %v1541 = vunpack.c.h.b16 %v471
    %v1542 = vunpack.c.l.b16 %v472
    %v1543 = vunpack.c.h.b16 %v472
    %v1544 = vunpack.c.l.b16 %v473
    %v1545 = vunpack.c.h.b16 %v473
    %v1546 = vunpack.c.l.b16 %v474
    %v1547 = vunpack.c.h.b16 %v474
    %v1548 = vunpack.c.l.b16 %v475
    %v1549 = vunpack.c.h.b16 %v475
    %v1550 = vunpack.c.l.b16 %v476
    %v1551 = vunpack.c.h.b16 %v476
    %v1552 = vunpack.c.l.b16 %v477
    %v1553 = vunpack.c.h.b16 %v477
    %v1554 = vunpack.c.l.b16 %v478
    %v1555 = vunpack.c.h.b16 %v478
    %v1556 = vunpack.c.l.b16 %v479
    %v1557 = vunpack.c.h.b16 %v479
    %v1558 = vunpack.c.l.b16 %v480
    %v1559 = vunpack.c.h.b16 %v480
    %v1560 = vunpack.c.l.b16 %v481
    %v1561 = vunpack.c.h.b16 %v481
    %v1562 = vunpack.c.l.b16 %v482
    %v1563 = vunpack.c.h.b16 %v482
    %v1564 = vunpack.c.l.b16 %v483
    %v1565 = vunpack.c.h.b16 %v483
    %v1566 = vunpack.c.l.b16 %v484
    %v1567 = vunpack.c.h.b16 %v484
    %v1568 = vunpack.c.l.b16 %v485
    %v1569 = vunpack.c.h.b16 %v485
    %v1570 = vunpack.c.l.b16 %v486
    %v1571 = vunpack.c.h.b16 %v486
    %v1572 = vunpack.c.l.b16 %v487
    %v1573 = vunpack.c.h.b16 %v487
    %v1574 = vunpack.c.l.b16 %v488
    %v1575 = vunpack.c.h.b16 %v488
    %v1576 = vunpack.c.l.b16 %v489
    %v1577 = vunpack.c.h.b16 %v489
    %v1578 = vunpack.c.l.b16 %v490
    %v1579 = vunpack.c.h.b16 %v490
    %v1580 = vunpack.c.l.b16 %v491
    %v1581 = vunpack.c.h.b16 %v491
    %v1582 = vunpack.c.l.b16 %v492
    %v1583 = vunpack.c.h.b16 %v492
    %v1584 = vunpack.c.l.b16 %v493
    %v1585 = vunpack.c.h.b16 %v493
    %v1586 = vunpack.c.l.b16 %v494
    %v1587 = vunpack.c.h.b16 %v494
    %v1588 = vunpack.c.l.b16 %v495
    %v1589 = vunpack.c.h.b16 %v495
    %v1590 = vunpack.c.l.b16 %v496
    %v1591 = vunpack.c.h.b16 %v496
    %v1592 = vunpack.c.l.b16 %v497
    %v1593 = vunpack.c.h.b16 %v497
    %v1594 = vunpack.c.l.b16 %v498
    %v1595 = vunpack.c.h.b16 %v498
    %v1596 = vunpack.c.l.b16 %v499
    %v1597 = vunpack.c.h.b16 %v499
    %v1598 = vunpack.c.l.b16 %v500
    %v1599 = vunpack.c.h.b16 %v500
    %v1600 = vunpack.c.l.b16 %v501
    %v1601 = vunpack.c.h.b16 %v501
    %v1602 = vunpack.c.l.b16 %v502
    %v1603 = vunpack.c.h.b16 %v502
    %v1604 = vunpack.c.l.b16 %v503
    %v1605 = vunpack.c.h.b16 %v503
    %v1606 = vunpack.c.l.b16 %v504
    %v1607 = vunpack.c.h.b16 %v504
    %v1608 = vunpack.c.l.b16 %v505
    %v1609 = vunpack.c.h.b16 %v505
    %v1610 = vunpack.c.l.b16 %v506
    %v1611 = vunpack.c.h.b16 %v506
    %v1612 = vunpack.c.l.b16 %v507
    %v1613 = vunpack.c.h.b16 %v507
    %v1614 = vunpack.c.l.b16 %v508
    %v1615 = vunpack.c.h.b16 %v508
    %v1616 = vunpack.c.l.b16 %v509
    %v1617 = vunpack.c.h.b16 %v509
    %v1618 = vunpack.c.l.b16 %v510
    %v1619 = vunpack.c.h.b16 %v510
    %v1620 = vunpack.c.l.b16 %v511
    %v1621 = vunpack.c.h.b16 %v511
    %v1622 = vunpack.c.l.b16 %v512
    %v1623 = vunpack.c.h.b16 %v512
    %v1624 = vunpack.c.l.b16 %v513
    %v1625 = vunpack.c.h.b16 %v513
    %v1626 = vunpack.c.l.b16 %v514
    %v1627 = vunpack.c.h.b16 %v514
    %v1628 = vunpack.c.l.b16 %v515
    %v1629 = vunpack.c.h.b16 %v515
    %v1630 = vunpack.c.l.b16 %v516
    %v1631 = vunpack.c.h.b16 %v516
    %v1632 = vunpack.c.l.b16 %v517
    %v1633 = vunpack.c.h.b16 %v517
    %v1634 = vunpack.c.l.b16 %v518
    %v1635 = vunpack.c.h.b16 %v518
    %v1636 = vunpack.c.l.b16 %v519
    %v1637 = vunpack.c.h.b16 %v519
    %v1638 = vunpack.c.l.b16 %v520
    %v1639 = vunpack.c.h.b16 %v520
    %v1640 = vunpack.c.l.b16 %v521
    %v1641 = vunpack.c.h.b16 %v521
    %v1642 = vunpack.c.l.b16 %v522
    %v1643 = vunpack.c.h.b16 %v522
    %v1644 = vunpack.c.l.b16 %v523
    %v1645 = vunpack.c.h.b16 %v523
    %v1646 = vunpack.c.l.b16 %v524
    %v1647 = vunpack.c.h.b16 %v524
    %v1648 = vunpack.c.l.b16 %v525
    %v1649 = vunpack.c.h.b16 %v525
    %v1650 = vunpack.c.l.b16 %v526
    %v1651 = vunpack.c.h.b16 %v526
    %v1652 = vunpack.c.l.b16 %v527
    %v1653 = vunpack.c.h.b16 %v527
    %v1654 = vunpack.c.l.b16 %v528
    %v1655 = vunpack.c.h.b16 %v528
    %v1656 = vunpack.c.l.b16 %v529
    %v1657 = vunpack.c.h.b16 %v529
    %v1658 = vunpack.c.l.b16 %v530
    %v1659 = vunpack.c.h.b16 %v530
    %v1660 = vunpack.c.l.b16 %v531
    %v1661 = vunpack.c.h.b16 %v531
    %v1662 = vunpack.c.l.b16 %v532
    %v1663 = vunpack.c.h.b16 %v532
    %v1664 = vunpack.c.l.b16 %v533
    %v1665 = vunpack.c.h.b16 %v533
    %v1666 = vunpack.c.l.b16 %v534
    %v1667 = vunpack.c.h.b16 %v534
    %v1668 = vunpack.c.l.b16 %v535
    %v1669 = vunpack.c.h.b16 %v535
    %v1670 = vunpack.c.l.b16 %v536
    %v1671 = vunpack.c.h.b16 %v536
    %v1672 = vunpack.c.l.b16 %v537
    %v1673 = vunpack.c.h.b16 %v537
    %v1674 = vunpack.c.l.b16 %v538
    %v1675 = vunpack.c.h.b16 %v538
    %v1676 = vunpack.c.l.b16 %v539
    %v1677 = vunpack.c.h.b16 %v539
    %v1678 = vunpack.c.l.b16 %v540
    %v1679 = vunpack.c.h.b16 %v540
    %v1680 = vunpack.c.l.b16 %v541
    %v1681 = vunpack.c.h.b16 %v541
    %v1682 = vunpack.c.l.b16 %v542
    %v1683 = vunpack.c.h.b16 %v542
    %v1684 = vunpack.c.l.b16 %v543
    %v1685 = vunpack.c.h.b16 %v543
    %v1686 = vunpack.c.l.b16 %v544
    %v1687 = vunpack.c.h.b16 %v544
    %v1688 = vunpack.c.l.b16 %v545
    %v1689 = vunpack.c.h.b16 %v545
    %v1690 = vunpack.c.l.b16 %v546
    %v1691 = vunpack.c.h.b16 %v546
    %v1692 = vunpack.c.l.b16 %v547
    %v1693 = vunpack.c.h.b16 %v547
    %v1694 = vunpack.c.l.b16 %v548
    %v1695 = vunpack.c.h.b16 %v548
    %v1696 = vunpack.c.l.b16 %v549
    %v1697 = vunpack.c.h.b16 %v549
    %v1698 = vunpack.c.l.b16 %v550
    %v1699 = vunpack.c.h.b16 %v550
    %v1700 = vunpack.c.l.b16 %v551
    %v1701 = vunpack.c.h.b16 %v551
    %v1702 = vunpack.c.l.b16 %v552
    %v1703 = vunpack.c.h.b16 %v552
    %v1704 = vunpack.c.l.b16 %v553
    %v1705 = vunpack.c.h.b16 %v553
    %v1706 = vunpack.c.l.b16 %v554
    %v1707 = vunpack.c.h.b16 %v554
    %v1708 = vunpack.c.l.b16 %v555
    %v1709 = vunpack.c.h.b16 %v555
    %v1710 = vunpack.c.l.b16 %v556
    %v1711 = vunpack.c.h.b16 %v556
    %v1712 = vunpack.c.l.b16 %v557
    %v1713 = vunpack.c.h.b16 %v557
    %v1714 = vunpack.c.l.b16 %v558
    %v1715 = vunpack.c.h.b16 %v558
    %v1716 = vunpack.c.l.b16 %v559
    %v1717 = vunpack.c.h.b16 %v559
    %v1718 = vpack.c.b16 %v952, %v950
    %v1719 = vpack.c.b16 %v953, %v951
    %v1720 = vpack.c.b16 %v956, %v954
    %v1721 = vpack.c.b16 %v957, %v955
    %v1722 = vpack.c.b16 %v960, %v958
    %v1723 = vpack.c.b16 %v961, %v959
    %v1724 = vpack.c.b16 %v964, %v962
    %v1725 = vpack.c.b16 %v965, %v963
    %v1726 = vpack.c.b16 %v968, %v966
    %v1727 = vpack.c.b16 %v969, %v967
    %v1728 = vpack.c.b16 %v972, %v970
    %v1729 = vpack.c.b16 %v973, %v971
    %v1730 = vpack.c.b16 %v976, %v974
    %v1731 = vpack.c.b16 %v977, %v975
    %v1732 = vpack.c.b16 %v980, %v978
    %v1733 = vpack.c.b16 %v981, %v979
    %v1734 = vpack.c.b16 %v984, %v982
    %v1735 = vpack.c.b16 %v985, %v983
    %v1736 = vpack.c.b16 %v988, %v986
    %v1737 = vpack.c.b16 %v989, %v987
    %v1738 = vpack.c.b16 %v992, %v990
    %v1739 = vpack.c.b16 %v993, %v991
    %v1740 = vpack.c.b16 %v996, %v994
    %v1741 = vpack.c.b16 %v997, %v995
    %v1742 = vpack.c.b16 %v1000, %v998
    %v1743 = vpack.c.b16 %v1001, %v999
    %v1744 = vpack.c.b16 %v1004, %v1002
    %v1745 = vpack.c.b16 %v1005, %v1003
    %v1746 = vpack.c.b16 %v1008, %v1006
    %v1747 = vpack.c.b16 %v1009, %v1007
    %v1748 = vpack.c.b16 %v1012, %v1010
    %v1749 = vpack.c.b16 %v1013, %v1011
    %v1750 = vpack.c.b16 %v1016, %v1014
    %v1751 = vpack.c.b16 %v1017, %v1015
    %v1752 = vpack.c.b16 %v1020, %v1018
    %v1753 = vpack.c.b16 %v1021, %v1019
    %v1754 = vpack.c.b16 %v1024, %v1022
    %v1755 = vpack.c.b16 %v1025, %v1023
    %v1756 = vpack.c.b16 %v1028, %v1026
    %v1757 = vpack.c.b16 %v1029, %v1027
    %v1758 = vpack.c.b16 %v1032, %v1030
    %v1759 = vpack.c.b16 %v1033, %v1031
    %v1760 = vpack.c.b16 %v1036, %v1034
    %v1761 = vpack.c.b16 %v1037, %v1035
    %v1762 = vpack.c.b16 %v1040, %v1038
    %v1763 = vpack.c.b16 %v1041, %v1039
    %v1764 = vpack.c.b16 %v1044, %v1042
    %v1765 = vpack.c.b16 %v1045, %v1043
    %v1766 = vpack.c.b16 %v1048, %v1046
    %v1767 = vpack.c.b16 %v1049, %v1047
    %v1768 = vpack.c.b16 %v1052, %v1050
    %v1769 = vpack.c.b16 %v1053, %v1051
    %v1770 = vpack.c.b16 %v1056, %v1054
    %v1771 = vpack.c.b16 %v1057, %v1055
    %v1772 = vpack.c.b16 %v1060, %v1058
    %v1773 = vpack.c.b16 %v1061, %v1059
    %v1774 = vpack.c.b16 %v1064, %v1062
    %v1775 = vpack.c.b16 %v1065, %v1063
    %v1776 = vpack.c.b16 %v1068, %v1066
    %v1777 = vpack.c.b16 %v1069, %v1067
    %v1778 = vpack.c.b16 %v1072, %v1070
    %v1779 = vpack.c.b16 %v1073, %v1071
    %v1780 = vpack.c.b16 %v1076, %v1074
    %v1781 = vpack.c.b16 %v1077, %v1075
    %v1782 = vpack.c.b16 %v1080, %v1078
    %v1783 = vpack.c.b16 %v1081, %v1079
    %v1784 = vpack.c.b16 %v1084, %v1082
    %v1785 = vpack.c.b16 %v1085, %v1083
    %v1786 = vpack.c.b16 %v1088, %v1086
    %v1787 = vpack.c.b16 %v1089, %v1087
    %v1788 = vpack.c.b16 %v1092, %v1090
    %v1789 = vpack.c.b16 %v1093, %v1091
    %v1790 = vpack.c.b16 %v1096, %v1094
    %v1791 = vpack.c.b16 %v1097, %v1095
    %v1792 = vpack.c.b16 %v1100, %v1098
    %v1793 = vpack.c.b16 %v1101, %v1099
    %v1794 = vpack.c.b16 %v1104, %v1102
    %v1795 = vpack.c.b16 %v1105, %v1103
    %v1796 = vpack.c.b16 %v1108, %v1106
    %v1797 = vpack.c.b16 %v1109, %v1107
    %v1798 = vpack.c.b16 %v1112, %v1110
    %v1799 = vpack.c.b16 %v1113, %v1111
    %v1800 = vpack.c.b16 %v1116, %v1114
    %v1801 = vpack.c.b16 %v1117, %v1115
    %v1802 = vpack.c.b16 %v1120, %v1118
    %v1803 = vpack.c.b16 %v1121, %v1119
    %v1804 = vpack.c.b16 %v1124, %v1122
    %v1805 = vpack.c.b16 %v1125, %v1123
    %v1806 = vpack.c.b16 %v1128, %v1126
    %v1807 = vpack.c.b16 %v1129, %v1127
    %v1808 = vpack.c.b16 %v1132, %v1130
    %v1809 = vpack.c.b16 %v1133, %v1131
    %v1810 = vpack.c.b16 %v1136, %v1134
    %v1811 = vpack.c.b16 %v1137, %v1135
    %v1812 = vpack.c.b16 %v1140, %v1138
    %v1813 = vpack.c.b16 %v1141, %v1139
    %v1814 = vpack.c.b16 %v1144, %v1142
    %v1815 = vpack.c.b16 %v1145, %v1143
    %v1816 = vpack.c.b16 %v1148, %v1146
    %v1817 = vpack.c.b16 %v1149, %v1147
    %v1818 = vpack.c.b16 %v1152, %v1150
    %v1819 = vpack.c.b16 %v1153, %v1151
    %v1820 = vpack.c.b16 %v1156, %v1154
    %v1821 = vpack.c.b16 %v1157, %v1155
    %v1822 = vpack.c.b16 %v1160, %v1158
    %v1823 = vpack.c.b16 %v1161, %v1159
    %v1824 = vpack.c.b16 %v1164, %v1162
    %v1825 = vpack.c.b16 %v1165, %v1163
    %v1826 = vpack.c.b16 %v1168, %v1166
    %v1827 = vpack.c.b16 %v1169, %v1167
    %v1828 = vpack.c.b16 %v1172, %v1170
    %v1829 = vpack.c.b16 %v1173, %v1171
    %v1830 = vpack.c.b16 %v1176, %v1174
    %v1831 = vpack.c.b16 %v1177, %v1175
    %v1832 = vpack.c.b16 %v1180, %v1178
    %v1833 = vpack.c.b16 %v1181, %v1179
    %v1834 = vpack.c.b16 %v1184, %v1182
    %v1835 = vpack.c.b16 %v1185, %v1183
    %v1836 = vpack.c.b16 %v1188, %v1186
    %v1837 = vpack.c.b16 %v1189, %v1187
    %v1838 = vpack.c.b16 %v1192, %v1190
    %v1839 = vpack.c.b16 %v1193, %v1191
    %v1840 = vpack.c.b16 %v1196, %v1194
    %v1841 = vpack.c.b16 %v1197, %v1195
    %v1842 = vpack.c.b16 %v1200, %v1198
    %v1843 = vpack.c.b16 %v1201, %v1199
    %v1844 = vpack.c.b16 %v1204, %v1202
    %v1845 = vpack.c.b16 %v1205, %v1203
    %v1846 = vpack.c.b16 %v1208, %v1206
    %v1847 = vpack.c.b16 %v1209, %v1207
    %v1848 = vpack.c.b16 %v1212, %v1210
    %v1849 = vpack.c.b16 %v1213, %v1211
    %v1850 = vpack.c.b16 %v1216, %v1214
    %v1851 = vpack.c.b16 %v1217, %v1215
    %v1852 = vpack.c.b16 %v1220, %v1218
    %v1853 = vpack.c.b16 %v1221, %v1219
    %v1854 = vpack.c.b16 %v1224, %v1222
    %v1855 = vpack.c.b16 %v1225, %v1223
    %v1856 = vpack.c.b16 %v1228, %v1226
    %v1857 = vpack.c.b16 %v1229, %v1227
    %v1858 = vpack.c.b16 %v1232, %v1230
    %v1859 = vpack.c.b16 %v1233, %v1231
    %v1860 = vpack.c.b16 %v1236, %v1234
    %v1861 = vpack.c.b16 %v1237, %v1235
    %v1862 = vpack.c.b16 %v1240, %v1238
    %v1863 = vpack.c.b16 %v1241, %v1239
    %v1864 = vpack.c.b16 %v1244, %v1242
    %v1865 = vpack.c.b16 %v1245, %v1243
    %v1866 = vpack.c.b16 %v1248, %v1246
    %v1867 = vpack.c.b16 %v1249, %v1247
    %v1868 = vpack.c.b16 %v1252, %v1250
    %v1869 = vpack.c.b16 %v1253, %v1251
    %v1870 = vpack.c.b16 %v1256, %v1254
    %v1871 = vpack.c.b16 %v1257, %v1255
    %v1872 = vpack.c.b16 %v1260, %v1258
    %v1873 = vpack.c.b16 %v1261, %v1259
    %v1874 = vpack.c.b16 %v1264, %v1262
    %v1875 = vpack.c.b16 %v1265, %v1263
    %v1876 = vpack.c.b16 %v1268, %v1266
    %v1877 = vpack.c.b16 %v1269, %v1267
    %v1878 = vpack.c.b16 %v1272, %v1270
    %v1879 = vpack.c.b16 %v1273, %v1271
    %v1880 = vpack.c.b16 %v1276, %v1274
    %v1881 = vpack.c.b16 %v1277, %v1275
    %v1882 = vpack.c.b16 %v1280, %v1278
    %v1883 = vpack.c.b16 %v1281, %v1279
    %v1884 = vpack.c.b16 %v1284, %v1282
    %v1885 = vpack.c.b16 %v1285, %v1283
    %v1886 = vpack.c.b16 %v1288, %v1286
    %v1887 = vpack.c.b16 %v1289, %v1287
    %v1888 = vpack.c.b16 %v1292, %v1290
    %v1889 = vpack.c.b16 %v1293, %v1291
    %v1890 = vpack.c.b16 %v1296, %v1294
    %v1891 = vpack.c.b16 %v1297, %v1295
    %v1892 = vpack.c.b16 %v1300, %v1298
    %v1893 = vpack.c.b16 %v1301, %v1299
    %v1894 = vpack.c.b16 %v1304, %v1302
    %v1895 = vpack.c.b16 %v1305, %v1303
    %v1896 = vpack.c.b16 %v1308, %v1306
    %v1897 = vpack.c.b16 %v1309, %v1307
    %v1898 = vpack.c.b16 %v1312, %v1310
    %v1899 = vpack.c.b16 %v1313, %v1311
    %v1900 = vpack.c.b16 %v1316, %v1314
    %v1901 = vpack.c.b16 %v1317, %v1315
    %v1902 = vpack.c.b16 %v1320, %v1318
    %v1903 = vpack.c.b16 %v1321, %v1319
    %v1904 = vpack.c.b16 %v1324, %v1322
    %v1905 = vpack.c.b16 %v1325, %v1323
    %v1906 = vpack.c.b16 %v1328, %v1326
    %v1907 = vpack.c.b16 %v1329, %v1327
    %v1908 = vpack.c.b16 %v1332, %v1330
    %v1909 = vpack.c.b16 %v1333, %v1331
    %v1910 = vpack.c.b16 %v1336, %v1334
    %v1911 = vpack.c.b16 %v1337, %v1335
    %v1912 = vpack.c.b16 %v1340, %v1338
    %v1913 = vpack.c.b16 %v1341, %v1339
    %v1914 = vpack.c.b16 %v1344, %v1342
    %v1915 = vpack.c.b16 %v1345, %v1343
    %v1916 = vpack.c.b16 %v1348, %v1346
    %v1917 = vpack.c.b16 %v1349, %v1347
    %v1918 = vpack.c.b16 %v1352, %v1350
    %v1919 = vpack.c.b16 %v1353, %v1351
    %v1920 = vpack.c.b16 %v1356, %v1354
    %v1921 = vpack.c.b16 %v1357, %v1355
    %v1922 = vpack.c.b16 %v1360, %v1358
    %v1923 = vpack.c.b16 %v1361, %v1359
    %v1924 = vpack.c.b16 %v1364, %v1362
    %v1925 = vpack.c.b16 %v1365, %v1363
    %v1926 = vpack.c.b16 %v1368, %v1366
    %v1927 = vpack.c.b16 %v1369, %v1367
    %v1928 = vpack.c.b16 %v1372, %v1370
    %v1929 = vpack.c.b16 %v1373, %v1371
    %v1930 = vpack.c.b16 %v1376, %v1374
    %v1931 = vpack.c.b16 %v1377, %v1375
    %v1932 = vpack.c.b16 %v1380, %v1378
    %v1933 = vpack.c.b16 %v1381, %v1379
    %v1934 = vpack.c.b16 %v1384, %v1382
    %v1935 = vpack.c.b16 %v1385, %v1383
    %v1936 = vpack.c.b16 %v1388, %v1386
    %v1937 = vpack.c.b16 %v1389, %v1387
    %v1938 = vpack.c.b16 %v1392, %v1390
    %v1939 = vpack.c.b16 %v1393, %v1391
    %v1940 = vpack.c.b16 %v1396, %v1394
    %v1941 = vpack.c.b16 %v1397, %v1395
    %v1942 = vpack.c.b16 %v1400, %v1398
    %v1943 = vpack.c.b16 %v1401, %v1399
    %v1944 = vpack.c.b16 %v1404, %v1402
    %v1945 = vpack.c.b16 %v1405, %v1403
    %v1946 = vpack.c.b16 %v1408, %v1406
    %v1947 = vpack.c.b16 %v1409, %v1407
    %v1948 = vpack.c.b16 %v1412, %v1410
    %v1949 = vpack.c.b16 %v1413, %v1411
    %v1950 = vpack.c.b16 %v1416, %v1414
    %v1951 = vpack.c.b16 %v1417, %v1415
    %v1952 = vpack.c.b16 %v1420, %v1418
    %v1953 = vpack.c.b16 %v1421, %v1419
    %v1954 = vpack.c.b16 %v1424, %v1422
    %v1955 = vpack.c.b16 %v1425, %v1423
    %v1956 = vpack.c.b16 %v1428, %v1426
    %v1957 = vpack.c.b16 %v1429, %v1427
    %v1958 = vpack.c.b16 %v1432, %v1430
    %v1959 = vpack.c.b16 %v1433, %v1431
    %v1960 = vpack.c.b16 %v1436, %v1434
    %v1961 = vpack.c.b16 %v1437, %v1435
    %v1962 = vpack.c.b16 %v1440, %v1438
    %v1963 = vpack.c.b16 %v1441, %v1439
    %v1964 = vpack.c.b16 %v1444, %v1442
    %v1965 = vpack.c.b16 %v1445, %v1443
    %v1966 = vpack.c.b16 %v1448, %v1446
    %v1967 = vpack.c.b16 %v1449, %v1447
    %v1968 = vpack.c.b16 %v1452, %v1450
    %v1969 = vpack.c.b16 %v1453, %v1451
    %v1970 = vpack.c.b16 %v1456, %v1454
    %v1971 = vpack.c.b16 %v1457, %v1455
    %v1972 = vpack.c.b16 %v1460, %v1458
    %v1973 = vpack.c.b16 %v1461, %v1459
    %v1974 = vpack.c.b16 %v1464, %v1462
    %v1975 = vpack.c.b16 %v1465, %v1463
    %v1976 = vpack.c.b16 %v1468, %v1466
    %v1977 = vpack.c.b16 %v1469, %v1467
    %v1978 = vpack.c.b16 %v1472, %v1470
    %v1979 = vpack.c.b16 %v1473, %v1471
    %v1980 = vpack.c.b16 %v1476, %v1474
    %v1981 = vpack.c.b16 %v1477, %v1475
    %v1982 = vpack.c.b16 %v1480, %v1478
    %v1983 = vpack.c.b16 %v1481, %v1479
    %v1984 = vpack.c.b16 %v1484, %v1482
    %v1985 = vpack.c.b16 %v1485, %v1483
    %v1986 = vpack.c.b16 %v1488, %v1486
    %v1987 = vpack.c.b16 %v1489, %v1487
    %v1988 = vpack.c.b16 %v1492, %v1490
    %v1989 = vpack.c.b16 %v1493, %v1491
    %v1990 = vpack.c.b16 %v1496, %v1494
    %v1991 = vpack.c.b16 %v1497, %v1495
    %v1992 = vpack.c.b16 %v1500, %v1498
    %v1993 = vpack.c.b16 %v1501, %v1499
    %v1994 = vpack.c.b16 %v1504, %v1502
    %v1995 = vpack.c.b16 %v1505, %v1503
    %v1996 = vpack.c.b16 %v1508, %v1506
    %v1997 = vpack.c.b16 %v1509, %v1507
    %v1998 = vpack.c.b16 %v1512, %v1510
    %v1999 = vpack.c.b16 %v1513, %v1511
    %v2000 = vpack.c.b16 %v1516, %v1514
    %v2001 = vpack.c.b16 %v1517, %v1515
    %v2002 = vpack.c.b16 %v1520, %v1518
    %v2003 = vpack.c.b16 %v1521, %v1519
    %v2004 = vpack.c.b16 %v1524, %v1522
    %v2005 = vpack.c.b16 %v1525, %v1523
    %v2006 = vpack.c.b16 %v1528, %v1526
    %v2007 = vpack.c.b16 %v1529, %v1527
    %v2008 = vpack.c.b16 %v1532, %v1530
    %v2009 = vpack.c.b16 %v1533, %v1531
    %v2010 = vpack.c.b16 %v1536, %v1534
    %v2011 = vpack.c.b16 %v1537, %v1535
    %v2012 = vpack.c.b16 %v1540, %v1538
    %v2013 = vpack.c.b16 %v1541, %v1539
    %v2014 = vpack.c.b16 %v1544, %v1542
    %v2015 = vpack.c.b16 %v1545, %v1543
    %v2016 = vpack.c.b16 %v1548, %v1546
    %v2017 = vpack.c.b16 %v1549, %v1547
    %v2018 = vpack.c.b16 %v1552, %v1550
    %v2019 = vpack.c.b16 %v1553, %v1551
    %v2020 = vpack.c.b16 %v1556, %v1554
    %v2021 = vpack.c.b16 %v1557, %v1555
    %v2022 = vpack.c.b16 %v1560, %v1558
    %v2023 = vpack.c.b16 %v1561, %v1559
    %v2024 = vpack.c.b16 %v1564, %v1562
    %v2025 = vpack.c.b16 %v1565, %v1563
    %v2026 = vpack.c.b16 %v1568, %v1566
    %v2027 = vpack.c.b16 %v1569, %v1567
    %v2028 = vpack.c.b16 %v1572, %v1570
    %v2029 = vpack.c.b16 %v1573, %v1571
    %v2030 = vpack.c.b16 %v1576, %v1574
    %v2031 = vpack.c.b16 %v1577, %v1575
    %v2032 = vpack.c.b16 %v1580, %v1578
    %v2033 = vpack.c.b16 %v1581, %v1579
    %v2034 = vpack.c.b16 %v1584, %v1582
    %v2035 = vpack.c.b16 %v1585, %v1583
    %v2036 = vpack.c.b16 %v1588, %v1586
    %v2037 = vpack.c.b16 %v1589, %v1587
    %v2038 = vpack.c.b16 %v1592, %v1590
    %v2039 = vpack.c.b16 %v1593, %v1591
    %v2040 = vpack.c.b16 %v1596, %v1594
    %v2041 = vpack.c.b16 %v1597, %v1595
    %v2042 = vpack.c.b16 %v1600, %v1598
    %v2043 = vpack.c.b16 %v1601, %v1599
    %v2044 = vpack.c.b16 %v1604, %v1602
    %v2045 = vpack.c.b16 %v1605, %v1603
    %v2046 = vpack.c.b16 %v1608, %v1606
    %v2047 = vpack.c.b16 %v1609, %v1607
    %v2048 = vpack.c.b16 %v1612, %v1610
    %v2049 = vpack.c.b16 %v1613, %v1611
    %v2050 = vpack.c.b16 %v1616, %v1614
    %v2051 = vpack.c.b16 %v1617, %v1615
    %v2052 = vpack.c.b16 %v1620, %v1618
    %v2053 = vpack.c.b16 %v1621, %v1619
    %v2054 = vpack.c.b16 %v1624, %v1622
    %v2055 = vpack.c.b16 %v1625, %v1623
    %v2056 = vpack.c.b16 %v1628, %v1626
    %v2057 = vpack.c.b16 %v1629, %v1627
    %v2058 = vpack.c.b16 %v1632, %v1630
    %v2059 = vpack.c.b16 %v1633, %v1631
    %v2060 = vpack.c.b16 %v1636, %v1634
    %v2061 = vpack.c.b16 %v1637, %v1635
    %v2062 = vpack.c.b16 %v1640, %v1638
    %v2063 = vpack.c.b16 %v1641, %v1639
    %v2064 = vpack.c.b16 %v1644, %v1642
    %v2065 = vpack.c.b16 %v1645, %v1643
    %v2066 = vpack.c.b16 %v1648, %v1646
    %v2067 = vpack.c.b16 %v1649, %v1647
    %v2068 = vpack.c.b16 %v1652, %v1650
    %v2069 = vpack.c.b16 %v1653, %v1651
    %v2070 = vpack.c.b16 %v1656, %v1654
    %v2071 = vpack.c.b16 %v1657, %v1655
    %v2072 = vpack.c.b16 %v1660, %v1658
    %v2073 = vpack.c.b16 %v1661, %v1659
    %v2074 = vpack.c.b16 %v1664, %v1662
    %v2075 = vpack.c.b16 %v1665, %v1663
    %v2076 = vpack.c.b16 %v1668, %v1666
    %v2077 = vpack.c.b16 %v1669, %v1667
    %v2078 = vpack.c.b16 %v1672, %v1670
    %v2079 = vpack.c.b16 %v1673, %v1671
    %v2080 = vpack.c.b16 %v1676, %v1674
    %v2081 = vpack.c.b16 %v1677, %v1675
    %v2082 = vpack.c.b16 %v1680, %v1678
    %v2083 = vpack.c.b16 %v1681, %v1679
    %v2084 = vpack.c.b16 %v1684, %v1682
    %v2085 = vpack.c.b16 %v1685, %v1683
    %v2086 = vpack.c.b16 %v1688, %v1686
    %v2087 = vpack.c.b16 %v1689, %v1687
    %v2088 = vpack.c.b16 %v1692, %v1690
    %v2089 = vpack.c.b16 %v1693, %v1691
    %v2090 = vpack.c.b16 %v1696, %v1694
    %v2091 = vpack.c.b16 %v1697, %v1695
    %v2092 = vpack.c.b16 %v1700, %v1698
    %v2093 = vpack.c.b16 %v1701, %v1699
    %v2094 = vpack.c.b16 %v1704, %v1702
    %v2095 = vpack.c.b16 %v1705, %v1703
    %v2096 = vpack.c.b16 %v1708, %v1706
    %v2097 = vpack.c.b16 %v1709, %v1707
    %v2098 = vpack.c.b16 %v1712, %v1710
    %v2099 = vpack.c.b16 %v1713, %v1711
    %v2100 = vpack.c.b16 %v1716, %v1714
    %v2101 = vpack.c.b16 %v1717, %v1715
    %2486 = vmatpush.bf16.msra.mxu0 %v1732
    %2487 = vmatpush.bf16.msra.mxu0 %v1730
    %2488 = vmatpush.bf16.msra.mxu0 %v1728
    %2489 = vmatpush.bf16.msra.mxu0 %v1726
    %2490 = vmatpush.bf16.msra.mxu0 %v1724
    %2491 = vmatpush.bf16.msra.mxu0 %v1722
    %2492 = vmatpush.bf16.msra.mxu0 %v1720
    %2493 = vmatpush.bf16.msra.mxu0 %v1718
    %2494 = vmatmul.bf16.gmra.mxu0 %v152
    %v2495 = vpop.f32.mrf.mxu0
    %v2496 = vadd.f32 %v562, %v2495
    %v2497 = vpop.f32.mrf.mxu0
    %2498 = vdwg.mxu0
    %2499 = vmatpush.bf16.msra.mxu0 %v1748
    %2500 = vmatpush.bf16.msra.mxu0 %v1746
    %2501 = vmatpush.bf16.msra.mxu0 %v1744
    %2502 = vmatpush.bf16.msra.mxu0 %v1742
    %2503 = vmatpush.bf16.msra.mxu0 %v1740
    %2504 = vmatpush.bf16.msra.mxu0 %v1738
    %2505 = vmatpush.bf16.msra.mxu0 %v1736
    %2506 = vmatpush.bf16.msra.mxu0 %v1734
    %2507 = vmatmul.bf16.gmra.mxu0 %v153
    %v2508 = vpop.f32.mrf.mxu0
    %v2509 = vadd.f32 %v2496, %v2508
    %v2510 = vpop.f32.mrf.mxu0
    %2511 = vdwg.mxu0
    %2512 = vmatpush.bf16.msra.mxu0 %v1764
    %2513 = vmatpush.bf16.msra.mxu0 %v1762
    %2514 = vmatpush.bf16.msra.mxu0 %v1760
    %2515 = vmatpush.bf16.msra.mxu0 %v1758
    %2516 = vmatpush.bf16.msra.mxu0 %v1756
    %2517 = vmatpush.bf16.msra.mxu0 %v1754
    %2518 = vmatpush.bf16.msra.mxu0 %v1752
    %2519 = vmatpush.bf16.msra.mxu0 %v1750
    %2520 = vmatmul.bf16.gmra.mxu0 %v154
    %v2521 = vpop.f32.mrf.mxu0
    %v2522 = vadd.f32 %v2509, %v2521
    %v2523 = vpop.f32.mrf.mxu0
    %2524 = vdwg.mxu0
    %2525 = vmatpush.bf16.msra.mxu0 %v1780
    %2526 = vmatpush.bf16.msra.mxu0 %v1778
    %2527 = vmatpush.bf16.msra.mxu0 %v1776
    %2528 = vmatpush.bf16.msra.mxu0 %v1774
    %2529 = vmatpush.bf16.msra.mxu0 %v1772
    %2530 = vmatpush.bf16.msra.mxu0 %v1770
    %2531 = vmatpush.bf16.msra.mxu0 %v1768
    %2532 = vmatpush.bf16.msra.mxu0 %v1766
    %2533 = vmatmul.bf16.gmra.mxu0 %v155
    %v2534 = vpop.f32.mrf.mxu0
    %v2535 = vadd.f32 %v2522, %v2534
    %v2536 = vpop.f32.mrf.mxu0
    %2537 = vdwg.mxu0
    %2538 = vmatpush.bf16.msra.mxu0 %v1796
    %2539 = vmatpush.bf16.msra.mxu0 %v1794
    %2540 = vmatpush.bf16.msra.mxu0 %v1792
    %2541 = vmatpush.bf16.msra.mxu0 %v1790
    %2542 = vmatpush.bf16.msra.mxu0 %v1788
    %2543 = vmatpush.bf16.msra.mxu0 %v1786
    %2544 = vmatpush.bf16.msra.mxu0 %v1784
    %2545 = vmatpush.bf16.msra.mxu0 %v1782
    %2546 = vmatmul.bf16.gmra.mxu0 %v156
    %v2547 = vpop.f32.mrf.mxu0
    %v2548 = vadd.f32 %v2535, %v2547
    %v2549 = vpop.f32.mrf.mxu0
    %2550 = vdwg.mxu0
    %2551 = vmatpush.bf16.msra.mxu0 %v1812
    %2552 = vmatpush.bf16.msra.mxu0 %v1810
    %2553 = vmatpush.bf16.msra.mxu0 %v1808
    %2554 = vmatpush.bf16.msra.mxu0 %v1806
    %2555 = vmatpush.bf16.msra.mxu0 %v1804
    %2556 = vmatpush.bf16.msra.mxu0 %v1802
    %2557 = vmatpush.bf16.msra.mxu0 %v1800
    %2558 = vmatpush.bf16.msra.mxu0 %v1798
    %2559 = vmatmul.bf16.gmra.mxu0 %v157
    %v2560 = vpop.f32.mrf.mxu0
    %v2561 = vadd.f32 %v2548, %v2560
    %v2562 = vpop.f32.mrf.mxu0
    %2563 = vdwg.mxu0
    %2564 = vmatpush.bf16.msra.mxu0 %v1828
    %2565 = vmatpush.bf16.msra.mxu0 %v1826
    %2566 = vmatpush.bf16.msra.mxu0 %v1824
    %2567 = vmatpush.bf16.msra.mxu0 %v1822
    %2568 = vmatpush.bf16.msra.mxu0 %v1820
    %2569 = vmatpush.bf16.msra.mxu0 %v1818
    %2570 = vmatpush.bf16.msra.mxu0 %v1816
    %2571 = vmatpush.bf16.msra.mxu0 %v1814
    %2572 = vmatmul.bf16.gmra.mxu0 %v158
    %v2573 = vpop.f32.mrf.mxu0
    %v2574 = vadd.f32 %v2561, %v2573
    %v2575 = vpop.f32.mrf.mxu0
    %2576 = vdwg.mxu0
    %2577 = vmatpush.bf16.msra.mxu0 %v1844
    %2578 = vmatpush.bf16.msra.mxu0 %v1842
    %2579 = vmatpush.bf16.msra.mxu0 %v1840
    %2580 = vmatpush.bf16.msra.mxu0 %v1838
    %2581 = vmatpush.bf16.msra.mxu0 %v1836
    %2582 = vmatpush.bf16.msra.mxu0 %v1834
    %2583 = vmatpush.bf16.msra.mxu0 %v1832
    %2584 = vmatpush.bf16.msra.mxu0 %v1830
    %2585 = vmatmul.bf16.gmra.mxu0 %v159
    %v2586 = vpop.f32.mrf.mxu0
    %v2587 = vadd.f32 %v2574, %v2586
    %v2588 = vpop.f32.mrf.mxu0
    %2589 = vdwg.mxu0
    %2590 = vmatpush.bf16.msra.mxu0 %v1860
    %2591 = vmatpush.bf16.msra.mxu0 %v1858
    %2592 = vmatpush.bf16.msra.mxu0 %v1856
    %2593 = vmatpush.bf16.msra.mxu0 %v1854
    %2594 = vmatpush.bf16.msra.mxu0 %v1852
    %2595 = vmatpush.bf16.msra.mxu0 %v1850
    %2596 = vmatpush.bf16.msra.mxu0 %v1848
    %2597 = vmatpush.bf16.msra.mxu0 %v1846
    %2598 = vmatmul.bf16.gmra.mxu0 %v160
    %v2599 = vpop.f32.mrf.mxu0
    %v2600 = vadd.f32 %v2587, %v2599
    %v2601 = vpop.f32.mrf.mxu0
    %2602 = vdwg.mxu0
    %2603 = vmatpush.bf16.msra.mxu0 %v1876
    %2604 = vmatpush.bf16.msra.mxu0 %v1874
    %2605 = vmatpush.bf16.msra.mxu0 %v1872
    %2606 = vmatpush.bf16.msra.mxu0 %v1870
    %2607 = vmatpush.bf16.msra.mxu0 %v1868
    %2608 = vmatpush.bf16.msra.mxu0 %v1866
    %2609 = vmatpush.bf16.msra.mxu0 %v1864
    %2610 = vmatpush.bf16.msra.mxu0 %v1862
    %2611 = vmatmul.bf16.gmra.mxu0 %v161
    %v2612 = vpop.f32.mrf.mxu0
    %v2613 = vadd.f32 %v2600, %v2612
    %v2614 = vpop.f32.mrf.mxu0
    %2615 = vdwg.mxu0
    %2616 = vmatpush.bf16.msra.mxu0 %v1892
    %2617 = vmatpush.bf16.msra.mxu0 %v1890
    %2618 = vmatpush.bf16.msra.mxu0 %v1888
    %2619 = vmatpush.bf16.msra.mxu0 %v1886
    %2620 = vmatpush.bf16.msra.mxu0 %v1884
    %2621 = vmatpush.bf16.msra.mxu0 %v1882
    %2622 = vmatpush.bf16.msra.mxu0 %v1880
    %2623 = vmatpush.bf16.msra.mxu0 %v1878
    %2624 = vmatmul.bf16.gmra.mxu0 %v162
    %v2625 = vpop.f32.mrf.mxu0
    %v2626 = vadd.f32 %v2613, %v2625
    %v2627 = vpop.f32.mrf.mxu0
    %2628 = vdwg.mxu0
    %2629 = vmatpush.bf16.msra.mxu0 %v1908
    %2630 = vmatpush.bf16.msra.mxu0 %v1906
    %2631 = vmatpush.bf16.msra.mxu0 %v1904
    %2632 = vmatpush.bf16.msra.mxu0 %v1902
    %2633 = vmatpush.bf16.msra.mxu0 %v1900
    %2634 = vmatpush.bf16.msra.mxu0 %v1898
    %2635 = vmatpush.bf16.msra.mxu0 %v1896
    %2636 = vmatpush.bf16.msra.mxu0 %v1894
    %2637 = vmatmul.bf16.gmra.mxu0 %v163
    %v2638 = vpop.f32.mrf.mxu0
    %v2639 = vadd.f32 %v2626, %v2638
    %v2640 = vpop.f32.mrf.mxu0
    %2641 = vdwg.mxu0
    %2642 = vmatpush.bf16.msra.mxu0 %v1924
    %2643 = vmatpush.bf16.msra.mxu0 %v1922
    %2644 = vmatpush.bf16.msra.mxu0 %v1920
    %2645 = vmatpush.bf16.msra.mxu0 %v1918
    %2646 = vmatpush.bf16.msra.mxu0 %v1916
    %2647 = vmatpush.bf16.msra.mxu0 %v1914
    %2648 = vmatpush.bf16.msra.mxu0 %v1912
    %2649 = vmatpush.bf16.msra.mxu0 %v1910
    %2650 = vmatmul.bf16.gmra.mxu0 %v164
    %v2651 = vpop.f32.mrf.mxu0
    %v2652 = vadd.f32 %v2639, %v2651
    %v2653 = vpop.f32.mrf.mxu0
    %2654 = vdwg.mxu0
    %2655 = vmatpush.bf16.msra.mxu0 %v1940
    %2656 = vmatpush.bf16.msra.mxu0 %v1938
    %2657 = vmatpush.bf16.msra.mxu0 %v1936
    %2658 = vmatpush.bf16.msra.mxu0 %v1934
    %2659 = vmatpush.bf16.msra.mxu0 %v1932
    %2660 = vmatpush.bf16.msra.mxu0 %v1930
    %2661 = vmatpush.bf16.msra.mxu0 %v1928
    %2662 = vmatpush.bf16.msra.mxu0 %v1926
    %2663 = vmatmul.bf16.gmra.mxu0 %v165
    %v2664 = vpop.f32.mrf.mxu0
    %v2665 = vadd.f32 %v2652, %v2664
    %v2666 = vpop.f32.mrf.mxu0
    %2667 = vdwg.mxu0
    %2668 = vmatpush.bf16.msra.mxu0 %v1956
    %2669 = vmatpush.bf16.msra.mxu0 %v1954
    %2670 = vmatpush.bf16.msra.mxu0 %v1952
    %2671 = vmatpush.bf16.msra.mxu0 %v1950
    %2672 = vmatpush.bf16.msra.mxu0 %v1948
    %2673 = vmatpush.bf16.msra.mxu0 %v1946
    %2674 = vmatpush.bf16.msra.mxu0 %v1944
    %2675 = vmatpush.bf16.msra.mxu0 %v1942
    %2676 = vmatmul.bf16.gmra.mxu0 %v166
    %v2677 = vpop.f32.mrf.mxu0
    %v2678 = vadd.f32 %v2665, %v2677
    %v2679 = vpop.f32.mrf.mxu0
    %2680 = vdwg.mxu0
    %2681 = vmatpush.bf16.msra.mxu0 %v1972
    %2682 = vmatpush.bf16.msra.mxu0 %v1970
    %2683 = vmatpush.bf16.msra.mxu0 %v1968
    %2684 = vmatpush.bf16.msra.mxu0 %v1966
    %2685 = vmatpush.bf16.msra.mxu0 %v1964
    %2686 = vmatpush.bf16.msra.mxu0 %v1962
    %2687 = vmatpush.bf16.msra.mxu0 %v1960
    %2688 = vmatpush.bf16.msra.mxu0 %v1958
    %2689 = vmatmul.bf16.gmra.mxu0 %v167
    %v2690 = vpop.f32.mrf.mxu0
    %v2691 = vadd.f32 %v2678, %v2690
    %v2692 = vpop.f32.mrf.mxu0
    %2693 = vdwg.mxu0
    %2694 = vmatpush.bf16.msra.mxu0 %v1988
    %2695 = vmatpush.bf16.msra.mxu0 %v1986
    %2696 = vmatpush.bf16.msra.mxu0 %v1984
    %2697 = vmatpush.bf16.msra.mxu0 %v1982
    %2698 = vmatpush.bf16.msra.mxu0 %v1980
    %2699 = vmatpush.bf16.msra.mxu0 %v1978
    %2700 = vmatpush.bf16.msra.mxu0 %v1976
    %2701 = vmatpush.bf16.msra.mxu0 %v1974
    %2702 = vmatmul.bf16.gmra.mxu0 %v168
    %v2703 = vpop.f32.mrf.mxu0
    %v2704 = vadd.f32 %v2691, %v2703
    %v2705 = vpop.f32.mrf.mxu0
    %2706 = vdwg.mxu0
    %2707 = vmatpush.bf16.msra.mxu0 %v2004
    %2708 = vmatpush.bf16.msra.mxu0 %v2002
    %2709 = vmatpush.bf16.msra.mxu0 %v2000
    %2710 = vmatpush.bf16.msra.mxu0 %v1998
    %2711 = vmatpush.bf16.msra.mxu0 %v1996
    %2712 = vmatpush.bf16.msra.mxu0 %v1994
    %2713 = vmatpush.bf16.msra.mxu0 %v1992
    %2714 = vmatpush.bf16.msra.mxu0 %v1990
    %2715 = vmatmul.bf16.gmra.mxu0 %v169
    %v2716 = vpop.f32.mrf.mxu0
    %v2717 = vadd.f32 %v2704, %v2716
    %v2718 = vpop.f32.mrf.mxu0
    %2719 = vdwg.mxu0
    %2720 = vmatpush.bf16.msra.mxu0 %v2020
    %2721 = vmatpush.bf16.msra.mxu0 %v2018
    %2722 = vmatpush.bf16.msra.mxu0 %v2016
    %2723 = vmatpush.bf16.msra.mxu0 %v2014
    %2724 = vmatpush.bf16.msra.mxu0 %v2012
    %2725 = vmatpush.bf16.msra.mxu0 %v2010
    %2726 = vmatpush.bf16.msra.mxu0 %v2008
    %2727 = vmatpush.bf16.msra.mxu0 %v2006
    %2728 = vmatmul.bf16.gmra.mxu0 %v170
    %v2729 = vpop.f32.mrf.mxu0
    %v2730 = vadd.f32 %v2717, %v2729
    %v2731 = vpop.f32.mrf.mxu0
    %2732 = vdwg.mxu0
    %2733 = vmatpush.bf16.msra.mxu0 %v2036
    %2734 = vmatpush.bf16.msra.mxu0 %v2034
    %2735 = vmatpush.bf16.msra.mxu0 %v2032
    %2736 = vmatpush.bf16.msra.mxu0 %v2030
    %2737 = vmatpush.bf16.msra.mxu0 %v2028
    %2738 = vmatpush.bf16.msra.mxu0 %v2026
    %2739 = vmatpush.bf16.msra.mxu0 %v2024
    %2740 = vmatpush.bf16.msra.mxu0 %v2022
    %2741 = vmatmul.bf16.gmra.mxu0 %v171
    %v2742 = vpop.f32.mrf.mxu0
    %v2743 = vadd.f32 %v2730, %v2742
    %v2744 = vpop.f32.mrf.mxu0
    %2745 = vdwg.mxu0
    %2746 = vmatpush.bf16.msra.mxu0 %v2052
    %2747 = vmatpush.bf16.msra.mxu0 %v2050
    %2748 = vmatpush.bf16.msra.mxu0 %v2048
    %2749 = vmatpush.bf16.msra.mxu0 %v2046
    %2750 = vmatpush.bf16.msra.mxu0 %v2044
    %2751 = vmatpush.bf16.msra.mxu0 %v2042
    %2752 = vmatpush.bf16.msra.mxu0 %v2040
    %2753 = vmatpush.bf16.msra.mxu0 %v2038
    %2754 = vmatmul.bf16.gmra.mxu0 %v172
    %v2755 = vpop.f32.mrf.mxu0
    %v2756 = vadd.f32 %v2743, %v2755
    %v2757 = vpop.f32.mrf.mxu0
    %2758 = vdwg.mxu0
    %2759 = vmatpush.bf16.msra.mxu0 %v2068
    %2760 = vmatpush.bf16.msra.mxu0 %v2066
    %2761 = vmatpush.bf16.msra.mxu0 %v2064
    %2762 = vmatpush.bf16.msra.mxu0 %v2062
    %2763 = vmatpush.bf16.msra.mxu0 %v2060
    %2764 = vmatpush.bf16.msra.mxu0 %v2058
    %2765 = vmatpush.bf16.msra.mxu0 %v2056
    %2766 = vmatpush.bf16.msra.mxu0 %v2054
    %2767 = vmatmul.bf16.gmra.mxu0 %v173
    %v2768 = vpop.f32.mrf.mxu0
    %v2769 = vadd.f32 %v2756, %v2768
    %v2770 = vpop.f32.mrf.mxu0
    %2771 = vdwg.mxu0
    %2772 = vmatpush.bf16.msra.mxu0 %v2084
    %2773 = vmatpush.bf16.msra.mxu0 %v2082
    %2774 = vmatpush.bf16.msra.mxu0 %v2080
    %2775 = vmatpush.bf16.msra.mxu0 %v2078
    %2776 = vmatpush.bf16.msra.mxu0 %v2076
    %2777 = vmatpush.bf16.msra.mxu0 %v2074
    %2778 = vmatpush.bf16.msra.mxu0 %v2072
    %2779 = vmatpush.bf16.msra.mxu0 %v2070
    %2780 = vmatmul.bf16.gmra.mxu0 %v174
    %v2781 = vpop.f32.mrf.mxu0
    %v2782 = vadd.f32 %v2769, %v2781
    %v2783 = vpop.f32.mrf.mxu0
    %2784 = vdwg.mxu0
    %2785 = vmatpush.bf16.msra.mxu0 %v2100
    %2786 = vmatpush.bf16.msra.mxu0 %v2098
    %2787 = vmatpush.bf16.msra.mxu0 %v2096
    %2788 = vmatpush.bf16.msra.mxu0 %v2094
    %2789 = vmatpush.bf16.msra.mxu0 %v2092
    %2790 = vmatpush.bf16.msra.mxu0 %v2090
    %2791 = vmatpush.bf16.msra.mxu0 %v2088
    %2792 = vmatpush.bf16.msra.mxu0 %v2086
    %2793 = vmatmul.bf16.gmra.mxu0 %v175
    %v2794 = vpop.f32.mrf.mxu0
    %v2795 = vadd.f32 %v2782, %v2794
    %v2796 = vpop.f32.mrf.mxu0
    %2797 = vdwg.mxu0
    %2798 = vmatpush.bf16.msra.mxu0 %v1733
    %2799 = vmatpush.bf16.msra.mxu0 %v1731
    %2800 = vmatpush.bf16.msra.mxu0 %v1729
    %2801 = vmatpush.bf16.msra.mxu0 %v1727
    %2802 = vmatpush.bf16.msra.mxu0 %v1725
    %2803 = vmatpush.bf16.msra.mxu0 %v1723
    %2804 = vmatpush.bf16.msra.mxu0 %v1721
    %2805 = vmatpush.bf16.msra.mxu0 %v1719
    %2806 = vmatmul.bf16.gmra.mxu0 %v152
    %v2807 = vpop.f32.mrf.mxu0
    %v2808 = vadd.f32 %v563, %v2807
    %v2809 = vpop.f32.mrf.mxu0
    %2810 = vdwg.mxu0
    %2811 = vmatpush.bf16.msra.mxu0 %v1749
    %2812 = vmatpush.bf16.msra.mxu0 %v1747
    %2813 = vmatpush.bf16.msra.mxu0 %v1745
    %2814 = vmatpush.bf16.msra.mxu0 %v1743
    %2815 = vmatpush.bf16.msra.mxu0 %v1741
    %2816 = vmatpush.bf16.msra.mxu0 %v1739
    %2817 = vmatpush.bf16.msra.mxu0 %v1737
    %2818 = vmatpush.bf16.msra.mxu0 %v1735
    %2819 = vmatmul.bf16.gmra.mxu0 %v153
    %v2820 = vpop.f32.mrf.mxu0
    %v2821 = vadd.f32 %v2808, %v2820
    %v2822 = vpop.f32.mrf.mxu0
    %2823 = vdwg.mxu0
    %2824 = vmatpush.bf16.msra.mxu0 %v1765
    %2825 = vmatpush.bf16.msra.mxu0 %v1763
    %2826 = vmatpush.bf16.msra.mxu0 %v1761
    %2827 = vmatpush.bf16.msra.mxu0 %v1759
    %2828 = vmatpush.bf16.msra.mxu0 %v1757
    %2829 = vmatpush.bf16.msra.mxu0 %v1755
    %2830 = vmatpush.bf16.msra.mxu0 %v1753
    %2831 = vmatpush.bf16.msra.mxu0 %v1751
    %2832 = vmatmul.bf16.gmra.mxu0 %v154
    %v2833 = vpop.f32.mrf.mxu0
    %v2834 = vadd.f32 %v2821, %v2833
    %v2835 = vpop.f32.mrf.mxu0
    %2836 = vdwg.mxu0
    %2837 = vmatpush.bf16.msra.mxu0 %v1781
    %2838 = vmatpush.bf16.msra.mxu0 %v1779
    %2839 = vmatpush.bf16.msra.mxu0 %v1777
    %2840 = vmatpush.bf16.msra.mxu0 %v1775
    %2841 = vmatpush.bf16.msra.mxu0 %v1773
    %2842 = vmatpush.bf16.msra.mxu0 %v1771
    %2843 = vmatpush.bf16.msra.mxu0 %v1769
    %2844 = vmatpush.bf16.msra.mxu0 %v1767
    %2845 = vmatmul.bf16.gmra.mxu0 %v155
    %v2846 = vpop.f32.mrf.mxu0
    %v2847 = vadd.f32 %v2834, %v2846
    %v2848 = vpop.f32.mrf.mxu0
    %2849 = vdwg.mxu0
    %2850 = vmatpush.bf16.msra.mxu0 %v1797
    %2851 = vmatpush.bf16.msra.mxu0 %v1795
    %2852 = vmatpush.bf16.msra.mxu0 %v1793
    %2853 = vmatpush.bf16.msra.mxu0 %v1791
    %2854 = vmatpush.bf16.msra.mxu0 %v1789
    %2855 = vmatpush.bf16.msra.mxu0 %v1787
    %2856 = vmatpush.bf16.msra.mxu0 %v1785
    %2857 = vmatpush.bf16.msra.mxu0 %v1783
    %2858 = vmatmul.bf16.gmra.mxu0 %v156
    %v2859 = vpop.f32.mrf.mxu0
    %v2860 = vadd.f32 %v2847, %v2859
    %v2861 = vpop.f32.mrf.mxu0
    %2862 = vdwg.mxu0
    %2863 = vmatpush.bf16.msra.mxu0 %v1813
    %2864 = vmatpush.bf16.msra.mxu0 %v1811
    %2865 = vmatpush.bf16.msra.mxu0 %v1809
    %2866 = vmatpush.bf16.msra.mxu0 %v1807
    %2867 = vmatpush.bf16.msra.mxu0 %v1805
    %2868 = vmatpush.bf16.msra.mxu0 %v1803
    %2869 = vmatpush.bf16.msra.mxu0 %v1801
    %2870 = vmatpush.bf16.msra.mxu0 %v1799
    %2871 = vmatmul.bf16.gmra.mxu0 %v157
    %v2872 = vpop.f32.mrf.mxu0
    %v2873 = vadd.f32 %v2860, %v2872
    %v2874 = vpop.f32.mrf.mxu0
    %2875 = vdwg.mxu0
    %2876 = vmatpush.bf16.msra.mxu0 %v1829
    %2877 = vmatpush.bf16.msra.mxu0 %v1827
    %2878 = vmatpush.bf16.msra.mxu0 %v1825
    %2879 = vmatpush.bf16.msra.mxu0 %v1823
    %2880 = vmatpush.bf16.msra.mxu0 %v1821
    %2881 = vmatpush.bf16.msra.mxu0 %v1819
    %2882 = vmatpush.bf16.msra.mxu0 %v1817
    %2883 = vmatpush.bf16.msra.mxu0 %v1815
    %2884 = vmatmul.bf16.gmra.mxu0 %v158
    %v2885 = vpop.f32.mrf.mxu0
    %v2886 = vadd.f32 %v2873, %v2885
    %v2887 = vpop.f32.mrf.mxu0
    %2888 = vdwg.mxu0
    %2889 = vmatpush.bf16.msra.mxu0 %v1845
    %2890 = vmatpush.bf16.msra.mxu0 %v1843
    %2891 = vmatpush.bf16.msra.mxu0 %v1841
    %2892 = vmatpush.bf16.msra.mxu0 %v1839
    %2893 = vmatpush.bf16.msra.mxu0 %v1837
    %2894 = vmatpush.bf16.msra.mxu0 %v1835
    %2895 = vmatpush.bf16.msra.mxu0 %v1833
    %2896 = vmatpush.bf16.msra.mxu0 %v1831
    %2897 = vmatmul.bf16.gmra.mxu0 %v159
    %v2898 = vpop.f32.mrf.mxu0
    %v2899 = vadd.f32 %v2886, %v2898
    %v2900 = vpop.f32.mrf.mxu0
    %2901 = vdwg.mxu0
    %2902 = vmatpush.bf16.msra.mxu0 %v1861
    %2903 = vmatpush.bf16.msra.mxu0 %v1859
    %2904 = vmatpush.bf16.msra.mxu0 %v1857
    %2905 = vmatpush.bf16.msra.mxu0 %v1855
    %2906 = vmatpush.bf16.msra.mxu0 %v1853
    %2907 = vmatpush.bf16.msra.mxu0 %v1851
    %2908 = vmatpush.bf16.msra.mxu0 %v1849
    %2909 = vmatpush.bf16.msra.mxu0 %v1847
    %2910 = vmatmul.bf16.gmra.mxu0 %v160
    %v2911 = vpop.f32.mrf.mxu0
    %v2912 = vadd.f32 %v2899, %v2911
    %v2913 = vpop.f32.mrf.mxu0
    %2914 = vdwg.mxu0
    %2915 = vmatpush.bf16.msra.mxu0 %v1877
    %2916 = vmatpush.bf16.msra.mxu0 %v1875
    %2917 = vmatpush.bf16.msra.mxu0 %v1873
    %2918 = vmatpush.bf16.msra.mxu0 %v1871
    %2919 = vmatpush.bf16.msra.mxu0 %v1869
    %2920 = vmatpush.bf16.msra.mxu0 %v1867
    %2921 = vmatpush.bf16.msra.mxu0 %v1865
    %2922 = vmatpush.bf16.msra.mxu0 %v1863
    %2923 = vmatmul.bf16.gmra.mxu0 %v161
    %v2924 = vpop.f32.mrf.mxu0
    %v2925 = vadd.f32 %v2912, %v2924
    %v2926 = vpop.f32.mrf.mxu0
    %2927 = vdwg.mxu0
    %2928 = vmatpush.bf16.msra.mxu0 %v1893
    %2929 = vmatpush.bf16.msra.mxu0 %v1891
    %2930 = vmatpush.bf16.msra.mxu0 %v1889
    %2931 = vmatpush.bf16.msra.mxu0 %v1887
    %2932 = vmatpush.bf16.msra.mxu0 %v1885
    %2933 = vmatpush.bf16.msra.mxu0 %v1883
    %2934 = vmatpush.bf16.msra.mxu0 %v1881
    %2935 = vmatpush.bf16.msra.mxu0 %v1879
    %2936 = vmatmul.bf16.gmra.mxu0 %v162
    %v2937 = vpop.f32.mrf.mxu0
    %v2938 = vadd.f32 %v2925, %v2937
    %v2939 = vpop.f32.mrf.mxu0
    %2940 = vdwg.mxu0
    %2941 = vmatpush.bf16.msra.mxu0 %v1909
    %2942 = vmatpush.bf16.msra.mxu0 %v1907
    %2943 = vmatpush.bf16.msra.mxu0 %v1905
    %2944 = vmatpush.bf16.msra.mxu0 %v1903
    %2945 = vmatpush.bf16.msra.mxu0 %v1901
    %2946 = vmatpush.bf16.msra.mxu0 %v1899
    %2947 = vmatpush.bf16.msra.mxu0 %v1897
    %2948 = vmatpush.bf16.msra.mxu0 %v1895
    %2949 = vmatmul.bf16.gmra.mxu0 %v163
    %v2950 = vpop.f32.mrf.mxu0
    %v2951 = vadd.f32 %v2938, %v2950
    %v2952 = vpop.f32.mrf.mxu0
    %2953 = vdwg.mxu0
    %2954 = vmatpush.bf16.msra.mxu0 %v1925
    %2955 = vmatpush.bf16.msra.mxu0 %v1923
    %2956 = vmatpush.bf16.msra.mxu0 %v1921
    %2957 = vmatpush.bf16.msra.mxu0 %v1919
    %2958 = vmatpush.bf16.msra.mxu0 %v1917
    %2959 = vmatpush.bf16.msra.mxu0 %v1915
    %2960 = vmatpush.bf16.msra.mxu0 %v1913
    %2961 = vmatpush.bf16.msra.mxu0 %v1911
    %2962 = vmatmul.bf16.gmra.mxu0 %v164
    %v2963 = vpop.f32.mrf.mxu0
    %v2964 = vadd.f32 %v2951, %v2963
    %v2965 = vpop.f32.mrf.mxu0
    %2966 = vdwg.mxu0
    %2967 = vmatpush.bf16.msra.mxu0 %v1941
    %2968 = vmatpush.bf16.msra.mxu0 %v1939
    %2969 = vmatpush.bf16.msra.mxu0 %v1937
    %2970 = vmatpush.bf16.msra.mxu0 %v1935
    %2971 = vmatpush.bf16.msra.mxu0 %v1933
    %2972 = vmatpush.bf16.msra.mxu0 %v1931
    %2973 = vmatpush.bf16.msra.mxu0 %v1929
    %2974 = vmatpush.bf16.msra.mxu0 %v1927
    %2975 = vmatmul.bf16.gmra.mxu0 %v165
    %v2976 = vpop.f32.mrf.mxu0
    %v2977 = vadd.f32 %v2964, %v2976
    %v2978 = vpop.f32.mrf.mxu0
    %2979 = vdwg.mxu0
    %2980 = vmatpush.bf16.msra.mxu0 %v1957
    %2981 = vmatpush.bf16.msra.mxu0 %v1955
    %2982 = vmatpush.bf16.msra.mxu0 %v1953
    %2983 = vmatpush.bf16.msra.mxu0 %v1951
    %2984 = vmatpush.bf16.msra.mxu0 %v1949
    %2985 = vmatpush.bf16.msra.mxu0 %v1947
    %2986 = vmatpush.bf16.msra.mxu0 %v1945
    %2987 = vmatpush.bf16.msra.mxu0 %v1943
    %2988 = vmatmul.bf16.gmra.mxu0 %v166
    %v2989 = vpop.f32.mrf.mxu0
    %v2990 = vadd.f32 %v2977, %v2989
    %v2991 = vpop.f32.mrf.mxu0
    %2992 = vdwg.mxu0
    %2993 = vmatpush.bf16.msra.mxu0 %v1973
    %2994 = vmatpush.bf16.msra.mxu0 %v1971
    %2995 = vmatpush.bf16.msra.mxu0 %v1969
    %2996 = vmatpush.bf16.msra.mxu0 %v1967
    %2997 = vmatpush.bf16.msra.mxu0 %v1965
    %2998 = vmatpush.bf16.msra.mxu0 %v1963
    %2999 = vmatpush.bf16.msra.mxu0 %v1961
    %3000 = vmatpush.bf16.msra.mxu0 %v1959
    %3001 = vmatmul.bf16.gmra.mxu0 %v167
    %v3002 = vpop.f32.mrf.mxu0
    %v3003 = vadd.f32 %v2990, %v3002
    %v3004 = vpop.f32.mrf.mxu0
    %3005 = vdwg.mxu0
    %3006 = vmatpush.bf16.msra.mxu0 %v1989
    %3007 = vmatpush.bf16.msra.mxu0 %v1987
    %3008 = vmatpush.bf16.msra.mxu0 %v1985
    %3009 = vmatpush.bf16.msra.mxu0 %v1983
    %3010 = vmatpush.bf16.msra.mxu0 %v1981
    %3011 = vmatpush.bf16.msra.mxu0 %v1979
    %3012 = vmatpush.bf16.msra.mxu0 %v1977
    %3013 = vmatpush.bf16.msra.mxu0 %v1975
    %3014 = vmatmul.bf16.gmra.mxu0 %v168
    %v3015 = vpop.f32.mrf.mxu0
    %v3016 = vadd.f32 %v3003, %v3015
    %v3017 = vpop.f32.mrf.mxu0
    %3018 = vdwg.mxu0
    %3019 = vmatpush.bf16.msra.mxu0 %v2005
    %3020 = vmatpush.bf16.msra.mxu0 %v2003
    %3021 = vmatpush.bf16.msra.mxu0 %v2001
    %3022 = vmatpush.bf16.msra.mxu0 %v1999
    %3023 = vmatpush.bf16.msra.mxu0 %v1997
    %3024 = vmatpush.bf16.msra.mxu0 %v1995
    %3025 = vmatpush.bf16.msra.mxu0 %v1993
    %3026 = vmatpush.bf16.msra.mxu0 %v1991
    %3027 = vmatmul.bf16.gmra.mxu0 %v169
    %v3028 = vpop.f32.mrf.mxu0
    %v3029 = vadd.f32 %v3016, %v3028
    %v3030 = vpop.f32.mrf.mxu0
    %3031 = vdwg.mxu0
    %3032 = vmatpush.bf16.msra.mxu0 %v2021
    %3033 = vmatpush.bf16.msra.mxu0 %v2019
    %3034 = vmatpush.bf16.msra.mxu0 %v2017
    %3035 = vmatpush.bf16.msra.mxu0 %v2015
    %3036 = vmatpush.bf16.msra.mxu0 %v2013
    %3037 = vmatpush.bf16.msra.mxu0 %v2011
    %3038 = vmatpush.bf16.msra.mxu0 %v2009
    %3039 = vmatpush.bf16.msra.mxu0 %v2007
    %3040 = vmatmul.bf16.gmra.mxu0 %v170
    %v3041 = vpop.f32.mrf.mxu0
    %v3042 = vadd.f32 %v3029, %v3041
    %v3043 = vpop.f32.mrf.mxu0
    %3044 = vdwg.mxu0
    %3045 = vmatpush.bf16.msra.mxu0 %v2037
    %3046 = vmatpush.bf16.msra.mxu0 %v2035
    %3047 = vmatpush.bf16.msra.mxu0 %v2033
    %3048 = vmatpush.bf16.msra.mxu0 %v2031
    %3049 = vmatpush.bf16.msra.mxu0 %v2029
    %3050 = vmatpush.bf16.msra.mxu0 %v2027
    %3051 = vmatpush.bf16.msra.mxu0 %v2025
    %3052 = vmatpush.bf16.msra.mxu0 %v2023
    %3053 = vmatmul.bf16.gmra.mxu0 %v171
    %v3054 = vpop.f32.mrf.mxu0
    %v3055 = vadd.f32 %v3042, %v3054
    %v3056 = vpop.f32.mrf.mxu0
    %3057 = vdwg.mxu0
    %3058 = vmatpush.bf16.msra.mxu0 %v2053
    %3059 = vmatpush.bf16.msra.mxu0 %v2051
    %3060 = vmatpush.bf16.msra.mxu0 %v2049
    %3061 = vmatpush.bf16.msra.mxu0 %v2047
    %3062 = vmatpush.bf16.msra.mxu0 %v2045
    %3063 = vmatpush.bf16.msra.mxu0 %v2043
    %3064 = vmatpush.bf16.msra.mxu0 %v2041
    %3065 = vmatpush.bf16.msra.mxu0 %v2039
    %3066 = vmatmul.bf16.gmra.mxu0 %v172
    %v3067 = vpop.f32.mrf.mxu0
    %v3068 = vadd.f32 %v3055, %v3067
    %v3069 = vpop.f32.mrf.mxu0
    %3070 = vdwg.mxu0
    %3071 = vmatpush.bf16.msra.mxu0 %v2069
    %3072 = vmatpush.bf16.msra.mxu0 %v2067
    %3073 = vmatpush.bf16.msra.mxu0 %v2065
    %3074 = vmatpush.bf16.msra.mxu0 %v2063
    %3075 = vmatpush.bf16.msra.mxu0 %v2061
    %3076 = vmatpush.bf16.msra.mxu0 %v2059
    %3077 = vmatpush.bf16.msra.mxu0 %v2057
    %3078 = vmatpush.bf16.msra.mxu0 %v2055
    %3079 = vmatmul.bf16.gmra.mxu0 %v173
    %v3080 = vpop.f32.mrf.mxu0
    %v3081 = vadd.f32 %v3068, %v3080
    %v3082 = vpop.f32.mrf.mxu0
    %3083 = vdwg.mxu0
    %3084 = vmatpush.bf16.msra.mxu0 %v2085
    %3085 = vmatpush.bf16.msra.mxu0 %v2083
    %3086 = vmatpush.bf16.msra.mxu0 %v2081
    %3087 = vmatpush.bf16.msra.mxu0 %v2079
    %3088 = vmatpush.bf16.msra.mxu0 %v2077
    %3089 = vmatpush.bf16.msra.mxu0 %v2075
    %3090 = vmatpush.bf16.msra.mxu0 %v2073
    %3091 = vmatpush.bf16.msra.mxu0 %v2071
    %3092 = vmatmul.bf16.gmra.mxu0 %v174
    %v3093 = vpop.f32.mrf.mxu0
    %v3094 = vadd.f32 %v3081, %v3093
    %v3095 = vpop.f32.mrf.mxu0
    %3096 = vdwg.mxu0
    %3097 = vmatpush.bf16.msra.mxu0 %v2101
    %3098 = vmatpush.bf16.msra.mxu0 %v2099
    %3099 = vmatpush.bf16.msra.mxu0 %v2097
    %3100 = vmatpush.bf16.msra.mxu0 %v2095
    %3101 = vmatpush.bf16.msra.mxu0 %v2093
    %3102 = vmatpush.bf16.msra.mxu0 %v2091
    %3103 = vmatpush.bf16.msra.mxu0 %v2089
    %3104 = vmatpush.bf16.msra.mxu0 %v2087
    %3105 = vmatmul.bf16.gmra.mxu0 %v175
    %v3106 = vpop.f32.mrf.mxu0
    %v3107 = vadd.f32 %v3094, %v3106
    %v3108 = vpop.f32.mrf.mxu0
    %3109 = vdwg.mxu0
    %v3110 = vmax.f32 %v2795, 0.0
    %v3111 = vmax.f32 %v3107, 0.0
    %v3112 = vpack.c.bf16 %v3110, %v3110
    %v3113 = vpack.c.bf16 %v3111, %v3111
    %v3114 = vld [vmem:[#allocation8] sm:$0xff]
    %v3115 = vld [vmem:[#allocation8 + $0x8] sm:$0xff]
    %v3116 = vld [vmem:[#allocation8 + $0x10] sm:$0xff]
    %v3117 = vld [vmem:[#allocation8 + $0x18] sm:$0xff]
    %v3118 = vld [vmem:[#allocation8 + $0x20] sm:$0xff]
    %v3119 = vld [vmem:[#allocation8 + $0x28] sm:$0xff]
    %v3120 = vld [vmem:[#allocation8 + $0x30] sm:$0xff]
    %v3121 = vld [vmem:[#allocation8 + $0x38] sm:$0xff]
    %v3122 = vld [vmem:[#allocation8 + $0x40] sm:$0xff]
    %v3123 = vld [vmem:[#allocation8 + $0x48] sm:$0xff]
    %v3124 = vld [vmem:[#allocation8 + $0x50] sm:$0xff]
    %v3125 = vld [vmem:[#allocation8 + $0x58] sm:$0xff]
    %v3126 = vld [vmem:[#allocation8 + $0x60] sm:$0xff]
    %v3127 = vld [vmem:[#allocation8 + $0x68] sm:$0xff]
    %v3128 = vld [vmem:[#allocation8 + $0x70] sm:$0xff]
    %v3129 = vld [vmem:[#allocation8 + $0x78] sm:$0xff]
    %v3130 = vld [vmem:[#allocation8 + $0x80] sm:$0xff]
    %v3131 = vld [vmem:[#allocation8 + $0x88] sm:$0xff]
    %v3132 = vld [vmem:[#allocation8 + $0x90] sm:$0xff]
    %v3133 = vld [vmem:[#allocation8 + $0x98] sm:$0xff]
    %v3134 = vld [vmem:[#allocation8 + $0xa0] sm:$0xff]
    %v3135 = vld [vmem:[#allocation8 + $0xa8] sm:$0xff]
    %v3136 = vld [vmem:[#allocation8 + $0xb0] sm:$0xff]
    %v3137 = vld [vmem:[#allocation8 + $0xb8] sm:$0xff]
    %v3138 = vld [vmem:[#allocation8 + $0xc0] sm:$0xff]
    %v3139 = vld [vmem:[#allocation8 + $0xc8] sm:$0xff]
    %v3140 = vld [vmem:[#allocation8 + $0xd0] sm:$0xff]
    %v3141 = vld [vmem:[#allocation8 + $0xd8] sm:$0xff]
    %v3142 = vld [vmem:[#allocation8 + $0xe0] sm:$0xff]
    %v3143 = vld [vmem:[#allocation8 + $0xe8] sm:$0xff]
    %v3144 = vld [vmem:[#allocation8 + $0xf0] sm:$0xff]
    %v3145 = vld [vmem:[#allocation8 + $0xf8] sm:$0xff]
    %v3146 = vld [vmem:[#allocation10] sm:$0x3]
    %v3148 = vperm.slane %v3146, 0
    %v3149 = vperm.slane %v3146, 1
    %v3184 = vunpack.c.l.b16 %v3114
    %v3185 = vunpack.c.h.b16 %v3114
    %v3186 = vunpack.c.l.b16 %v3115
    %v3187 = vunpack.c.h.b16 %v3115
    %v3188 = vunpack.c.l.b16 %v3116
    %v3189 = vunpack.c.h.b16 %v3116
    %v3190 = vunpack.c.l.b16 %v3117
    %v3191 = vunpack.c.h.b16 %v3117
    %v3192 = vunpack.c.l.b16 %v3118
    %v3193 = vunpack.c.h.b16 %v3118
    %v3194 = vunpack.c.l.b16 %v3119
    %v3195 = vunpack.c.h.b16 %v3119
    %v3196 = vunpack.c.l.b16 %v3120
    %v3197 = vunpack.c.h.b16 %v3120
    %v3198 = vunpack.c.l.b16 %v3121
    %v3199 = vunpack.c.h.b16 %v3121
    %v3200 = vunpack.c.l.b16 %v3122
    %v3201 = vunpack.c.h.b16 %v3122
    %v3202 = vunpack.c.l.b16 %v3123
    %v3203 = vunpack.c.h.b16 %v3123
    %v3204 = vunpack.c.l.b16 %v3124
    %v3205 = vunpack.c.h.b16 %v3124
    %v3206 = vunpack.c.l.b16 %v3125
    %v3207 = vunpack.c.h.b16 %v3125
    %v3208 = vunpack.c.l.b16 %v3126
    %v3209 = vunpack.c.h.b16 %v3126
    %v3210 = vunpack.c.l.b16 %v3127
    %v3211 = vunpack.c.h.b16 %v3127
    %v3212 = vunpack.c.l.b16 %v3128
    %v3213 = vunpack.c.h.b16 %v3128
    %v3214 = vunpack.c.l.b16 %v3129
    %v3215 = vunpack.c.h.b16 %v3129
    %v3216 = vunpack.c.l.b16 %v3130
    %v3217 = vunpack.c.h.b16 %v3130
    %v3218 = vunpack.c.l.b16 %v3131
    %v3219 = vunpack.c.h.b16 %v3131
    %v3220 = vunpack.c.l.b16 %v3132
    %v3221 = vunpack.c.h.b16 %v3132
    %v3222 = vunpack.c.l.b16 %v3133
    %v3223 = vunpack.c.h.b16 %v3133
    %v3224 = vunpack.c.l.b16 %v3134
    %v3225 = vunpack.c.h.b16 %v3134
    %v3226 = vunpack.c.l.b16 %v3135
    %v3227 = vunpack.c.h.b16 %v3135
    %v3228 = vunpack.c.l.b16 %v3136
    %v3229 = vunpack.c.h.b16 %v3136
    %v3230 = vunpack.c.l.b16 %v3137
    %v3231 = vunpack.c.h.b16 %v3137
    %v3232 = vunpack.c.l.b16 %v3138
    %v3233 = vunpack.c.h.b16 %v3138
    %v3234 = vunpack.c.l.b16 %v3139
    %v3235 = vunpack.c.h.b16 %v3139
    %v3236 = vunpack.c.l.b16 %v3140
    %v3237 = vunpack.c.h.b16 %v3140
    %v3238 = vunpack.c.l.b16 %v3141
    %v3239 = vunpack.c.h.b16 %v3141
    %v3240 = vunpack.c.l.b16 %v3142
    %v3241 = vunpack.c.h.b16 %v3142
    %v3242 = vunpack.c.l.b16 %v3143
    %v3243 = vunpack.c.h.b16 %v3143
    %v3244 = vunpack.c.l.b16 %v3144
    %v3245 = vunpack.c.h.b16 %v3144
    %v3246 = vunpack.c.l.b16 %v3145
    %v3247 = vunpack.c.h.b16 %v3145
    %v3248 = vpack.c.b16 %v3186, %v3184
    %v3249 = vpack.c.b16 %v3187, %v3185
    %v3250 = vpack.c.b16 %v3190, %v3188
    %v3251 = vpack.c.b16 %v3191, %v3189
    %v3252 = vpack.c.b16 %v3194, %v3192
    %v3253 = vpack.c.b16 %v3195, %v3193
    %v3254 = vpack.c.b16 %v3198, %v3196
    %v3255 = vpack.c.b16 %v3199, %v3197
    %v3256 = vpack.c.b16 %v3202, %v3200
    %v3257 = vpack.c.b16 %v3203, %v3201
    %v3258 = vpack.c.b16 %v3206, %v3204
    %v3259 = vpack.c.b16 %v3207, %v3205
    %v3260 = vpack.c.b16 %v3210, %v3208
    %v3261 = vpack.c.b16 %v3211, %v3209
    %v3262 = vpack.c.b16 %v3214, %v3212
    %v3263 = vpack.c.b16 %v3215, %v3213
    %v3264 = vpack.c.b16 %v3218, %v3216
    %v3265 = vpack.c.b16 %v3219, %v3217
    %v3266 = vpack.c.b16 %v3222, %v3220
    %v3267 = vpack.c.b16 %v3223, %v3221
    %v3268 = vpack.c.b16 %v3226, %v3224
    %v3269 = vpack.c.b16 %v3227, %v3225
    %v3270 = vpack.c.b16 %v3230, %v3228
    %v3271 = vpack.c.b16 %v3231, %v3229
    %v3272 = vpack.c.b16 %v3234, %v3232
    %v3273 = vpack.c.b16 %v3235, %v3233
    %v3274 = vpack.c.b16 %v3238, %v3236
    %v3275 = vpack.c.b16 %v3239, %v3237
    %v3276 = vpack.c.b16 %v3242, %v3240
    %v3277 = vpack.c.b16 %v3243, %v3241
    %v3278 = vpack.c.b16 %v3246, %v3244
    %v3279 = vpack.c.b16 %v3247, %v3245
    %3312 = vmatpush.bf16.msra.mxu0 %v3262
    %3313 = vmatpush.bf16.msra.mxu0 %v3260
    %3314 = vmatpush.bf16.msra.mxu0 %v3258
    %3315 = vmatpush.bf16.msra.mxu0 %v3256
    %3316 = vmatpush.bf16.msra.mxu0 %v3254
    %3317 = vmatpush.bf16.msra.mxu0 %v3252
    %3318 = vmatpush.bf16.msra.mxu0 %v3250
    %3319 = vmatpush.bf16.msra.mxu0 %v3248
    %3320 = vmatmul.bf16.gmra.mxu0 %v3112
    %v3321 = vpop.f32.mrf.mxu0
    %v3322 = vadd.f32 %v3148, %v3321
    %v3323 = vpop.f32.mrf.mxu0
    %3324 = vdwg.mxu0
    %3325 = vmatpush.bf16.msra.mxu0 %v3278
    %3326 = vmatpush.bf16.msra.mxu0 %v3276
    %3327 = vmatpush.bf16.msra.mxu0 %v3274
    %3328 = vmatpush.bf16.msra.mxu0 %v3272
    %3329 = vmatpush.bf16.msra.mxu0 %v3270
    %3330 = vmatpush.bf16.msra.mxu0 %v3268
    %3331 = vmatpush.bf16.msra.mxu0 %v3266
    %3332 = vmatpush.bf16.msra.mxu0 %v3264
    %3333 = vmatmul.bf16.gmra.mxu0 %v3113
    %v3334 = vpop.f32.mrf.mxu0
    %v3335 = vadd.f32 %v3322, %v3334
    %v3336 = vpop.f32.mrf.mxu0
    %3337 = vdwg.mxu0
    %3338 = vmatpush.bf16.msra.mxu0 %v3263
    %3339 = vmatpush.bf16.msra.mxu0 %v3261
    %3340 = vmatpush.bf16.msra.mxu0 %v3259
    %3341 = vmatpush.bf16.msra.mxu0 %v3257
    %3342 = vmatpush.bf16.msra.mxu0 %v3255
    %3343 = vmatpush.bf16.msra.mxu0 %v3253
    %3344 = vmatpush.bf16.msra.mxu0 %v3251
    %3345 = vmatpush.bf16.msra.mxu0 %v3249
    %3346 = vmatmul.bf16.gmra.mxu0 %v3112
    %v3347 = vpop.f32.mrf.mxu0
    %v3348 = vadd.f32 %v3149, %v3347
    %v3349 = vpop.f32.mrf.mxu0
    %3350 = vdwg.mxu0
    %3351 = vmatpush.bf16.msra.mxu0 %v3279
    %3352 = vmatpush.bf16.msra.mxu0 %v3277
    %3353 = vmatpush.bf16.msra.mxu0 %v3275
    %3354 = vmatpush.bf16.msra.mxu0 %v3273
    %3355 = vmatpush.bf16.msra.mxu0 %v3271
    %3356 = vmatpush.bf16.msra.mxu0 %v3269
    %3357 = vmatpush.bf16.msra.mxu0 %v3267
    %3358 = vmatpush.bf16.msra.mxu0 %v3265
    %3359 = vmatmul.bf16.gmra.mxu0 %v3113
    %v3360 = vpop.f32.mrf.mxu0
    %v3361 = vadd.f32 %v3348, %v3360
    %v3362 = vpop.f32.mrf.mxu0
    %3363 = vdwg.mxu0
    %v3364 = vmax.f32 %v3335, 0.0
    %v3365 = vmax.f32 %v3361, 0.0
    %v3366 = vpack.c.bf16 %v3364, %v3364
    %v3367 = vpack.c.bf16 %v3365, %v3365
    %v3368 = vld [vmem:[#allocation11] sm:$0xf]
    %v3369 = vld [vmem:[#allocation11 + $0x4] sm:$0xf]
    %v3370 = vld [vmem:[#allocation11 + $0x8] sm:$0xf]
    %v3371 = vld [vmem:[#allocation11 + $0xc] sm:$0xf]
    %v3372 = vld [vmem:[#allocation11 + $0x10] sm:$0xf]
    %v3373 = vld [vmem:[#allocation11 + $0x14] sm:$0xf]
    %v3374 = vld [vmem:[#allocation11 + $0x18] sm:$0xf]
    %v3375 = vld [vmem:[#allocation11 + $0x1c] sm:$0xf]
    %v3376 = vld [vmem:[#allocation11 + $0x20] sm:$0xf]
    %v3377 = vld [vmem:[#allocation11 + $0x24] sm:$0xf]
    %v3378 = vld [vmem:[#allocation11 + $0x28] sm:$0xf]
    %v3379 = vld [vmem:[#allocation11 + $0x2c] sm:$0xf]
    %v3380 = vld [vmem:[#allocation11 + $0x30] sm:$0xf]
    %v3381 = vld [vmem:[#allocation11 + $0x34] sm:$0xf]
    %v3382 = vld [vmem:[#allocation11 + $0x38] sm:$0xf]
    %v3383 = vld [vmem:[#allocation11 + $0x3c] sm:$0xf]
    %v3384 = vld [vmem:[#allocation11 + $0x40] sm:$0xf]
    %v3385 = vld [vmem:[#allocation11 + $0x44] sm:$0xf]
    %v3386 = vld [vmem:[#allocation11 + $0x48] sm:$0xf]
    %v3387 = vld [vmem:[#allocation11 + $0x4c] sm:$0xf]
    %v3388 = vld [vmem:[#allocation11 + $0x50] sm:$0xf]
    %v3389 = vld [vmem:[#allocation11 + $0x54] sm:$0xf]
    %v3390 = vld [vmem:[#allocation11 + $0x58] sm:$0xf]
    %v3391 = vld [vmem:[#allocation11 + $0x5c] sm:$0xf]
    %v3392 = vld [vmem:[#allocation11 + $0x60] sm:$0xf]
    %v3393 = vld [vmem:[#allocation11 + $0x64] sm:$0xf]
    %v3394 = vld [vmem:[#allocation11 + $0x68] sm:$0xf]
    %v3395 = vld [vmem:[#allocation11 + $0x6c] sm:$0xf]
    %v3396 = vld [vmem:[#allocation11 + $0x70] sm:$0xf]
    %v3397 = vld [vmem:[#allocation11 + $0x74] sm:$0xf]
    %v3398 = vld [vmem:[#allocation11 + $0x78] sm:$0xf]
    %v3399 = vld [vmem:[#allocation11 + $0x7c] sm:$0xf]
    %v3400 = vld [vmem:[#allocation13] sm:$0x1]
    %v3402 = vperm.slane %v3400, 0
    %v3436 = vunpack.c.l.b16 %v3368
    %v3437 = vunpack.c.l.b16 %v3369
    %v3438 = vunpack.c.l.b16 %v3370
    %v3439 = vunpack.c.l.b16 %v3371
    %v3440 = vunpack.c.l.b16 %v3372
    %v3441 = vunpack.c.l.b16 %v3373
    %v3442 = vunpack.c.l.b16 %v3374
    %v3443 = vunpack.c.l.b16 %v3375
    %v3444 = vunpack.c.l.b16 %v3376
    %v3445 = vunpack.c.l.b16 %v3377
    %v3446 = vunpack.c.l.b16 %v3378
    %v3447 = vunpack.c.l.b16 %v3379
    %v3448 = vunpack.c.l.b16 %v3380
    %v3449 = vunpack.c.l.b16 %v3381
    %v3450 = vunpack.c.l.b16 %v3382
    %v3451 = vunpack.c.l.b16 %v3383
    %v3452 = vunpack.c.l.b16 %v3384
    %v3453 = vunpack.c.l.b16 %v3385
    %v3454 = vunpack.c.l.b16 %v3386
    %v3455 = vunpack.c.l.b16 %v3387
    %v3456 = vunpack.c.l.b16 %v3388
    %v3457 = vunpack.c.l.b16 %v3389
    %v3458 = vunpack.c.l.b16 %v3390
    %v3459 = vunpack.c.l.b16 %v3391
    %v3460 = vunpack.c.l.b16 %v3392
    %v3461 = vunpack.c.l.b16 %v3393
    %v3462 = vunpack.c.l.b16 %v3394
    %v3463 = vunpack.c.l.b16 %v3395
    %v3464 = vunpack.c.l.b16 %v3396
    %v3465 = vunpack.c.l.b16 %v3397
    %v3466 = vunpack.c.l.b16 %v3398
    %v3467 = vunpack.c.l.b16 %v3399
    %v3468 = vpack.c.b16 %v3437, %v3436
    %v3469 = vpack.c.b16 %v3439, %v3438
    %v3470 = vpack.c.b16 %v3441, %v3440
    %v3471 = vpack.c.b16 %v3443, %v3442
    %v3472 = vpack.c.b16 %v3445, %v3444
    %v3473 = vpack.c.b16 %v3447, %v3446
    %v3474 = vpack.c.b16 %v3449, %v3448
    %v3475 = vpack.c.b16 %v3451, %v3450
    %v3476 = vpack.c.b16 %v3453, %v3452
    %v3477 = vpack.c.b16 %v3455, %v3454
    %v3478 = vpack.c.b16 %v3457, %v3456
    %v3479 = vpack.c.b16 %v3459, %v3458
    %v3480 = vpack.c.b16 %v3461, %v3460
    %v3481 = vpack.c.b16 %v3463, %v3462
    %v3482 = vpack.c.b16 %v3465, %v3464
    %v3483 = vpack.c.b16 %v3467, %v3466
    %3500 = vmatpush.bf16.msra.mxu0 %v3475
    %3501 = vmatpush.bf16.msra.mxu0 %v3474
    %3502 = vmatpush.bf16.msra.mxu0 %v3473
    %3503 = vmatpush.bf16.msra.mxu0 %v3472
    %3504 = vmatpush.bf16.msra.mxu0 %v3471
    %3505 = vmatpush.bf16.msra.mxu0 %v3470
    %3506 = vmatpush.bf16.msra.mxu0 %v3469
    %3507 = vmatpush.bf16.msra.mxu0 %v3468
    %3508 = vmatmul.bf16.gmra.mxu0 %v3366
    %v3509 = vpop.f32.mrf.mxu0
    %v3510 = vadd.f32 %v3402, %v3509
    %v3511 = vpop.f32.mrf.mxu0
    %3512 = vdwg.mxu0
    %3513 = vmatpush.bf16.msra.mxu0 %v3483
    %3514 = vmatpush.bf16.msra.mxu0 %v3482
    %3515 = vmatpush.bf16.msra.mxu0 %v3481
    %3516 = vmatpush.bf16.msra.mxu0 %v3480
    %3517 = vmatpush.bf16.msra.mxu0 %v3479
    %3518 = vmatpush.bf16.msra.mxu0 %v3478
    %3519 = vmatpush.bf16.msra.mxu0 %v3477
    %3520 = vmatpush.bf16.msra.mxu0 %v3476
    %3521 = vmatmul.bf16.gmra.mxu0 %v3367
    %v3522 = vpop.f32.mrf.mxu0
    %v3523 = vadd.f32 %v3510, %v3522
    %v3524 = vpop.f32.mrf.mxu0
    %3525 = vdwg.mxu0
    %3526 = vmax.xlane.f32.xlu0 %v3523
    %v3527 = vpop.xlane.xlu0 %3526
    %v3528 = vsub.f32 %v3523, %v3527
    %v3529 = vmul.f32 %v3528, 1.442695
    %v3530 = vpow.pop %v3529
    %3531 = vadd.xlane.f32.xlu0 %v3530
    %v3532 = vpop.xlane.xlu0 %3531
    %v3533 = vlog2.pop %v3532
    %v3534 = vmul.f32 %v3533, 0.6931472
    %v3535 = vsub.f32 %v3528, %v3534
    %3536 = vst [vmem:[#allocation14] sm:$0xff] %v3535
    // Predicated region
    $region58: #{tpu_custom_call.1} parent=1 // pred_check
      _
    $region59: #{tpu_custom_call.1} parent=1 // pred_check_branch
      %3538 = sbr.rel (0) target = $region61
    $region60: #{tpu_custom_call.1} parent=1 // pred_region
      %3540 = vsyncadd [#allocation4], 0
      %s3542 = sshll.u32 [#allocation14], 4
      %s3543 = int_to_ptr.vmem [resolvable:$true] %s3542
      %s3544 = sshll.u32 %s7, 4
      %s3545 = int_to_ptr.hbm [resolvable:$true] %s3544
      %3547 = dma.vmem_to_hbm [thread:$0]  %s3543, 128, %s3545, [#allocation4]
    $region61: #{tpu_custom_call.1} parent=1 // pred_fallthru
      _
    // Predicated region
    $region62: #{tpu_custom_call.1} parent=1 // pred_check
      _
    $region63: #{tpu_custom_call.1} parent=1 // pred_check_branch
      %3549 = sbr.rel (0) target = $region65
    $region64: #{tpu_custom_call.1} parent=1 // pred_region
      %3551 = dma.done [#allocation4], 128
    $region65: #{tpu_custom_call.1} parent=1 // pred_fallthru
      _
    %3552 = vsyncpa [#allocation3], 1
    %3553 = vsyncpa [#allocation6], 1
    %3554 = vsyncpa [#allocation9], 1
    %3555 = vsyncpa [#allocation12], 1
    %3556 = vsyncpa [#allocation4], 1

</llo_original>
